<compile_context>
chip_gen: v5e
topology: v5e:2x2
jax: 0.10.0
libtpu: 0.0.40
codegen_flags: <defaults>
</compile_context>

<pallas_src>
import functools

import jax
import jax.numpy as jnp
from jax.experimental import pallas as pl
from jax.experimental.pallas import tpu as pltpu

RES = 10
OUT_DIM = RES * RES * RES          # 1000
OUT_PAD = 1024                     # lane-dense padded output (multiple of 128)
IN_DIM = 7
K1 = 8                             # 7 inputs + folded-bias ones-column
H1 = 128
H2 = 512


def _round_up(x, m):
    return (x + m - 1) // m * m


# ---------------------------------------------------------------------------
# Shared MLP body: bf16 LHS/RHS, f32 accumulation, lane-dense (tb, 1024) result
# ---------------------------------------------------------------------------
def _mlp(x_ref, w1_ref, w2_ref, b2_ref, w3_ref, b3_ref):
    # Layer 1: bias folded into w1 via the ones-column of x (K = 8).
    h1 = jnp.dot(x_ref[...].astype(jnp.bfloat16), w1_ref[...],
                 preferred_element_type=jnp.float32)
    h1 = jnp.maximum(h1, 0.0)
    # Layer 2.
    h2 = jnp.dot(h1.astype(jnp.bfloat16), w2_ref[...],
                 preferred_element_type=jnp.float32) + b2_ref[...]
    h2 = jnp.maximum(h2, 0.0)
    # Layer 3: dominant matmul; N = 1024 is lane-dense on the MXU.
    r = jnp.dot(h2.astype(jnp.bfloat16), w3_ref[...],
                preferred_element_type=jnp.float32) + b3_ref[...]
    return r                                           # (tb, OUT_PAD) f32


# ---------------------------------------------------------------------------
# Pass 1: per-tile min/max partials (r stays in VMEM, never written to HBM).
# ---------------------------------------------------------------------------
def _minmax_kernel(x_ref, w1_ref, w2_ref, b2_ref, w3_ref, b3_ref,
                   pmin_ref, pmax_ref):
    r = _mlp(x_ref, w1_ref, w2_ref, b2_ref, w3_ref, b3_ref)
    # Exclude the 24 zero-padded output lanes from the global min/max.
    col = jax.lax.broadcasted_iota(jnp.int32, r.shape, 1)
    valid = col < OUT_DIM
    tile_min = jnp.min(jnp.where(valid, r, jnp.inf))
    tile_max = jnp.max(jnp.where(valid, r, -jnp.inf))
    pmin_ref[...] = jnp.full(pmin_ref.shape, tile_min, jnp.float32)
    pmax_ref[...] = jnp.full(pmax_ref.shape, tile_max, jnp.float32)


# ---------------------------------------------------------------------------
# Pass 2: recompute the MLP for the tile and normalize with the global scalars
# held in SMEM.  One VPU subtract + multiply per element (reciprocal done once
# in the wrapper), output stored at its exact (B, 1000) shape.
# ---------------------------------------------------------------------------
def _norm_kernel(scale_ref, x_ref, w1_ref, w2_ref, b2_ref, w3_ref, b3_ref,
                 o_ref):
    r = _mlp(x_ref, w1_ref, w2_ref, b2_ref, w3_ref, b3_ref)
    mn = scale_ref[0]
    inv = scale_ref[1]
    o_ref[...] = ((r - mn) * inv)[:, :OUT_DIM]


@functools.partial(jax.jit, static_argnames=("batch_tile",))
def ftws_forward(x, kparams, *, batch_tile=512):
    """x: (B, 7) float32.  kparams: output of prepare_params()."""
    w1, w2, b2, w3, b3 = kparams
    B = x.shape[0]

    # Fold b1: append a ones-column so layer 1 is x_aug @ w1_aug.
    x_aug = jnp.concatenate(
        [x.astype(jnp.float32), jnp.ones((B, 1), jnp.float32)], axis=1)

    # Batch tiling.  Pad x (tiny: B x 8 f32) by REPLICATING row 0 so padded
    # rows are exact duplicates: they can never perturb the global min/max,
    # and their pass-2 stores fall outside the (B, 1000) output and are
    # dropped by Pallas boundary handling.
    tb = min(batch_tile, _round_up(B, 8))
    num_tiles = pl.cdiv(B, tb)
    b_pad = num_tiles * tb
    if b_pad != B:
        x_aug = jnp.concatenate(
            [x_aug, jnp.broadcast_to(x_aug[:1], (b_pad - B, K1))], axis=0)

    const = lambda i: (0, 0)   # weights: same block every step -> VMEM-resident
    x_spec = pl.BlockSpec((tb, K1), lambda i: (i, 0))
    weight_specs = [
        pl.BlockSpec((K1, H1), const),              # w1 (+ folded b1), bf16
        pl.BlockSpec((H1, H2), const),              # w2, bf16
        pl.BlockSpec((1, H2), const),               # b2, f32
        pl.BlockSpec((H2, OUT_PAD), const),         # w3 padded, bf16
        pl.BlockSpec((1, OUT_PAD), const),          # b3 padded, f32
    ]

    # -------- Pass 1: per-tile min / max partials (tiny outputs) ----------
    pmin, pmax = pl.pallas_call(
        _minmax_kernel,
        grid=(num_tiles,),
        in_specs=[x_spec] + weight_specs,
        out_specs=(
            pl.BlockSpec((1, 8, 128), lambda i: (i, 0, 0)),
            pl.BlockSpec((1, 8, 128), lambda i: (i, 0, 0)),
        ),
        out_shape=(
            jax.ShapeDtypeStruct((num_tiles, 8, 128), jnp.float32),
            jax.ShapeDtypeStruct((num_tiles, 8, 128), jnp.float32),
        ),
        compiler_params=pltpu.CompilerParams(
            dimension_semantics=("parallel",)),
    )(x_aug, w1, w2, b2, w3, b3)

    # Combine the tiny per-tile partials; one exact scalar reciprocal.
    mn = jnp.min(pmin)
    mx = jnp.max(pmax)
    denom = mx - mn
    safe = jnp.where(denom > 0, denom, jnp.float32(1.0))    # guard max == min
    scale = jnp.stack([mn, 1.0 / safe]).astype(jnp.float32)  # (2,) -> SMEM

    # -------- Pass 2: recompute + normalize, exact-shape output -----------
    out = pl.pallas_call(
        _norm_kernel,
        grid=(num_tiles,),
        in_specs=[pl.BlockSpec(memory_space=pltpu.MemorySpace.SMEM),  # [mn,inv]
                  x_spec] + weight_specs,
        out_specs=pl.BlockSpec((tb, OUT_DIM), lambda i: (i, 0)),
        out_shape=jax.ShapeDtypeStruct((B, OUT_DIM), jnp.float32),
        compiler_params=pltpu.CompilerParams(
            dimension_semantics=("parallel",)),
    )(scale, x_aug, w1, w2, b2, w3, b3)

    return out


# ---------------------------------------------------------------------------
# Parameters
# ---------------------------------------------------------------------------
def init_params(key):
    """f32 parameters matching the PyTorch nn.Linear layers.

    Weights are stored (in_features, out_features); PyTorch keeps the
    transpose and computes x @ W.T -- mathematically identical.
    """
    ks = jax.random.split(key, 6)

    def lin(kw, kb, fan_in, fan_out):
        bound = 1.0 / jnp.sqrt(jnp.float32(fan_in))
        w = jax.random.uniform(kw, (fan_in, fan_out), jnp.float32, -bound, bound)
        b = jax.random.uniform(kb, (fan_out,), jnp.float32, -bound, bound)
        return w, b

    w1, b1 = lin(ks[0], ks[1], IN_DIM, H1)
    w2, b2 = lin(ks[2], ks[3], H1, H2)
    w3, b3 = lin(ks[4], ks[5], H2, OUT_DIM)
    return (w1, b1, w2, b2, w3, b3)


def prepare_params(params):
    """Pack f32 params into the kernel layout:
       * b1 folded into w1 as an extra input row (K: 7 -> 8)
       * weights cast to bf16 (halves the dominant w3 DMA), biases stay f32
       * layer 3 zero-padded from 1000 to 1024 lane-dense output columns
    """
    w1, b1, w2, b2, w3, b3 = params
    w1_aug = jnp.concatenate([w1, b1.reshape(1, H1)], axis=0)        # (8, 128)
    w3_pad = jnp.pad(w3, ((0, 0), (0, OUT_PAD - OUT_DIM)))
    b3_pad = jnp.pad(b3.reshape(1, OUT_DIM), ((0, 0), (0, OUT_PAD - OUT_DIM)))
    return (w1_aug.astype(jnp.bfloat16),
            w2.astype(jnp.bfloat16),
            b2.reshape(1, H2).astype(jnp.float32),
            w3_pad.astype(jnp.bfloat16),
            b3_pad.astype(jnp.float32))


def reference_forward(x, kparams):
    """Pure-JAX reference with the same (bf16-weight) numerics as the kernel."""
    w1, w2, b2, w3, b3 = kparams
    xa = jnp.concatenate(
        [x.astype(jnp.float32), jnp.ones((x.shape[0], 1), jnp.float32)], axis=1)
    h1 = jnp.maximum(jnp.dot(xa.astype(jnp.bfloat16), w1,
                             preferred_element_type=jnp.float32), 0.0)
    h2 = jnp.maximum(jnp.dot(h1.astype(jnp.bfloat16), w2,
                             preferred_element_type=jnp.float32) + b2, 0.0)
    r = jnp.dot(h2.astype(jnp.bfloat16), w3,
                preferred_element_type=jnp.float32) + b3
    r = r[:, :OUT_DIM]
    return (r - r.min()) / (r.max() - r.min())


if __name__ == "__main__":
    key = jax.random.PRNGKey(0)
    kx, kp = jax.random.split(key)

    params = init_params(kp)
    kparams = prepare_params(params)

    # Toy batch (single grid step; batch padded 4 -> 8 by row replication,
    # output written at its exact (4, 1000) shape).
    x_small = jax.random.normal(kx, (4, IN_DIM), dtype=jnp.float32)
    out_small = ftws_forward(x_small, kparams, batch_tile=128)
    jax.block_until_ready(out_small)
    ref_small = reference_forward(x_small, kparams)
    assert out_small.shape == (4, OUT_DIM)
    assert jnp.allclose(out_small, ref_small, atol=1e-4, rtol=1e-3), \
        "small-batch mismatch vs reference"

    # Larger, non-multiple-of-tile batch: exercises the batch grid, resident
    # weights, row-replication padding, the two-phase global min/max and the
    # partial-final-tile output store.
    x_big = jax.random.normal(jax.random.PRNGKey(1), (300, IN_DIM),
                              dtype=jnp.float32)
    out_big = ftws_forward(x_big, kparams, batch_tile=128)
    jax.block_until_ready(out_big)
    ref_big = reference_forward(x_big, kparams)
    assert out_big.shape == (300, OUT_DIM)
    assert jnp.allclose(out_big, ref_big, atol=1e-4, rtol=1e-3), \
        "large-batch mismatch vs reference"

    print("KERNEL_OK")
</pallas_src>

<mosaic_0001>
module attributes {stable_mosaic.version = 11 : i64} {
  func.func @_minmax_kernel(%arg0: i32, %arg1: memref<8x8xf32, #tpu.memory_space<vmem>>, %arg2: memref<8x128xbf16, #tpu.memory_space<vmem>>, %arg3: memref<128x512xbf16, #tpu.memory_space<vmem>>, %arg4: memref<1x512xf32, #tpu.memory_space<vmem>>, %arg5: memref<512x1024xbf16, #tpu.memory_space<vmem>>, %arg6: memref<1x1024xf32, #tpu.memory_space<vmem>>, %arg7: memref<1x8x128xf32, #tpu.memory_space<vmem>>, %arg8: memref<1x8x128xf32, #tpu.memory_space<vmem>>) attributes {dimension_semantics = [#tpu.dimension_semantics<parallel>], iteration_bounds = array<i64: 1>, scalar_prefetch = 0 : i64, scratch_operands = 0 : i64, tpu.core_type = #tpu.core_type<tc>, window_params = [{transform_indices = @transform_0, window_bounds = array<i64: 8, 8>}, {pipeline_mode = #tpu.pipeline_mode<synchronous>, transform_indices = @transform_1, window_bounds = array<i64: 8, 128>}, {pipeline_mode = #tpu.pipeline_mode<synchronous>, transform_indices = @transform_2, window_bounds = array<i64: 128, 512>}, {pipeline_mode = #tpu.pipeline_mode<synchronous>, transform_indices = @transform_3, window_bounds = array<i64: 1, 512>}, {pipeline_mode = #tpu.pipeline_mode<synchronous>, transform_indices = @transform_4, window_bounds = array<i64: 512, 1024>}, {pipeline_mode = #tpu.pipeline_mode<synchronous>, transform_indices = @transform_5, window_bounds = array<i64: 1, 1024>}, {transform_indices = @transform_6, window_bounds = array<i64: 1, 8, 128>}, {transform_indices = @transform_7, window_bounds = array<i64: 1, 8, 128>}]} {
    %c0 = arith.constant 0 : index
    %c0_0 = arith.constant 0 : index
    %0 = vector.load %arg1[%c0, %c0_0] : memref<8x8xf32, #tpu.memory_space<vmem>>, vector<8x8xf32>
    %1 = arith.truncf %0 : vector<8x8xf32> to vector<8x8xbf16>
    %c0_1 = arith.constant 0 : index
    %c0_2 = arith.constant 0 : index
    %2 = vector.load %arg2[%c0_1, %c0_2] : memref<8x128xbf16, #tpu.memory_space<vmem>>, vector<8x128xbf16>
    %cst = arith.constant dense<0.000000e+00> : vector<8x128xf32>
    %3 = tpu.matmul %1, %2, %cst {dimension_numbers = #tpu.dot_dimension_numbers<[1], [0], [0], [1], [0, 0, 1, 1], [], []>} : vector<8x8xbf16>, vector<8x128xbf16>, vector<8x128xf32> -> vector<8x128xf32>
    %cst_3 = arith.constant 0.000000e+00 : f32
    %4 = vector.broadcast %cst_3 : f32 to vector<8x128xf32>
    %5 = arith.maximumf %3, %4 : vector<8x128xf32>
    %6 = arith.truncf %5 : vector<8x128xf32> to vector<8x128xbf16>
    %c0_4 = arith.constant 0 : index
    %c0_5 = arith.constant 0 : index
    %7 = vector.load %arg3[%c0_4, %c0_5] : memref<128x512xbf16, #tpu.memory_space<vmem>>, vector<128x512xbf16>
    %cst_6 = arith.constant dense<0.000000e+00> : vector<8x512xf32>
    %8 = tpu.matmul %6, %7, %cst_6 {dimension_numbers = #tpu.dot_dimension_numbers<[1], [0], [0], [1], [0, 0, 1, 1], [], []>} : vector<8x128xbf16>, vector<128x512xbf16>, vector<8x512xf32> -> vector<8x512xf32>
    %c0_7 = arith.constant 0 : index
    %c0_8 = arith.constant 0 : index
    %9 = vector.load %arg4[%c0_7, %c0_8] : memref<1x512xf32, #tpu.memory_space<vmem>>, vector<1x512xf32>
    %10 = vector.broadcast %9 : vector<1x512xf32> to vector<8x512xf32>
    %11 = arith.addf %8, %10 : vector<8x512xf32>
    %cst_9 = arith.constant 0.000000e+00 : f32
    %12 = vector.broadcast %cst_9 : f32 to vector<8x512xf32>
    %13 = arith.maximumf %11, %12 : vector<8x512xf32>
    %14 = arith.truncf %13 : vector<8x512xf32> to vector<8x512xbf16>
    %c0_10 = arith.constant 0 : index
    %c0_11 = arith.constant 0 : index
    %15 = vector.load %arg5[%c0_10, %c0_11] : memref<512x1024xbf16, #tpu.memory_space<vmem>>, vector<512x1024xbf16>
    %cst_12 = arith.constant dense<0.000000e+00> : vector<8x1024xf32>
    %16 = tpu.matmul %14, %15, %cst_12 {dimension_numbers = #tpu.dot_dimension_numbers<[1], [0], [0], [1], [0, 0, 1, 1], [], []>} : vector<8x512xbf16>, vector<512x1024xbf16>, vector<8x1024xf32> -> vector<8x1024xf32>
    %c0_13 = arith.constant 0 : index
    %c0_14 = arith.constant 0 : index
    %17 = vector.load %arg6[%c0_13, %c0_14] : memref<1x1024xf32, #tpu.memory_space<vmem>>, vector<1x1024xf32>
    %18 = vector.broadcast %17 : vector<1x1024xf32> to vector<8x1024xf32>
    %19 = arith.addf %16, %18 : vector<8x1024xf32>
    %20 = tpu.iota {dimensions = array<i32: 1>} : vector<8x1024xi32>
    %c1000_i32 = arith.constant 1000 : i32
    %21 = vector.broadcast %c1000_i32 : i32 to vector<8x1024xi32>
    %22 = arith.cmpi slt, %20, %21 : vector<8x1024xi32>
    %cst_15 = arith.constant 0x7F800000 : f32
    %23 = vector.broadcast %cst_15 : f32 to vector<8x1024xf32>
    %24 = arith.select %22, %19, %23 : vector<8x1024xi1>, vector<8x1024xf32>
    %25 = vector.shape_cast %24 : vector<8x1024xf32> to vector<1x8x1024xf32>
    %cst_16 = arith.constant dense<0x7F800000> : vector<1xf32>
    %26 = vector.multi_reduction <minimumf>, %25, %cst_16 [1, 2] : vector<1x8x1024xf32> to vector<1xf32>
    %27 = vector.shape_cast %26 : vector<1xf32> to vector<1x1x1xf32>
    %28 = vector.extract %27[0, 0, 0] : f32 from vector<1x1x1xf32>
    %cst_17 = arith.constant 0xFF800000 : f32
    %29 = vector.broadcast %cst_17 : f32 to vector<8x1024xf32>
    %30 = arith.select %22, %19, %29 : vector<8x1024xi1>, vector<8x1024xf32>
    %31 = vector.shape_cast %30 : vector<8x1024xf32> to vector<1x8x1024xf32>
    %cst_18 = arith.constant dense<0xFF800000> : vector<1xf32>
    %32 = vector.multi_reduction <maximumf>, %31, %cst_18 [1, 2] : vector<1x8x1024xf32> to vector<1xf32>
    %33 = vector.shape_cast %32 : vector<1xf32> to vector<1x1x1xf32>
    %34 = vector.extract %33[0, 0, 0] : f32 from vector<1x1x1xf32>
    %35 = vector.broadcast %28 : f32 to vector<1x8x128xf32>
    %c0_19 = arith.constant 0 : index
    %c0_20 = arith.constant 0 : index
    %c0_21 = arith.constant 0 : index
    %36 = vector.load %arg7[%c0_19, %c0_20, %c0_21] : memref<1x8x128xf32, #tpu.memory_space<vmem>>, vector<1x8x128xf32>
    tpu.vector_store %arg7[%c0_19, %c0_20, %c0_21], %35 {strides = array<i32>} : memref<1x8x128xf32, #tpu.memory_space<vmem>>, vector<1x8x128xf32>,
    %37 = vector.broadcast %34 : f32 to vector<1x8x128xf32>
    %c0_22 = arith.constant 0 : index
    %c0_23 = arith.constant 0 : index
    %c0_24 = arith.constant 0 : index
    %38 = vector.load %arg8[%c0_22, %c0_23, %c0_24] : memref<1x8x128xf32, #tpu.memory_space<vmem>>, vector<1x8x128xf32>
    tpu.vector_store %arg8[%c0_22, %c0_23, %c0_24], %37 {strides = array<i32>} : memref<1x8x128xf32, #tpu.memory_space<vmem>>, vector<1x8x128xf32>,
    return
  }
  func.func @transform_0(%arg0: i32) -> (i32, i32) {
    %c0_i32 = arith.constant 0 : i32
    %c0_i32_0 = arith.constant 0 : i32
    return %arg0, %c0_i32 : i32, i32
  }
  func.func @transform_1(%arg0: i32) -> (i32, i32) {
    %c0_i32 = arith.constant 0 : i32
    %c0_i32_0 = arith.constant 0 : i32
    %c0_i32_1 = arith.constant 0 : i32
    return %c0_i32, %c0_i32_0 : i32, i32
  }
  func.func @transform_2(%arg0: i32) -> (i32, i32) {
    %c0_i32 = arith.constant 0 : i32
    %c0_i32_0 = arith.constant 0 : i32
    %c0_i32_1 = arith.constant 0 : i32
    return %c0_i32, %c0_i32_0 : i32, i32
  }
  func.func @transform_3(%arg0: i32) -> (i32, i32) {
    %c0_i32 = arith.constant 0 : i32
    %c0_i32_0 = arith.constant 0 : i32
    %c0_i32_1 = arith.constant 0 : i32
    return %c0_i32, %c0_i32_0 : i32, i32
  }
  func.func @transform_4(%arg0: i32) -> (i32, i32) {
    %c0_i32 = arith.constant 0 : i32
    %c0_i32_0 = arith.constant 0 : i32
    %c0_i32_1 = arith.constant 0 : i32
    return %c0_i32, %c0_i32_0 : i32, i32
  }
  func.func @transform_5(%arg0: i32) -> (i32, i32) {
    %c0_i32 = arith.constant 0 : i32
    %c0_i32_0 = arith.constant 0 : i32
    %c0_i32_1 = arith.constant 0 : i32
    return %c0_i32, %c0_i32_0 : i32, i32
  }
  func.func @transform_6(%arg0: i32) -> (i32, i32, i32) {
    %c0_i32 = arith.constant 0 : i32
    %c0_i32_0 = arith.constant 0 : i32
    %c0_i32_1 = arith.constant 0 : i32
    return %arg0, %c0_i32, %c0_i32_0 : i32, i32, i32
  }
  func.func @transform_7(%arg0: i32) -> (i32, i32, i32) {
    %c0_i32 = arith.constant 0 : i32
    %c0_i32_0 = arith.constant 0 : i32
    %c0_i32_1 = arith.constant 0 : i32
    return %arg0, %c0_i32, %c0_i32_0 : i32, i32, i32
  }
}

module attributes {stable_mosaic.version = 11 : i64} {
  func.func @_norm_kernel(%arg0: i32, %arg1: memref<2xf32, #tpu.memory_space<smem>>, %arg2: memref<8x8xf32, #tpu.memory_space<vmem>>, %arg3: memref<8x128xbf16, #tpu.memory_space<vmem>>, %arg4: memref<128x512xbf16, #tpu.memory_space<vmem>>, %arg5: memref<1x512xf32, #tpu.memory_space<vmem>>, %arg6: memref<512x1024xbf16, #tpu.memory_space<vmem>>, %arg7: memref<1x1024xf32, #tpu.memory_space<vmem>>, %arg8: memref<8x1000xf32, #tpu.memory_space<vmem>>) attributes {dimension_semantics = [#tpu.dimension_semantics<parallel>], iteration_bounds = array<i64: 1>, scalar_prefetch = 0 : i64, scratch_operands = 0 : i64, tpu.core_type = #tpu.core_type<tc>, window_params = [{transform_indices = @transform_0, window_bounds = array<i64: 2>}, {transform_indices = @transform_1, window_bounds = array<i64: 8, 8>}, {pipeline_mode = #tpu.pipeline_mode<synchronous>, transform_indices = @transform_2, window_bounds = array<i64: 8, 128>}, {pipeline_mode = #tpu.pipeline_mode<synchronous>, transform_indices = @transform_3, window_bounds = array<i64: 128, 512>}, {pipeline_mode = #tpu.pipeline_mode<synchronous>, transform_indices = @transform_4, window_bounds = array<i64: 1, 512>}, {pipeline_mode = #tpu.pipeline_mode<synchronous>, transform_indices = @transform_5, window_bounds = array<i64: 512, 1024>}, {pipeline_mode = #tpu.pipeline_mode<synchronous>, transform_indices = @transform_6, window_bounds = array<i64: 1, 1024>}, {transform_indices = @transform_7, window_bounds = array<i64: 8, 1000>}]} {
    %c0 = arith.constant 0 : index
    %c0_0 = arith.constant 0 : index
    %0 = vector.load %arg2[%c0, %c0_0] : memref<8x8xf32, #tpu.memory_space<vmem>>, vector<8x8xf32>
    %1 = arith.truncf %0 : vector<8x8xf32> to vector<8x8xbf16>
    %c0_1 = arith.constant 0 : index
    %c0_2 = arith.constant 0 : index
    %2 = vector.load %arg3[%c0_1, %c0_2] : memref<8x128xbf16, #tpu.memory_space<vmem>>, vector<8x128xbf16>
    %cst = arith.constant dense<0.000000e+00> : vector<8x128xf32>
    %3 = tpu.matmul %1, %2, %cst {dimension_numbers = #tpu.dot_dimension_numbers<[1], [0], [0], [1], [0, 0, 1, 1], [], []>} : vector<8x8xbf16>, vector<8x128xbf16>, vector<8x128xf32> -> vector<8x128xf32>
    %cst_3 = arith.constant 0.000000e+00 : f32
    %4 = vector.broadcast %cst_3 : f32 to vector<8x128xf32>
    %5 = arith.maximumf %3, %4 : vector<8x128xf32>
    %6 = arith.truncf %5 : vector<8x128xf32> to vector<8x128xbf16>
    %c0_4 = arith.constant 0 : index
    %c0_5 = arith.constant 0 : index
    %7 = vector.load %arg4[%c0_4, %c0_5] : memref<128x512xbf16, #tpu.memory_space<vmem>>, vector<128x512xbf16>
    %cst_6 = arith.constant dense<0.000000e+00> : vector<8x512xf32>
    %8 = tpu.matmul %6, %7, %cst_6 {dimension_numbers = #tpu.dot_dimension_numbers<[1], [0], [0], [1], [0, 0, 1, 1], [], []>} : vector<8x128xbf16>, vector<128x512xbf16>, vector<8x512xf32> -> vector<8x512xf32>
    %c0_7 = arith.constant 0 : index
    %c0_8 = arith.constant 0 : index
    %9 = vector.load %arg5[%c0_7, %c0_8] : memref<1x512xf32, #tpu.memory_space<vmem>>, vector<1x512xf32>
    %10 = vector.broadcast %9 : vector<1x512xf32> to vector<8x512xf32>
    %11 = arith.addf %8, %10 : vector<8x512xf32>
    %cst_9 = arith.constant 0.000000e+00 : f32
    %12 = vector.broadcast %cst_9 : f32 to vector<8x512xf32>
    %13 = arith.maximumf %11, %12 : vector<8x512xf32>
    %14 = arith.truncf %13 : vector<8x512xf32> to vector<8x512xbf16>
    %c0_10 = arith.constant 0 : index
    %c0_11 = arith.constant 0 : index
    %15 = vector.load %arg6[%c0_10, %c0_11] : memref<512x1024xbf16, #tpu.memory_space<vmem>>, vector<512x1024xbf16>
    %cst_12 = arith.constant dense<0.000000e+00> : vector<8x1024xf32>
    %16 = tpu.matmul %14, %15, %cst_12 {dimension_numbers = #tpu.dot_dimension_numbers<[1], [0], [0], [1], [0, 0, 1, 1], [], []>} : vector<8x512xbf16>, vector<512x1024xbf16>, vector<8x1024xf32> -> vector<8x1024xf32>
    %c0_13 = arith.constant 0 : index
    %c0_14 = arith.constant 0 : index
    %17 = vector.load %arg7[%c0_13, %c0_14] : memref<1x1024xf32, #tpu.memory_space<vmem>>, vector<1x1024xf32>
    %18 = vector.broadcast %17 : vector<1x1024xf32> to vector<8x1024xf32>
    %19 = arith.addf %16, %18 : vector<8x1024xf32>
    %c0_15 = arith.constant 0 : index
    %20 = memref.load %arg1[%c0_15] : memref<2xf32, #tpu.memory_space<smem>>
    %c1 = arith.constant 1 : index
    %21 = memref.load %arg1[%c1] : memref<2xf32, #tpu.memory_space<smem>>
    %22 = vector.broadcast %20 : f32 to vector<8x1024xf32>
    %23 = arith.subf %19, %22 : vector<8x1024xf32>
    %24 = vector.broadcast %21 : f32 to vector<8x1024xf32>
    %25 = arith.mulf %23, %24 : vector<8x1024xf32>
    %26 = vector.extract_strided_slice %25 {offsets = [0, 0], sizes = [8, 1000], strides = [1, 1]} : vector<8x1024xf32> to vector<8x1000xf32>
    %c0_16 = arith.constant 0 : index
    %c0_17 = arith.constant 0 : index
    %27 = vector.load %arg8[%c0_16, %c0_17] : memref<8x1000xf32, #tpu.memory_space<vmem>>, vector<8x1000xf32>
    tpu.vector_store %arg8[%c0_16, %c0_17], %26 {strides = array<i32>} : memref<8x1000xf32, #tpu.memory_space<vmem>>, vector<8x1000xf32>,
    return
  }
  func.func @transform_0(%arg0: i32) -> i32 {
    %c0_i32 = arith.constant 0 : i32
    %c0_i32_0 = arith.constant 0 : i32
    return %c0_i32 : i32
  }
  func.func @transform_1(%arg0: i32) -> (i32, i32) {
    %c0_i32 = arith.constant 0 : i32
    %c0_i32_0 = arith.constant 0 : i32
    return %arg0, %c0_i32 : i32, i32
  }
  func.func @transform_2(%arg0: i32) -> (i32, i32) {
    %c0_i32 = arith.constant 0 : i32
    %c0_i32_0 = arith.constant 0 : i32
    %c0_i32_1 = arith.constant 0 : i32
    return %c0_i32, %c0_i32_0 : i32, i32
  }
  func.func @transform_3(%arg0: i32) -> (i32, i32) {
    %c0_i32 = arith.constant 0 : i32
    %c0_i32_0 = arith.constant 0 : i32
    %c0_i32_1 = arith.constant 0 : i32
    return %c0_i32, %c0_i32_0 : i32, i32
  }
  func.func @transform_4(%arg0: i32) -> (i32, i32) {
    %c0_i32 = arith.constant 0 : i32
    %c0_i32_0 = arith.constant 0 : i32
    %c0_i32_1 = arith.constant 0 : i32
    return %c0_i32, %c0_i32_0 : i32, i32
  }
  func.func @transform_5(%arg0: i32) -> (i32, i32) {
    %c0_i32 = arith.constant 0 : i32
    %c0_i32_0 = arith.constant 0 : i32
    %c0_i32_1 = arith.constant 0 : i32
    return %c0_i32, %c0_i32_0 : i32, i32
  }
  func.func @transform_6(%arg0: i32) -> (i32, i32) {
    %c0_i32 = arith.constant 0 : i32
    %c0_i32_0 = arith.constant 0 : i32
    %c0_i32_1 = arith.constant 0 : i32
    return %c0_i32, %c0_i32_0 : i32, i32
  }
  func.func @transform_7(%arg0: i32) -> (i32, i32) {
    %c0_i32 = arith.constant 0 : i32
    %c0_i32_0 = arith.constant 0 : i32
    return %arg0, %c0_i32 : i32, i32
  }
}

</mosaic_0001>

<llo_original>
// kernel: ftws_forward.2
$region0: #{ftws_forward.2}
  #allocation0 [shape = 'u32[]', space=smem, size = 0x4, offset = 0x4, fixed_abs, tag = 'smem constant byte address 0x4 - core index']
  #allocation1 [shape = 'u32[72,128]{1,0:T(1,128)}', space=vmem, size = 0x9000, scoped, tag = 'internal scratch']
  %s0 = inlined_call_operand.vmem [shape: f32[8,8], index: 0, kind: input, shape index: {}]
  %s1 = inlined_call_operand.vmem [shape: bf16[8,128], index: 1, kind: input, shape index: {}]
  %s2 = inlined_call_operand.hbm [shape: bf16[128,512], index: 2, kind: input, shape index: {}]
  %s3 = inlined_call_operand.vmem [shape: f32[1,512], index: 3, kind: input, shape index: {}]
  %s4 = inlined_call_operand.hbm [shape: bf16[512,1024], index: 4, kind: input, shape index: {}]
  %s5 = inlined_call_operand.vmem [shape: f32[1,1024], index: 5, kind: input, shape index: {}]
  %s6 = inlined_call_operand.vmem [shape: f32[1,8,128], index: 6, kind: output, shape index: {0}]
  %s7 = inlined_call_operand.vmem [shape: f32[1,8,128], index: 7, kind: output, shape index: {1}]
  %8 = xla_tuple %s6, %s7
  %s9 = sld [smem:[#allocation0]]
  $region50: #{ftws_forward.2} parent=0
    _
  %s11 = ssub.s32 1, %s9
  %s12 = scalar_select 0, %s11, %s9
  $region1: #{ftws_forward.2} parent=0
    #allocation2 [shape = 'u8[131072]{0}', space=vmem, size = 0x20000, scoped, tag = 'input window, operand 2, single buffered']
    #allocation3 [shape = 's32[1]{0}', space=sflag, size = 0x4, scoped, tag = 'scoped memory for ftws_forward.2']
    #allocation4 [shape = 'u8[1048576]{0}', space=vmem, size = 0x100000, scoped, tag = 'input window, operand 4, single buffered']
    #allocation5 [shape = 's32[1]{0}', space=sflag, size = 0x4, scoped, tag = 'scoped memory for ftws_forward.2']
    %13 = vsyncpa [#allocation3], 0
    %14 = vsyncpa [#allocation5], 0
    // Predicated region
    $region2: #{ftws_forward.2} parent=1 // pred_check
      _
    $region3: #{ftws_forward.2} parent=1 // pred_check_branch
      %16 = sbr.rel (0) target = $region5
    $region4: #{ftws_forward.2} parent=1 // pred_region
      _
    $region5: #{ftws_forward.2} parent=1 // pred_fallthru
      _
    // Predicated region
    $region6: #{ftws_forward.2} parent=1 // pred_check
      _
    $region7: #{ftws_forward.2} parent=1 // pred_check_branch
      %18 = sbr.rel (0) target = $region9
    $region8: #{ftws_forward.2} parent=1 // pred_region
      _
    $region9: #{ftws_forward.2} parent=1 // pred_fallthru
      _
    // Predicated region
    $region10: #{ftws_forward.2} parent=1 // pred_check
      _
    $region11: #{ftws_forward.2} parent=1 // pred_check_branch
      %20 = sbr.rel (0) target = $region13
    $region12: #{ftws_forward.2} parent=1 // pred_region
      %22 = vsyncadd [#allocation3], 0
      %s23 = sshll.u32 %s2, 4
      %s24 = int_to_ptr.hbm [resolvable:$true] %s23
      %s25 = sshll.u32 [#allocation2], 4
      %s26 = int_to_ptr.vmem [resolvable:$true] %s25
      %31 = dma.hbm_to_vmem [thread:$0]  %s24, 4096, %s26, [#allocation3], 256, 256, 16
    $region13: #{ftws_forward.2} parent=1 // pred_fallthru
      _
    // Predicated region
    $region14: #{ftws_forward.2} parent=1 // pred_check
      _
    $region15: #{ftws_forward.2} parent=1 // pred_check_branch
      %33 = sbr.rel (0) target = $region17
    $region16: #{ftws_forward.2} parent=1 // pred_region
      _
    $region17: #{ftws_forward.2} parent=1 // pred_fallthru
      _
    // Predicated region
    $region18: #{ftws_forward.2} parent=1 // pred_check
      _
    $region19: #{ftws_forward.2} parent=1 // pred_check_branch
      %35 = sbr.rel (0) target = $region21
    $region20: #{ftws_forward.2} parent=1 // pred_region
      %37 = vsyncadd [#allocation5], 0
      %s38 = sshll.u32 %s4, 4
      %s39 = int_to_ptr.hbm [resolvable:$true] %s38
      %s40 = sshll.u32 [#allocation4], 4
      %s41 = int_to_ptr.vmem [resolvable:$true] %s40
      %46 = dma.hbm_to_vmem [thread:$0]  %s39, 32768, %s41, [#allocation5], 512, 512, 32
    $region21: #{ftws_forward.2} parent=1 // pred_fallthru
      _
    // Predicated region
    $region22: #{ftws_forward.2} parent=1 // pred_check
      _
    $region23: #{ftws_forward.2} parent=1 // pred_check_branch
      %48 = sbr.rel (0) target = $region25
    $region24: #{ftws_forward.2} parent=1 // pred_region
      _
    $region25: #{ftws_forward.2} parent=1 // pred_fallthru
      _
    // Predicated region
    $region26: #{ftws_forward.2} parent=1 // pred_check
      _
    $region27: #{ftws_forward.2} parent=1 // pred_check_branch
      %50 = sbr.rel (0) target = $region29
    $region28: #{ftws_forward.2} parent=1 // pred_region
      %52 = dma.done [#allocation3], 4096
    $region29: #{ftws_forward.2} parent=1 // pred_fallthru
      _
    // Predicated region
    $region30: #{ftws_forward.2} parent=1 // pred_check
      _
    $region31: #{ftws_forward.2} parent=1 // pred_check_branch
      %54 = sbr.rel (0) target = $region33
    $region32: #{ftws_forward.2} parent=1 // pred_region
      %56 = dma.done [#allocation5], 32768
    $region33: #{ftws_forward.2} parent=1 // pred_fallthru
      _
    %v58 = vld [vmem:[%s0] sm:$0xff]
    %v59 = vpack.c.bf16 %v58, %v58
    %v60 = vld [vmem:[%s1] sm:$0xf]
    %vm61 = vcmask 64512
    %v63 = vsel %vm61, %v59, 0
    %vm65 = vcmask 1043456
    %v67 = vsel %vm65, %v60, 0
    %69 = vmatpush.bf16.msra.mxu0 0
    %70 = vmatpush.bf16.msra.mxu0 0
    %71 = vmatpush.bf16.msra.mxu0 0
    %72 = vmatpush.bf16.msra.mxu0 0
    %73 = vmatpush.bf16.msra.mxu0 0
    %74 = vmatpush.bf16.msra.mxu0 0
    %75 = vmatpush.bf16.msra.mxu0 0
    %76 = vmatpush.bf16.msra.mxu0 %v67
    %77 = vmatmul.bf16.gmra.mxu0 %v63
    %v78 = vpop.f32.mrf.mxu0
    %v79 = vadd.f32 0.0, %v78
    %v80 = vpop.f32.mrf.mxu0
    %81 = vdwg.mxu0
    %v82 = vmax.f32 %v79, 0.0
    %v83 = vpack.c.bf16 %v82, %v82
    %v84 = vld [vmem:[#allocation2] sm:$0xff]
    %v85 = vld [vmem:[#allocation2 + $0x8] sm:$0xff]
    %v86 = vld [vmem:[#allocation2 + $0x10] sm:$0xff]
    %v87 = vld [vmem:[#allocation2 + $0x18] sm:$0xff]
    %v88 = vld [vmem:[#allocation2 + $0x20] sm:$0xff]
    %v89 = vld [vmem:[#allocation2 + $0x28] sm:$0xff]
    %v90 = vld [vmem:[#allocation2 + $0x30] sm:$0xff]
    %v91 = vld [vmem:[#allocation2 + $0x38] sm:$0xff]
    %v92 = vld [vmem:[#allocation2 + $0x40] sm:$0xff]
    %v93 = vld [vmem:[#allocation2 + $0x48] sm:$0xff]
    %v94 = vld [vmem:[#allocation2 + $0x50] sm:$0xff]
    %v95 = vld [vmem:[#allocation2 + $0x58] sm:$0xff]
    %v96 = vld [vmem:[#allocation2 + $0x60] sm:$0xff]
    %v97 = vld [vmem:[#allocation2 + $0x68] sm:$0xff]
    %v98 = vld [vmem:[#allocation2 + $0x70] sm:$0xff]
    %v99 = vld [vmem:[#allocation2 + $0x78] sm:$0xff]
    %v100 = vld [vmem:[#allocation2 + $0x80] sm:$0xff]
    %v101 = vld [vmem:[#allocation2 + $0x88] sm:$0xff]
    %v102 = vld [vmem:[#allocation2 + $0x90] sm:$0xff]
    %v103 = vld [vmem:[#allocation2 + $0x98] sm:$0xff]
    %v104 = vld [vmem:[#allocation2 + $0xa0] sm:$0xff]
    %v105 = vld [vmem:[#allocation2 + $0xa8] sm:$0xff]
    %v106 = vld [vmem:[#allocation2 + $0xb0] sm:$0xff]
    %v107 = vld [vmem:[#allocation2 + $0xb8] sm:$0xff]
    %v108 = vld [vmem:[#allocation2 + $0xc0] sm:$0xff]
    %v109 = vld [vmem:[#allocation2 + $0xc8] sm:$0xff]
    %v110 = vld [vmem:[#allocation2 + $0xd0] sm:$0xff]
    %v111 = vld [vmem:[#allocation2 + $0xd8] sm:$0xff]
    %v112 = vld [vmem:[#allocation2 + $0xe0] sm:$0xff]
    %v113 = vld [vmem:[#allocation2 + $0xe8] sm:$0xff]
    %v114 = vld [vmem:[#allocation2 + $0xf0] sm:$0xff]
    %v115 = vld [vmem:[#allocation2 + $0xf8] sm:$0xff]
    %v116 = vld [vmem:[%s3] sm:$0xf]
    %v118 = vperm.slane %v116, 0
    %v119 = vperm.slane %v116, 1
    %v120 = vperm.slane %v116, 2
    %v121 = vperm.slane %v116, 3
    %v158 = vunpack.c.l.b16 %v84
    %v159 = vunpack.c.h.b16 %v84
    %v160 = vunpack.c.l.b16 %v85
    %v161 = vunpack.c.h.b16 %v85
    %v162 = vunpack.c.l.b16 %v86
    %v163 = vunpack.c.h.b16 %v86
    %v164 = vunpack.c.l.b16 %v87
    %v165 = vunpack.c.h.b16 %v87
    %v166 = vunpack.c.l.b16 %v88
    %v167 = vunpack.c.h.b16 %v88
    %v168 = vunpack.c.l.b16 %v89
    %v169 = vunpack.c.h.b16 %v89
    %v170 = vunpack.c.l.b16 %v90
    %v171 = vunpack.c.h.b16 %v90
    %v172 = vunpack.c.l.b16 %v91
    %v173 = vunpack.c.h.b16 %v91
    %v174 = vunpack.c.l.b16 %v92
    %v175 = vunpack.c.h.b16 %v92
    %v176 = vunpack.c.l.b16 %v93
    %v177 = vunpack.c.h.b16 %v93
    %v178 = vunpack.c.l.b16 %v94
    %v179 = vunpack.c.h.b16 %v94
    %v180 = vunpack.c.l.b16 %v95
    %v181 = vunpack.c.h.b16 %v95
    %v182 = vunpack.c.l.b16 %v96
    %v183 = vunpack.c.h.b16 %v96
    %v184 = vunpack.c.l.b16 %v97
    %v185 = vunpack.c.h.b16 %v97
    %v186 = vunpack.c.l.b16 %v98
    %v187 = vunpack.c.h.b16 %v98
    %v188 = vunpack.c.l.b16 %v99
    %v189 = vunpack.c.h.b16 %v99
    %v190 = vunpack.c.l.b16 %v100
    %v191 = vunpack.c.h.b16 %v100
    %v192 = vunpack.c.l.b16 %v101
    %v193 = vunpack.c.h.b16 %v101
    %v194 = vunpack.c.l.b16 %v102
    %v195 = vunpack.c.h.b16 %v102
    %v196 = vunpack.c.l.b16 %v103
    %v197 = vunpack.c.h.b16 %v103
    %v198 = vunpack.c.l.b16 %v104
    %v199 = vunpack.c.h.b16 %v104
    %v200 = vunpack.c.l.b16 %v105
    %v201 = vunpack.c.h.b16 %v105
    %v202 = vunpack.c.l.b16 %v106
    %v203 = vunpack.c.h.b16 %v106
    %v204 = vunpack.c.l.b16 %v107
    %v205 = vunpack.c.h.b16 %v107
    %v206 = vunpack.c.l.b16 %v108
    %v207 = vunpack.c.h.b16 %v108
    %v208 = vunpack.c.l.b16 %v109
    %v209 = vunpack.c.h.b16 %v109
    %v210 = vunpack.c.l.b16 %v110
    %v211 = vunpack.c.h.b16 %v110
    %v212 = vunpack.c.l.b16 %v111
    %v213 = vunpack.c.h.b16 %v111
    %v214 = vunpack.c.l.b16 %v112
    %v215 = vunpack.c.h.b16 %v112
    %v216 = vunpack.c.l.b16 %v113
    %v217 = vunpack.c.h.b16 %v113
    %v218 = vunpack.c.l.b16 %v114
    %v219 = vunpack.c.h.b16 %v114
    %v220 = vunpack.c.l.b16 %v115
    %v221 = vunpack.c.h.b16 %v115
    %v222 = vpack.c.b16 %v162, %v158
    %v223 = vpack.c.b16 %v163, %v159
    %v224 = vpack.c.b16 %v164, %v160
    %v225 = vpack.c.b16 %v165, %v161
    %v226 = vpack.c.b16 %v170, %v166
    %v227 = vpack.c.b16 %v171, %v167
    %v228 = vpack.c.b16 %v172, %v168
    %v229 = vpack.c.b16 %v173, %v169
    %v230 = vpack.c.b16 %v178, %v174
    %v231 = vpack.c.b16 %v179, %v175
    %v232 = vpack.c.b16 %v180, %v176
    %v233 = vpack.c.b16 %v181, %v177
    %v234 = vpack.c.b16 %v186, %v182
    %v235 = vpack.c.b16 %v187, %v183
    %v236 = vpack.c.b16 %v188, %v184
    %v237 = vpack.c.b16 %v189, %v185
    %v238 = vpack.c.b16 %v194, %v190
    %v239 = vpack.c.b16 %v195, %v191
    %v240 = vpack.c.b16 %v196, %v192
    %v241 = vpack.c.b16 %v197, %v193
    %v242 = vpack.c.b16 %v202, %v198
    %v243 = vpack.c.b16 %v203, %v199
    %v244 = vpack.c.b16 %v204, %v200
    %v245 = vpack.c.b16 %v205, %v201
    %v246 = vpack.c.b16 %v210, %v206
    %v247 = vpack.c.b16 %v211, %v207
    %v248 = vpack.c.b16 %v212, %v208
    %v249 = vpack.c.b16 %v213, %v209
    %v250 = vpack.c.b16 %v218, %v214
    %v251 = vpack.c.b16 %v219, %v215
    %v252 = vpack.c.b16 %v220, %v216
    %v253 = vpack.c.b16 %v221, %v217
    %286 = vmatpush.bf16.msra.mxu0 %v250
    %287 = vmatpush.bf16.msra.mxu0 %v246
    %288 = vmatpush.bf16.msra.mxu0 %v242
    %289 = vmatpush.bf16.msra.mxu0 %v238
    %290 = vmatpush.bf16.msra.mxu0 %v234
    %291 = vmatpush.bf16.msra.mxu0 %v230
    %292 = vmatpush.bf16.msra.mxu0 %v226
    %293 = vmatpush.bf16.msra.mxu0 %v222
    %294 = vmatmul.bf16.gmra.mxu0 %v83
    %v295 = vpop.f32.mrf.mxu0
    %v296 = vadd.f32 %v118, %v295
    %v297 = vpop.f32.mrf.mxu0
    %298 = vdwg.mxu0
    %299 = vmatpush.bf16.msra.mxu0 %v251
    %300 = vmatpush.bf16.msra.mxu0 %v247
    %301 = vmatpush.bf16.msra.mxu0 %v243
    %302 = vmatpush.bf16.msra.mxu0 %v239
    %303 = vmatpush.bf16.msra.mxu0 %v235
    %304 = vmatpush.bf16.msra.mxu0 %v231
    %305 = vmatpush.bf16.msra.mxu0 %v227
    %306 = vmatpush.bf16.msra.mxu0 %v223
    %307 = vmatmul.bf16.gmra.mxu0 %v83
    %v308 = vpop.f32.mrf.mxu0
    %v309 = vadd.f32 %v119, %v308
    %v310 = vpop.f32.mrf.mxu0
    %311 = vdwg.mxu0
    %312 = vmatpush.bf16.msra.mxu0 %v252
    %313 = vmatpush.bf16.msra.mxu0 %v248
    %314 = vmatpush.bf16.msra.mxu0 %v244
    %315 = vmatpush.bf16.msra.mxu0 %v240
    %316 = vmatpush.bf16.msra.mxu0 %v236
    %317 = vmatpush.bf16.msra.mxu0 %v232
    %318 = vmatpush.bf16.msra.mxu0 %v228
    %319 = vmatpush.bf16.msra.mxu0 %v224
    %320 = vmatmul.bf16.gmra.mxu0 %v83
    %v321 = vpop.f32.mrf.mxu0
    %v322 = vadd.f32 %v120, %v321
    %v323 = vpop.f32.mrf.mxu0
    %324 = vdwg.mxu0
    %325 = vmatpush.bf16.msra.mxu0 %v253
    %326 = vmatpush.bf16.msra.mxu0 %v249
    %327 = vmatpush.bf16.msra.mxu0 %v245
    %328 = vmatpush.bf16.msra.mxu0 %v241
    %329 = vmatpush.bf16.msra.mxu0 %v237
    %330 = vmatpush.bf16.msra.mxu0 %v233
    %331 = vmatpush.bf16.msra.mxu0 %v229
    %332 = vmatpush.bf16.msra.mxu0 %v225
    %333 = vmatmul.bf16.gmra.mxu0 %v83
    %v334 = vpop.f32.mrf.mxu0
    %v335 = vadd.f32 %v121, %v334
    %v336 = vpop.f32.mrf.mxu0
    %337 = vdwg.mxu0
    %v338 = vmax.f32 %v296, 0.0
    %v339 = vmax.f32 %v309, 0.0
    %v340 = vmax.f32 %v322, 0.0
    %v341 = vmax.f32 %v335, 0.0
    %v342 = vpack.c.bf16 %v338, %v338
    %v343 = vpack.c.bf16 %v339, %v339
    %v344 = vpack.c.bf16 %v340, %v340
    %v345 = vpack.c.bf16 %v341, %v341
    %v346 = vld [vmem:[#allocation4] sm:$0xff]
    %v347 = vld [vmem:[#allocation4 + $0x8] sm:$0xff]
    %v348 = vld [vmem:[#allocation4 + $0x10] sm:$0xff]
    %v349 = vld [vmem:[#allocation4 + $0x18] sm:$0xff]
    %v350 = vld [vmem:[#allocation4 + $0x20] sm:$0xff]
    %v351 = vld [vmem:[#allocation4 + $0x28] sm:$0xff]
    %v352 = vld [vmem:[#allocation4 + $0x30] sm:$0xff]
    %v353 = vld [vmem:[#allocation4 + $0x38] sm:$0xff]
    %v354 = vld [vmem:[#allocation4 + $0x40] sm:$0xff]
    %v355 = vld [vmem:[#allocation4 + $0x48] sm:$0xff]
    %v356 = vld [vmem:[#allocation4 + $0x50] sm:$0xff]
    %v357 = vld [vmem:[#allocation4 + $0x58] sm:$0xff]
    %v358 = vld [vmem:[#allocation4 + $0x60] sm:$0xff]
    %v359 = vld [vmem:[#allocation4 + $0x68] sm:$0xff]
    %v360 = vld [vmem:[#allocation4 + $0x70] sm:$0xff]
    %v361 = vld [vmem:[#allocation4 + $0x78] sm:$0xff]
    %v362 = vld [vmem:[#allocation4 + $0x80] sm:$0xff]
    %v363 = vld [vmem:[#allocation4 + $0x88] sm:$0xff]
    %v364 = vld [vmem:[#allocation4 + $0x90] sm:$0xff]
    %v365 = vld [vmem:[#allocation4 + $0x98] sm:$0xff]
    %v366 = vld [vmem:[#allocation4 + $0xa0] sm:$0xff]
    %v367 = vld [vmem:[#allocation4 + $0xa8] sm:$0xff]
    %v368 = vld [vmem:[#allocation4 + $0xb0] sm:$0xff]
    %v369 = vld [vmem:[#allocation4 + $0xb8] sm:$0xff]
    %v370 = vld [vmem:[#allocation4 + $0xc0] sm:$0xff]
    %v371 = vld [vmem:[#allocation4 + $0xc8] sm:$0xff]
    %v372 = vld [vmem:[#allocation4 + $0xd0] sm:$0xff]
    %v373 = vld [vmem:[#allocation4 + $0xd8] sm:$0xff]
    %v374 = vld [vmem:[#allocation4 + $0xe0] sm:$0xff]
    %v375 = vld [vmem:[#allocation4 + $0xe8] sm:$0xff]
    %v376 = vld [vmem:[#allocation4 + $0xf0] sm:$0xff]
    %v377 = vld [vmem:[#allocation4 + $0xf8] sm:$0xff]
    %v378 = vld [vmem:[#allocation4 + $0x100] sm:$0xff]
    %v379 = vld [vmem:[#allocation4 + $0x108] sm:$0xff]
    %v380 = vld [vmem:[#allocation4 + $0x110] sm:$0xff]
    %v381 = vld [vmem:[#allocation4 + $0x118] sm:$0xff]
    %v382 = vld [vmem:[#allocation4 + $0x120] sm:$0xff]
    %v383 = vld [vmem:[#allocation4 + $0x128] sm:$0xff]
    %v384 = vld [vmem:[#allocation4 + $0x130] sm:$0xff]
    %v385 = vld [vmem:[#allocation4 + $0x138] sm:$0xff]
    %v386 = vld [vmem:[#allocation4 + $0x140] sm:$0xff]
    %v387 = vld [vmem:[#allocation4 + $0x148] sm:$0xff]
    %v388 = vld [vmem:[#allocation4 + $0x150] sm:$0xff]
    %v389 = vld [vmem:[#allocation4 + $0x158] sm:$0xff]
    %v390 = vld [vmem:[#allocation4 + $0x160] sm:$0xff]
    %v391 = vld [vmem:[#allocation4 + $0x168] sm:$0xff]
    %v392 = vld [vmem:[#allocation4 + $0x170] sm:$0xff]
    %v393 = vld [vmem:[#allocation4 + $0x178] sm:$0xff]
    %v394 = vld [vmem:[#allocation4 + $0x180] sm:$0xff]
    %v395 = vld [vmem:[#allocation4 + $0x188] sm:$0xff]
    %v396 = vld [vmem:[#allocation4 + $0x190] sm:$0xff]
    %v397 = vld [vmem:[#allocation4 + $0x198] sm:$0xff]
    %v398 = vld [vmem:[#allocation4 + $0x1a0] sm:$0xff]
    %v399 = vld [vmem:[#allocation4 + $0x1a8] sm:$0xff]
    %v400 = vld [vmem:[#allocation4 + $0x1b0] sm:$0xff]
    %v401 = vld [vmem:[#allocation4 + $0x1b8] sm:$0xff]
    %v402 = vld [vmem:[#allocation4 + $0x1c0] sm:$0xff]
    %v403 = vld [vmem:[#allocation4 + $0x1c8] sm:$0xff]
    %v404 = vld [vmem:[#allocation4 + $0x1d0] sm:$0xff]
    %v405 = vld [vmem:[#allocation4 + $0x1d8] sm:$0xff]
    %v406 = vld [vmem:[#allocation4 + $0x1e0] sm:$0xff]
    %v407 = vld [vmem:[#allocation4 + $0x1e8] sm:$0xff]
    %v408 = vld [vmem:[#allocation4 + $0x1f0] sm:$0xff]
    %v409 = vld [vmem:[#allocation4 + $0x1f8] sm:$0xff]
    %v410 = vld [vmem:[#allocation4 + $0x200] sm:$0xff]
    %v411 = vld [vmem:[#allocation4 + $0x208] sm:$0xff]
    %v412 = vld [vmem:[#allocation4 + $0x210] sm:$0xff]
    %v413 = vld [vmem:[#allocation4 + $0x218] sm:$0xff]
    %v414 = vld [vmem:[#allocation4 + $0x220] sm:$0xff]
    %v415 = vld [vmem:[#allocation4 + $0x228] sm:$0xff]
    %v416 = vld [vmem:[#allocation4 + $0x230] sm:$0xff]
    %v417 = vld [vmem:[#allocation4 + $0x238] sm:$0xff]
    %v418 = vld [vmem:[#allocation4 + $0x240] sm:$0xff]
    %v419 = vld [vmem:[#allocation4 + $0x248] sm:$0xff]
    %v420 = vld [vmem:[#allocation4 + $0x250] sm:$0xff]
    %v421 = vld [vmem:[#allocation4 + $0x258] sm:$0xff]
    %v422 = vld [vmem:[#allocation4 + $0x260] sm:$0xff]
    %v423 = vld [vmem:[#allocation4 + $0x268] sm:$0xff]
    %v424 = vld [vmem:[#allocation4 + $0x270] sm:$0xff]
    %v425 = vld [vmem:[#allocation4 + $0x278] sm:$0xff]
    %v426 = vld [vmem:[#allocation4 + $0x280] sm:$0xff]
    %v427 = vld [vmem:[#allocation4 + $0x288] sm:$0xff]
    %v428 = vld [vmem:[#allocation4 + $0x290] sm:$0xff]
    %v429 = vld [vmem:[#allocation4 + $0x298] sm:$0xff]
    %v430 = vld [vmem:[#allocation4 + $0x2a0] sm:$0xff]
    %v431 = vld [vmem:[#allocation4 + $0x2a8] sm:$0xff]
    %v432 = vld [vmem:[#allocation4 + $0x2b0] sm:$0xff]
    %v433 = vld [vmem:[#allocation4 + $0x2b8] sm:$0xff]
    %v434 = vld [vmem:[#allocation4 + $0x2c0] sm:$0xff]
    %v435 = vld [vmem:[#allocation4 + $0x2c8] sm:$0xff]
    %v436 = vld [vmem:[#allocation4 + $0x2d0] sm:$0xff]
    %v437 = vld [vmem:[#allocation4 + $0x2d8] sm:$0xff]
    %v438 = vld [vmem:[#allocation4 + $0x2e0] sm:$0xff]
    %v439 = vld [vmem:[#allocation4 + $0x2e8] sm:$0xff]
    %v440 = vld [vmem:[#allocation4 + $0x2f0] sm:$0xff]
    %v441 = vld [vmem:[#allocation4 + $0x2f8] sm:$0xff]
    %v442 = vld [vmem:[#allocation4 + $0x300] sm:$0xff]
    %v443 = vld [vmem:[#allocation4 + $0x308] sm:$0xff]
    %v444 = vld [vmem:[#allocation4 + $0x310] sm:$0xff]
    %v445 = vld [vmem:[#allocation4 + $0x318] sm:$0xff]
    %v446 = vld [vmem:[#allocation4 + $0x320] sm:$0xff]
    %v447 = vld [vmem:[#allocation4 + $0x328] sm:$0xff]
    %v448 = vld [vmem:[#allocation4 + $0x330] sm:$0xff]
    %v449 = vld [vmem:[#allocation4 + $0x338] sm:$0xff]
    %v450 = vld [vmem:[#allocation4 + $0x340] sm:$0xff]
    %v451 = vld [vmem:[#allocation4 + $0x348] sm:$0xff]
    %v452 = vld [vmem:[#allocation4 + $0x350] sm:$0xff]
    %v453 = vld [vmem:[#allocation4 + $0x358] sm:$0xff]
    %v454 = vld [vmem:[#allocation4 + $0x360] sm:$0xff]
    %v455 = vld [vmem:[#allocation4 + $0x368] sm:$0xff]
    %v456 = vld [vmem:[#allocation4 + $0x370] sm:$0xff]
    %v457 = vld [vmem:[#allocation4 + $0x378] sm:$0xff]
    %v458 = vld [vmem:[#allocation4 + $0x380] sm:$0xff]
    %v459 = vld [vmem:[#allocation4 + $0x388] sm:$0xff]
    %v460 = vld [vmem:[#allocation4 + $0x390] sm:$0xff]
    %v461 = vld [vmem:[#allocation4 + $0x398] sm:$0xff]
    %v462 = vld [vmem:[#allocation4 + $0x3a0] sm:$0xff]
    %v463 = vld [vmem:[#allocation4 + $0x3a8] sm:$0xff]
    %v464 = vld [vmem:[#allocation4 + $0x3b0] sm:$0xff]
    %v465 = vld [vmem:[#allocation4 + $0x3b8] sm:$0xff]
    %v466 = vld [vmem:[#allocation4 + $0x3c0] sm:$0xff]
    %v467 = vld [vmem:[#allocation4 + $0x3c8] sm:$0xff]
    %v468 = vld [vmem:[#allocation4 + $0x3d0] sm:$0xff]
    %v469 = vld [vmem:[#allocation4 + $0x3d8] sm:$0xff]
    %v470 = vld [vmem:[#allocation4 + $0x3e0] sm:$0xff]
    %v471 = vld [vmem:[#allocation4 + $0x3e8] sm:$0xff]
    %v472 = vld [vmem:[#allocation4 + $0x3f0] sm:$0xff]
    %v473 = vld [vmem:[#allocation4 + $0x3f8] sm:$0xff]
    %v474 = vld [vmem:[#allocation4 + $0x400] sm:$0xff]
    %v475 = vld [vmem:[#allocation4 + $0x408] sm:$0xff]
    %v476 = vld [vmem:[#allocation4 + $0x410] sm:$0xff]
    %v477 = vld [vmem:[#allocation4 + $0x418] sm:$0xff]
    %v478 = vld [vmem:[#allocation4 + $0x420] sm:$0xff]
    %v479 = vld [vmem:[#allocation4 + $0x428] sm:$0xff]
    %v480 = vld [vmem:[#allocation4 + $0x430] sm:$0xff]
    %v481 = vld [vmem:[#allocation4 + $0x438] sm:$0xff]
    %v482 = vld [vmem:[#allocation4 + $0x440] sm:$0xff]
    %v483 = vld [vmem:[#allocation4 + $0x448] sm:$0xff]
    %v484 = vld [vmem:[#allocation4 + $0x450] sm:$0xff]
    %v485 = vld [vmem:[#allocation4 + $0x458] sm:$0xff]
    %v486 = vld [vmem:[#allocation4 + $0x460] sm:$0xff]
    %v487 = vld [vmem:[#allocation4 + $0x468] sm:$0xff]
    %v488 = vld [vmem:[#allocation4 + $0x470] sm:$0xff]
    %v489 = vld [vmem:[#allocation4 + $0x478] sm:$0xff]
    %v490 = vld [vmem:[#allocation4 + $0x480] sm:$0xff]
    %v491 = vld [vmem:[#allocation4 + $0x488] sm:$0xff]
    %v492 = vld [vmem:[#allocation4 + $0x490] sm:$0xff]
    %v493 = vld [vmem:[#allocation4 + $0x498] sm:$0xff]
    %v494 = vld [vmem:[#allocation4 + $0x4a0] sm:$0xff]
    %v495 = vld [vmem:[#allocation4 + $0x4a8] sm:$0xff]
    %v496 = vld [vmem:[#allocation4 + $0x4b0] sm:$0xff]
    %v497 = vld [vmem:[#allocation4 + $0x4b8] sm:$0xff]
    %v498 = vld [vmem:[#allocation4 + $0x4c0] sm:$0xff]
    %v499 = vld [vmem:[#allocation4 + $0x4c8] sm:$0xff]
    %v500 = vld [vmem:[#allocation4 + $0x4d0] sm:$0xff]
    %v501 = vld [vmem:[#allocation4 + $0x4d8] sm:$0xff]
    %v502 = vld [vmem:[#allocation4 + $0x4e0] sm:$0xff]
    %v503 = vld [vmem:[#allocation4 + $0x4e8] sm:$0xff]
    %v504 = vld [vmem:[#allocation4 + $0x4f0] sm:$0xff]
    %v505 = vld [vmem:[#allocation4 + $0x4f8] sm:$0xff]
    %v506 = vld [vmem:[#allocation4 + $0x500] sm:$0xff]
    %v507 = vld [vmem:[#allocation4 + $0x508] sm:$0xff]
    %v508 = vld [vmem:[#allocation4 + $0x510] sm:$0xff]
    %v509 = vld [vmem:[#allocation4 + $0x518] sm:$0xff]
    %v510 = vld [vmem:[#allocation4 + $0x520] sm:$0xff]
    %v511 = vld [vmem:[#allocation4 + $0x528] sm:$0xff]
    %v512 = vld [vmem:[#allocation4 + $0x530] sm:$0xff]
    %v513 = vld [vmem:[#allocation4 + $0x538] sm:$0xff]
    %v514 = vld [vmem:[#allocation4 + $0x540] sm:$0xff]
    %v515 = vld [vmem:[#allocation4 + $0x548] sm:$0xff]
    %v516 = vld [vmem:[#allocation4 + $0x550] sm:$0xff]
    %v517 = vld [vmem:[#allocation4 + $0x558] sm:$0xff]
    %v518 = vld [vmem:[#allocation4 + $0x560] sm:$0xff]
    %v519 = vld [vmem:[#allocation4 + $0x568] sm:$0xff]
    %v520 = vld [vmem:[#allocation4 + $0x570] sm:$0xff]
    %v521 = vld [vmem:[#allocation4 + $0x578] sm:$0xff]
    %v522 = vld [vmem:[#allocation4 + $0x580] sm:$0xff]
    %v523 = vld [vmem:[#allocation4 + $0x588] sm:$0xff]
    %v524 = vld [vmem:[#allocation4 + $0x590] sm:$0xff]
    %v525 = vld [vmem:[#allocation4 + $0x598] sm:$0xff]
    %v526 = vld [vmem:[#allocation4 + $0x5a0] sm:$0xff]
    %v527 = vld [vmem:[#allocation4 + $0x5a8] sm:$0xff]
    %v528 = vld [vmem:[#allocation4 + $0x5b0] sm:$0xff]
    %v529 = vld [vmem:[#allocation4 + $0x5b8] sm:$0xff]
    %v530 = vld [vmem:[#allocation4 + $0x5c0] sm:$0xff]
    %v531 = vld [vmem:[#allocation4 + $0x5c8] sm:$0xff]
    %v532 = vld [vmem:[#allocation4 + $0x5d0] sm:$0xff]
    %v533 = vld [vmem:[#allocation4 + $0x5d8] sm:$0xff]
    %v534 = vld [vmem:[#allocation4 + $0x5e0] sm:$0xff]
    %v535 = vld [vmem:[#allocation4 + $0x5e8] sm:$0xff]
    %v536 = vld [vmem:[#allocation4 + $0x5f0] sm:$0xff]
    %v537 = vld [vmem:[#allocation4 + $0x5f8] sm:$0xff]
    %v538 = vld [vmem:[#allocation4 + $0x600] sm:$0xff]
    %v539 = vld [vmem:[#allocation4 + $0x608] sm:$0xff]
    %v540 = vld [vmem:[#allocation4 + $0x610] sm:$0xff]
    %v541 = vld [vmem:[#allocation4 + $0x618] sm:$0xff]
    %v542 = vld [vmem:[#allocation4 + $0x620] sm:$0xff]
    %v543 = vld [vmem:[#allocation4 + $0x628] sm:$0xff]
    %v544 = vld [vmem:[#allocation4 + $0x630] sm:$0xff]
    %v545 = vld [vmem:[#allocation4 + $0x638] sm:$0xff]
    %v546 = vld [vmem:[#allocation4 + $0x640] sm:$0xff]
    %v547 = vld [vmem:[#allocation4 + $0x648] sm:$0xff]
    %v548 = vld [vmem:[#allocation4 + $0x650] sm:$0xff]
    %v549 = vld [vmem:[#allocation4 + $0x658] sm:$0xff]
    %v550 = vld [vmem:[#allocation4 + $0x660] sm:$0xff]
    %v551 = vld [vmem:[#allocation4 + $0x668] sm:$0xff]
    %v552 = vld [vmem:[#allocation4 + $0x670] sm:$0xff]
    %v553 = vld [vmem:[#allocation4 + $0x678] sm:$0xff]
    %v554 = vld [vmem:[#allocation4 + $0x680] sm:$0xff]
    %v555 = vld [vmem:[#allocation4 + $0x688] sm:$0xff]
    %v556 = vld [vmem:[#allocation4 + $0x690] sm:$0xff]
    %v557 = vld [vmem:[#allocation4 + $0x698] sm:$0xff]
    %v558 = vld [vmem:[#allocation4 + $0x6a0] sm:$0xff]
    %v559 = vld [vmem:[#allocation4 + $0x6a8] sm:$0xff]
    %v560 = vld [vmem:[#allocation4 + $0x6b0] sm:$0xff]
    %v561 = vld [vmem:[#allocation4 + $0x6b8] sm:$0xff]
    %v562 = vld [vmem:[#allocation4 + $0x6c0] sm:$0xff]
    %v563 = vld [vmem:[#allocation4 + $0x6c8] sm:$0xff]
    %v564 = vld [vmem:[#allocation4 + $0x6d0] sm:$0xff]
    %v565 = vld [vmem:[#allocation4 + $0x6d8] sm:$0xff]
    %v566 = vld [vmem:[#allocation4 + $0x6e0] sm:$0xff]
    %v567 = vld [vmem:[#allocation4 + $0x6e8] sm:$0xff]
    %v568 = vld [vmem:[#allocation4 + $0x6f0] sm:$0xff]
    %v569 = vld [vmem:[#allocation4 + $0x6f8] sm:$0xff]
    %v570 = vld [vmem:[#allocation4 + $0x700] sm:$0xff]
    %v571 = vld [vmem:[#allocation4 + $0x708] sm:$0xff]
    %v572 = vld [vmem:[#allocation4 + $0x710] sm:$0xff]
    %v573 = vld [vmem:[#allocation4 + $0x718] sm:$0xff]
    %v574 = vld [vmem:[#allocation4 + $0x720] sm:$0xff]
    %v575 = vld [vmem:[#allocation4 + $0x728] sm:$0xff]
    %v576 = vld [vmem:[#allocation4 + $0x730] sm:$0xff]
    %v577 = vld [vmem:[#allocation4 + $0x738] sm:$0xff]
    %v578 = vld [vmem:[#allocation4 + $0x740] sm:$0xff]
    %v579 = vld [vmem:[#allocation4 + $0x748] sm:$0xff]
    %v580 = vld [vmem:[#allocation4 + $0x750] sm:$0xff]
    %v581 = vld [vmem:[#allocation4 + $0x758] sm:$0xff]
    %v582 = vld [vmem:[#allocation4 + $0x760] sm:$0xff]
    %v583 = vld [vmem:[#allocation4 + $0x768] sm:$0xff]
    %v584 = vld [vmem:[#allocation4 + $0x770] sm:$0xff]
    %v585 = vld [vmem:[#allocation4 + $0x778] sm:$0xff]
    %v586 = vld [vmem:[#allocation4 + $0x780] sm:$0xff]
    %v587 = vld [vmem:[#allocation4 + $0x788] sm:$0xff]
    %v588 = vld [vmem:[#allocation4 + $0x790] sm:$0xff]
    %v589 = vld [vmem:[#allocation4 + $0x798] sm:$0xff]
    %v590 = vld [vmem:[#allocation4 + $0x7a0] sm:$0xff]
    %v591 = vld [vmem:[#allocation4 + $0x7a8] sm:$0xff]
    %v592 = vld [vmem:[#allocation4 + $0x7b0] sm:$0xff]
    %v593 = vld [vmem:[#allocation4 + $0x7b8] sm:$0xff]
    %v594 = vld [vmem:[#allocation4 + $0x7c0] sm:$0xff]
    %v595 = vld [vmem:[#allocation4 + $0x7c8] sm:$0xff]
    %v596 = vld [vmem:[#allocation4 + $0x7d0] sm:$0xff]
    %v597 = vld [vmem:[#allocation4 + $0x7d8] sm:$0xff]
    %v598 = vld [vmem:[#allocation4 + $0x7e0] sm:$0xff]
    %v599 = vld [vmem:[#allocation4 + $0x7e8] sm:$0xff]
    %v600 = vld [vmem:[#allocation4 + $0x7f0] sm:$0xff]
    %v601 = vld [vmem:[#allocation4 + $0x7f8] sm:$0xff]
    %v602 = vld [vmem:[%s5] sm:$0xff]
    %v604 = vperm.slane %v602, 0
    %v605 = vperm.slane %v602, 1
    %v606 = vperm.slane %v602, 2
    %v607 = vperm.slane %v602, 3
    %v608 = vperm.slane %v602, 4
    %v609 = vperm.slane %v602, 5
    %v610 = vperm.slane %v602, 6
    %v611 = vperm.slane %v602, 7
    %v876 = vunpack.c.l.b16 %v346
    %v877 = vunpack.c.h.b16 %v346
    %v878 = vunpack.c.l.b16 %v347
    %v879 = vunpack.c.h.b16 %v347
    %v880 = vunpack.c.l.b16 %v348
    %v881 = vunpack.c.h.b16 %v348
    %v882 = vunpack.c.l.b16 %v349
    %v883 = vunpack.c.h.b16 %v349
    %v884 = vunpack.c.l.b16 %v350
    %v885 = vunpack.c.h.b16 %v350
    %v886 = vunpack.c.l.b16 %v351
    %v887 = vunpack.c.h.b16 %v351
    %v888 = vunpack.c.l.b16 %v352
    %v889 = vunpack.c.h.b16 %v352
    %v890 = vunpack.c.l.b16 %v353
    %v891 = vunpack.c.h.b16 %v353
    %v892 = vunpack.c.l.b16 %v354
    %v893 = vunpack.c.h.b16 %v354
    %v894 = vunpack.c.l.b16 %v355
    %v895 = vunpack.c.h.b16 %v355
    %v896 = vunpack.c.l.b16 %v356
    %v897 = vunpack.c.h.b16 %v356
    %v898 = vunpack.c.l.b16 %v357
    %v899 = vunpack.c.h.b16 %v357
    %v900 = vunpack.c.l.b16 %v358
    %v901 = vunpack.c.h.b16 %v358
    %v902 = vunpack.c.l.b16 %v359
    %v903 = vunpack.c.h.b16 %v359
    %v904 = vunpack.c.l.b16 %v360
    %v905 = vunpack.c.h.b16 %v360
    %v906 = vunpack.c.l.b16 %v361
    %v907 = vunpack.c.h.b16 %v361
    %v908 = vunpack.c.l.b16 %v362
    %v909 = vunpack.c.h.b16 %v362
    %v910 = vunpack.c.l.b16 %v363
    %v911 = vunpack.c.h.b16 %v363
    %v912 = vunpack.c.l.b16 %v364
    %v913 = vunpack.c.h.b16 %v364
    %v914 = vunpack.c.l.b16 %v365
    %v915 = vunpack.c.h.b16 %v365
    %v916 = vunpack.c.l.b16 %v366
    %v917 = vunpack.c.h.b16 %v366
    %v918 = vunpack.c.l.b16 %v367
    %v919 = vunpack.c.h.b16 %v367
    %v920 = vunpack.c.l.b16 %v368
    %v921 = vunpack.c.h.b16 %v368
    %v922 = vunpack.c.l.b16 %v369
    %v923 = vunpack.c.h.b16 %v369
    %v924 = vunpack.c.l.b16 %v370
    %v925 = vunpack.c.h.b16 %v370
    %v926 = vunpack.c.l.b16 %v371
    %v927 = vunpack.c.h.b16 %v371
    %v928 = vunpack.c.l.b16 %v372
    %v929 = vunpack.c.h.b16 %v372
    %v930 = vunpack.c.l.b16 %v373
    %v931 = vunpack.c.h.b16 %v373
    %v932 = vunpack.c.l.b16 %v374
    %v933 = vunpack.c.h.b16 %v374
    %v934 = vunpack.c.l.b16 %v375
    %v935 = vunpack.c.h.b16 %v375
    %v936 = vunpack.c.l.b16 %v376
    %v937 = vunpack.c.h.b16 %v376
    %v938 = vunpack.c.l.b16 %v377
    %v939 = vunpack.c.h.b16 %v377
    %v940 = vunpack.c.l.b16 %v378
    %v941 = vunpack.c.h.b16 %v378
    %v942 = vunpack.c.l.b16 %v379
    %v943 = vunpack.c.h.b16 %v379
    %v944 = vunpack.c.l.b16 %v380
    %v945 = vunpack.c.h.b16 %v380
    %v946 = vunpack.c.l.b16 %v381
    %v947 = vunpack.c.h.b16 %v381
    %v948 = vunpack.c.l.b16 %v382
    %v949 = vunpack.c.h.b16 %v382
    %v950 = vunpack.c.l.b16 %v383
    %v951 = vunpack.c.h.b16 %v383
    %v952 = vunpack.c.l.b16 %v384
    %v953 = vunpack.c.h.b16 %v384
    %v954 = vunpack.c.l.b16 %v385
    %v955 = vunpack.c.h.b16 %v385
    %v956 = vunpack.c.l.b16 %v386
    %v957 = vunpack.c.h.b16 %v386
    %v958 = vunpack.c.l.b16 %v387
    %v959 = vunpack.c.h.b16 %v387
    %v960 = vunpack.c.l.b16 %v388
    %v961 = vunpack.c.h.b16 %v388
    %v962 = vunpack.c.l.b16 %v389
    %v963 = vunpack.c.h.b16 %v389
    %v964 = vunpack.c.l.b16 %v390
    %v965 = vunpack.c.h.b16 %v390
    %v966 = vunpack.c.l.b16 %v391
    %v967 = vunpack.c.h.b16 %v391
    %v968 = vunpack.c.l.b16 %v392
    %v969 = vunpack.c.h.b16 %v392
    %v970 = vunpack.c.l.b16 %v393
    %v971 = vunpack.c.h.b16 %v393
    %v972 = vunpack.c.l.b16 %v394
    %v973 = vunpack.c.h.b16 %v394
    %v974 = vunpack.c.l.b16 %v395
    %v975 = vunpack.c.h.b16 %v395
    %v976 = vunpack.c.l.b16 %v396
    %v977 = vunpack.c.h.b16 %v396
    %v978 = vunpack.c.l.b16 %v397
    %v979 = vunpack.c.h.b16 %v397
    %v980 = vunpack.c.l.b16 %v398
    %v981 = vunpack.c.h.b16 %v398
    %v982 = vunpack.c.l.b16 %v399
    %v983 = vunpack.c.h.b16 %v399
    %v984 = vunpack.c.l.b16 %v400
    %v985 = vunpack.c.h.b16 %v400
    %v986 = vunpack.c.l.b16 %v401
    %v987 = vunpack.c.h.b16 %v401
    %v988 = vunpack.c.l.b16 %v402
    %v989 = vunpack.c.h.b16 %v402
    %v990 = vunpack.c.l.b16 %v403
    %v991 = vunpack.c.h.b16 %v403
    %v992 = vunpack.c.l.b16 %v404
    %v993 = vunpack.c.h.b16 %v404
    %v994 = vunpack.c.l.b16 %v405
    %v995 = vunpack.c.h.b16 %v405
    %v996 = vunpack.c.l.b16 %v406
    %v997 = vunpack.c.h.b16 %v406
    %v998 = vunpack.c.l.b16 %v407
    %v999 = vunpack.c.h.b16 %v407
    %v1000 = vunpack.c.l.b16 %v408
    %v1001 = vunpack.c.h.b16 %v408
    %v1002 = vunpack.c.l.b16 %v409
    %v1003 = vunpack.c.h.b16 %v409
    %v1004 = vunpack.c.l.b16 %v410
    %v1005 = vunpack.c.h.b16 %v410
    %v1006 = vunpack.c.l.b16 %v411
    %v1007 = vunpack.c.h.b16 %v411
    %v1008 = vunpack.c.l.b16 %v412
    %v1009 = vunpack.c.h.b16 %v412
    %v1010 = vunpack.c.l.b16 %v413
    %v1011 = vunpack.c.h.b16 %v413
    %v1012 = vunpack.c.l.b16 %v414
    %v1013 = vunpack.c.h.b16 %v414
    %v1014 = vunpack.c.l.b16 %v415
    %v1015 = vunpack.c.h.b16 %v415
    %v1016 = vunpack.c.l.b16 %v416
    %v1017 = vunpack.c.h.b16 %v416
    %v1018 = vunpack.c.l.b16 %v417
    %v1019 = vunpack.c.h.b16 %v417
    %v1020 = vunpack.c.l.b16 %v418
    %v1021 = vunpack.c.h.b16 %v418
    %v1022 = vunpack.c.l.b16 %v419
    %v1023 = vunpack.c.h.b16 %v419
    %v1024 = vunpack.c.l.b16 %v420
    %v1025 = vunpack.c.h.b16 %v420
    %v1026 = vunpack.c.l.b16 %v421
    %v1027 = vunpack.c.h.b16 %v421
    %v1028 = vunpack.c.l.b16 %v422
    %v1029 = vunpack.c.h.b16 %v422
    %v1030 = vunpack.c.l.b16 %v423
    %v1031 = vunpack.c.h.b16 %v423
    %v1032 = vunpack.c.l.b16 %v424
    %v1033 = vunpack.c.h.b16 %v424
    %v1034 = vunpack.c.l.b16 %v425
    %v1035 = vunpack.c.h.b16 %v425
    %v1036 = vunpack.c.l.b16 %v426
    %v1037 = vunpack.c.h.b16 %v426
    %v1038 = vunpack.c.l.b16 %v427
    %v1039 = vunpack.c.h.b16 %v427
    %v1040 = vunpack.c.l.b16 %v428
    %v1041 = vunpack.c.h.b16 %v428
    %v1042 = vunpack.c.l.b16 %v429
    %v1043 = vunpack.c.h.b16 %v429
    %v1044 = vunpack.c.l.b16 %v430
    %v1045 = vunpack.c.h.b16 %v430
    %v1046 = vunpack.c.l.b16 %v431
    %v1047 = vunpack.c.h.b16 %v431
    %v1048 = vunpack.c.l.b16 %v432
    %v1049 = vunpack.c.h.b16 %v432
    %v1050 = vunpack.c.l.b16 %v433
    %v1051 = vunpack.c.h.b16 %v433
    %v1052 = vunpack.c.l.b16 %v434
    %v1053 = vunpack.c.h.b16 %v434
    %v1054 = vunpack.c.l.b16 %v435
    %v1055 = vunpack.c.h.b16 %v435
    %v1056 = vunpack.c.l.b16 %v436
    %v1057 = vunpack.c.h.b16 %v436
    %v1058 = vunpack.c.l.b16 %v437
    %v1059 = vunpack.c.h.b16 %v437
    %v1060 = vunpack.c.l.b16 %v438
    %v1061 = vunpack.c.h.b16 %v438
    %v1062 = vunpack.c.l.b16 %v439
    %v1063 = vunpack.c.h.b16 %v439
    %v1064 = vunpack.c.l.b16 %v440
    %v1065 = vunpack.c.h.b16 %v440
    %v1066 = vunpack.c.l.b16 %v441
    %v1067 = vunpack.c.h.b16 %v441
    %v1068 = vunpack.c.l.b16 %v442
    %v1069 = vunpack.c.h.b16 %v442
    %v1070 = vunpack.c.l.b16 %v443
    %v1071 = vunpack.c.h.b16 %v443
    %v1072 = vunpack.c.l.b16 %v444
    %v1073 = vunpack.c.h.b16 %v444
    %v1074 = vunpack.c.l.b16 %v445
    %v1075 = vunpack.c.h.b16 %v445
    %v1076 = vunpack.c.l.b16 %v446
    %v1077 = vunpack.c.h.b16 %v446
    %v1078 = vunpack.c.l.b16 %v447
    %v1079 = vunpack.c.h.b16 %v447
    %v1080 = vunpack.c.l.b16 %v448
    %v1081 = vunpack.c.h.b16 %v448
    %v1082 = vunpack.c.l.b16 %v449
    %v1083 = vunpack.c.h.b16 %v449
    %v1084 = vunpack.c.l.b16 %v450
    %v1085 = vunpack.c.h.b16 %v450
    %v1086 = vunpack.c.l.b16 %v451
    %v1087 = vunpack.c.h.b16 %v451
    %v1088 = vunpack.c.l.b16 %v452
    %v1089 = vunpack.c.h.b16 %v452
    %v1090 = vunpack.c.l.b16 %v453
    %v1091 = vunpack.c.h.b16 %v453
    %v1092 = vunpack.c.l.b16 %v454
    %v1093 = vunpack.c.h.b16 %v454
    %v1094 = vunpack.c.l.b16 %v455
    %v1095 = vunpack.c.h.b16 %v455
    %v1096 = vunpack.c.l.b16 %v456
    %v1097 = vunpack.c.h.b16 %v456
    %v1098 = vunpack.c.l.b16 %v457
    %v1099 = vunpack.c.h.b16 %v457
    %v1100 = vunpack.c.l.b16 %v458
    %v1101 = vunpack.c.h.b16 %v458
    %v1102 = vunpack.c.l.b16 %v459
    %v1103 = vunpack.c.h.b16 %v459
    %v1104 = vunpack.c.l.b16 %v460
    %v1105 = vunpack.c.h.b16 %v460
    %v1106 = vunpack.c.l.b16 %v461
    %v1107 = vunpack.c.h.b16 %v461
    %v1108 = vunpack.c.l.b16 %v462
    %v1109 = vunpack.c.h.b16 %v462
    %v1110 = vunpack.c.l.b16 %v463
    %v1111 = vunpack.c.h.b16 %v463
    %v1112 = vunpack.c.l.b16 %v464
    %v1113 = vunpack.c.h.b16 %v464
    %v1114 = vunpack.c.l.b16 %v465
    %v1115 = vunpack.c.h.b16 %v465
    %v1116 = vunpack.c.l.b16 %v466
    %v1117 = vunpack.c.h.b16 %v466
    %v1118 = vunpack.c.l.b16 %v467
    %v1119 = vunpack.c.h.b16 %v467
    %v1120 = vunpack.c.l.b16 %v468
    %v1121 = vunpack.c.h.b16 %v468
    %v1122 = vunpack.c.l.b16 %v469
    %v1123 = vunpack.c.h.b16 %v469
    %v1124 = vunpack.c.l.b16 %v470
    %v1125 = vunpack.c.h.b16 %v470
    %v1126 = vunpack.c.l.b16 %v471
    %v1127 = vunpack.c.h.b16 %v471
    %v1128 = vunpack.c.l.b16 %v472
    %v1129 = vunpack.c.h.b16 %v472
    %v1130 = vunpack.c.l.b16 %v473
    %v1131 = vunpack.c.h.b16 %v473
    %v1132 = vunpack.c.l.b16 %v474
    %v1133 = vunpack.c.h.b16 %v474
    %v1134 = vunpack.c.l.b16 %v475
    %v1135 = vunpack.c.h.b16 %v475
    %v1136 = vunpack.c.l.b16 %v476
    %v1137 = vunpack.c.h.b16 %v476
    %v1138 = vunpack.c.l.b16 %v477
    %v1139 = vunpack.c.h.b16 %v477
    %v1140 = vunpack.c.l.b16 %v478
    %v1141 = vunpack.c.h.b16 %v478
    %v1142 = vunpack.c.l.b16 %v479
    %v1143 = vunpack.c.h.b16 %v479
    %v1144 = vunpack.c.l.b16 %v480
    %v1145 = vunpack.c.h.b16 %v480
    %v1146 = vunpack.c.l.b16 %v481
    %v1147 = vunpack.c.h.b16 %v481
    %v1148 = vunpack.c.l.b16 %v482
    %v1149 = vunpack.c.h.b16 %v482
    %v1150 = vunpack.c.l.b16 %v483
    %v1151 = vunpack.c.h.b16 %v483
    %v1152 = vunpack.c.l.b16 %v484
    %v1153 = vunpack.c.h.b16 %v484
    %v1154 = vunpack.c.l.b16 %v485
    %v1155 = vunpack.c.h.b16 %v485
    %v1156 = vunpack.c.l.b16 %v486
    %v1157 = vunpack.c.h.b16 %v486
    %v1158 = vunpack.c.l.b16 %v487
    %v1159 = vunpack.c.h.b16 %v487
    %v1160 = vunpack.c.l.b16 %v488
    %v1161 = vunpack.c.h.b16 %v488
    %v1162 = vunpack.c.l.b16 %v489
    %v1163 = vunpack.c.h.b16 %v489
    %v1164 = vunpack.c.l.b16 %v490
    %v1165 = vunpack.c.h.b16 %v490
    %v1166 = vunpack.c.l.b16 %v491
    %v1167 = vunpack.c.h.b16 %v491
    %v1168 = vunpack.c.l.b16 %v492
    %v1169 = vunpack.c.h.b16 %v492
    %v1170 = vunpack.c.l.b16 %v493
    %v1171 = vunpack.c.h.b16 %v493
    %v1172 = vunpack.c.l.b16 %v494
    %v1173 = vunpack.c.h.b16 %v494
    %v1174 = vunpack.c.l.b16 %v495
    %v1175 = vunpack.c.h.b16 %v495
    %v1176 = vunpack.c.l.b16 %v496
    %v1177 = vunpack.c.h.b16 %v496
    %v1178 = vunpack.c.l.b16 %v497
    %v1179 = vunpack.c.h.b16 %v497
    %v1180 = vunpack.c.l.b16 %v498
    %v1181 = vunpack.c.h.b16 %v498
    %v1182 = vunpack.c.l.b16 %v499
    %v1183 = vunpack.c.h.b16 %v499
    %v1184 = vunpack.c.l.b16 %v500
    %v1185 = vunpack.c.h.b16 %v500
    %v1186 = vunpack.c.l.b16 %v501
    %v1187 = vunpack.c.h.b16 %v501
    %v1188 = vunpack.c.l.b16 %v502
    %v1189 = vunpack.c.h.b16 %v502
    %v1190 = vunpack.c.l.b16 %v503
    %v1191 = vunpack.c.h.b16 %v503
    %v1192 = vunpack.c.l.b16 %v504
    %v1193 = vunpack.c.h.b16 %v504
    %v1194 = vunpack.c.l.b16 %v505
    %v1195 = vunpack.c.h.b16 %v505
    %v1196 = vunpack.c.l.b16 %v506
    %v1197 = vunpack.c.h.b16 %v506
    %v1198 = vunpack.c.l.b16 %v507
    %v1199 = vunpack.c.h.b16 %v507
    %v1200 = vunpack.c.l.b16 %v508
    %v1201 = vunpack.c.h.b16 %v508
    %v1202 = vunpack.c.l.b16 %v509
    %v1203 = vunpack.c.h.b16 %v509
    %v1204 = vunpack.c.l.b16 %v510
    %v1205 = vunpack.c.h.b16 %v510
    %v1206 = vunpack.c.l.b16 %v511
    %v1207 = vunpack.c.h.b16 %v511
    %v1208 = vunpack.c.l.b16 %v512
    %v1209 = vunpack.c.h.b16 %v512
    %v1210 = vunpack.c.l.b16 %v513
    %v1211 = vunpack.c.h.b16 %v513
    %v1212 = vunpack.c.l.b16 %v514
    %v1213 = vunpack.c.h.b16 %v514
    %v1214 = vunpack.c.l.b16 %v515
    %v1215 = vunpack.c.h.b16 %v515
    %v1216 = vunpack.c.l.b16 %v516
    %v1217 = vunpack.c.h.b16 %v516
    %v1218 = vunpack.c.l.b16 %v517
    %v1219 = vunpack.c.h.b16 %v517
    %v1220 = vunpack.c.l.b16 %v518
    %v1221 = vunpack.c.h.b16 %v518
    %v1222 = vunpack.c.l.b16 %v519
    %v1223 = vunpack.c.h.b16 %v519
    %v1224 = vunpack.c.l.b16 %v520
    %v1225 = vunpack.c.h.b16 %v520
    %v1226 = vunpack.c.l.b16 %v521
    %v1227 = vunpack.c.h.b16 %v521
    %v1228 = vunpack.c.l.b16 %v522
    %v1229 = vunpack.c.h.b16 %v522
    %v1230 = vunpack.c.l.b16 %v523
    %v1231 = vunpack.c.h.b16 %v523
    %v1232 = vunpack.c.l.b16 %v524
    %v1233 = vunpack.c.h.b16 %v524
    %v1234 = vunpack.c.l.b16 %v525
    %v1235 = vunpack.c.h.b16 %v525
    %v1236 = vunpack.c.l.b16 %v526
    %v1237 = vunpack.c.h.b16 %v526
    %v1238 = vunpack.c.l.b16 %v527
    %v1239 = vunpack.c.h.b16 %v527
    %v1240 = vunpack.c.l.b16 %v528
    %v1241 = vunpack.c.h.b16 %v528
    %v1242 = vunpack.c.l.b16 %v529
    %v1243 = vunpack.c.h.b16 %v529
    %v1244 = vunpack.c.l.b16 %v530
    %v1245 = vunpack.c.h.b16 %v530
    %v1246 = vunpack.c.l.b16 %v531
    %v1247 = vunpack.c.h.b16 %v531
    %v1248 = vunpack.c.l.b16 %v532
    %v1249 = vunpack.c.h.b16 %v532
    %v1250 = vunpack.c.l.b16 %v533
    %v1251 = vunpack.c.h.b16 %v533
    %v1252 = vunpack.c.l.b16 %v534
    %v1253 = vunpack.c.h.b16 %v534
    %v1254 = vunpack.c.l.b16 %v535
    %v1255 = vunpack.c.h.b16 %v535
    %v1256 = vunpack.c.l.b16 %v536
    %v1257 = vunpack.c.h.b16 %v536
    %v1258 = vunpack.c.l.b16 %v537
    %v1259 = vunpack.c.h.b16 %v537
    %v1260 = vunpack.c.l.b16 %v538
    %v1261 = vunpack.c.h.b16 %v538
    %v1262 = vunpack.c.l.b16 %v539
    %v1263 = vunpack.c.h.b16 %v539
    %v1264 = vunpack.c.l.b16 %v540
    %v1265 = vunpack.c.h.b16 %v540
    %v1266 = vunpack.c.l.b16 %v541
    %v1267 = vunpack.c.h.b16 %v541
    %v1268 = vunpack.c.l.b16 %v542
    %v1269 = vunpack.c.h.b16 %v542
    %v1270 = vunpack.c.l.b16 %v543
    %v1271 = vunpack.c.h.b16 %v543
    %v1272 = vunpack.c.l.b16 %v544
    %v1273 = vunpack.c.h.b16 %v544
    %v1274 = vunpack.c.l.b16 %v545
    %v1275 = vunpack.c.h.b16 %v545
    %v1276 = vunpack.c.l.b16 %v546
    %v1277 = vunpack.c.h.b16 %v546
    %v1278 = vunpack.c.l.b16 %v547
    %v1279 = vunpack.c.h.b16 %v547
    %v1280 = vunpack.c.l.b16 %v548
    %v1281 = vunpack.c.h.b16 %v548
    %v1282 = vunpack.c.l.b16 %v549
    %v1283 = vunpack.c.h.b16 %v549
    %v1284 = vunpack.c.l.b16 %v550
    %v1285 = vunpack.c.h.b16 %v550
    %v1286 = vunpack.c.l.b16 %v551
    %v1287 = vunpack.c.h.b16 %v551
    %v1288 = vunpack.c.l.b16 %v552
    %v1289 = vunpack.c.h.b16 %v552
    %v1290 = vunpack.c.l.b16 %v553
    %v1291 = vunpack.c.h.b16 %v553
    %v1292 = vunpack.c.l.b16 %v554
    %v1293 = vunpack.c.h.b16 %v554
    %v1294 = vunpack.c.l.b16 %v555
    %v1295 = vunpack.c.h.b16 %v555
    %v1296 = vunpack.c.l.b16 %v556
    %v1297 = vunpack.c.h.b16 %v556
    %v1298 = vunpack.c.l.b16 %v557
    %v1299 = vunpack.c.h.b16 %v557
    %v1300 = vunpack.c.l.b16 %v558
    %v1301 = vunpack.c.h.b16 %v558
    %v1302 = vunpack.c.l.b16 %v559
    %v1303 = vunpack.c.h.b16 %v559
    %v1304 = vunpack.c.l.b16 %v560
    %v1305 = vunpack.c.h.b16 %v560
    %v1306 = vunpack.c.l.b16 %v561
    %v1307 = vunpack.c.h.b16 %v561
    %v1308 = vunpack.c.l.b16 %v562
    %v1309 = vunpack.c.h.b16 %v562
    %v1310 = vunpack.c.l.b16 %v563
    %v1311 = vunpack.c.h.b16 %v563
    %v1312 = vunpack.c.l.b16 %v564
    %v1313 = vunpack.c.h.b16 %v564
    %v1314 = vunpack.c.l.b16 %v565
    %v1315 = vunpack.c.h.b16 %v565
    %v1316 = vunpack.c.l.b16 %v566
    %v1317 = vunpack.c.h.b16 %v566
    %v1318 = vunpack.c.l.b16 %v567
    %v1319 = vunpack.c.h.b16 %v567
    %v1320 = vunpack.c.l.b16 %v568
    %v1321 = vunpack.c.h.b16 %v568
    %v1322 = vunpack.c.l.b16 %v569
    %v1323 = vunpack.c.h.b16 %v569
    %v1324 = vunpack.c.l.b16 %v570
    %v1325 = vunpack.c.h.b16 %v570
    %v1326 = vunpack.c.l.b16 %v571
    %v1327 = vunpack.c.h.b16 %v571
    %v1328 = vunpack.c.l.b16 %v572
    %v1329 = vunpack.c.h.b16 %v572
    %v1330 = vunpack.c.l.b16 %v573
    %v1331 = vunpack.c.h.b16 %v573
    %v1332 = vunpack.c.l.b16 %v574
    %v1333 = vunpack.c.h.b16 %v574
    %v1334 = vunpack.c.l.b16 %v575
    %v1335 = vunpack.c.h.b16 %v575
    %v1336 = vunpack.c.l.b16 %v576
    %v1337 = vunpack.c.h.b16 %v576
    %v1338 = vunpack.c.l.b16 %v577
    %v1339 = vunpack.c.h.b16 %v577
    %v1340 = vunpack.c.l.b16 %v578
    %v1341 = vunpack.c.h.b16 %v578
    %v1342 = vunpack.c.l.b16 %v579
    %v1343 = vunpack.c.h.b16 %v579
    %v1344 = vunpack.c.l.b16 %v580
    %v1345 = vunpack.c.h.b16 %v580
    %v1346 = vunpack.c.l.b16 %v581
    %v1347 = vunpack.c.h.b16 %v581
    %v1348 = vunpack.c.l.b16 %v582
    %v1349 = vunpack.c.h.b16 %v582
    %v1350 = vunpack.c.l.b16 %v583
    %v1351 = vunpack.c.h.b16 %v583
    %v1352 = vunpack.c.l.b16 %v584
    %v1353 = vunpack.c.h.b16 %v584
    %v1354 = vunpack.c.l.b16 %v585
    %v1355 = vunpack.c.h.b16 %v585
    %v1356 = vunpack.c.l.b16 %v586
    %v1357 = vunpack.c.h.b16 %v586
    %v1358 = vunpack.c.l.b16 %v587
    %v1359 = vunpack.c.h.b16 %v587
    %v1360 = vunpack.c.l.b16 %v588
    %v1361 = vunpack.c.h.b16 %v588
    %v1362 = vunpack.c.l.b16 %v589
    %v1363 = vunpack.c.h.b16 %v589
    %v1364 = vunpack.c.l.b16 %v590
    %v1365 = vunpack.c.h.b16 %v590
    %v1366 = vunpack.c.l.b16 %v591
    %v1367 = vunpack.c.h.b16 %v591
    %v1368 = vunpack.c.l.b16 %v592
    %v1369 = vunpack.c.h.b16 %v592
    %v1370 = vunpack.c.l.b16 %v593
    %v1371 = vunpack.c.h.b16 %v593
    %v1372 = vunpack.c.l.b16 %v594
    %v1373 = vunpack.c.h.b16 %v594
    %v1374 = vunpack.c.l.b16 %v595
    %v1375 = vunpack.c.h.b16 %v595
    %v1376 = vunpack.c.l.b16 %v596
    %v1377 = vunpack.c.h.b16 %v596
    %v1378 = vunpack.c.l.b16 %v597
    %v1379 = vunpack.c.h.b16 %v597
    %v1380 = vunpack.c.l.b16 %v598
    %v1381 = vunpack.c.h.b16 %v598
    %v1382 = vunpack.c.l.b16 %v599
    %v1383 = vunpack.c.h.b16 %v599
    %v1384 = vunpack.c.l.b16 %v600
    %v1385 = vunpack.c.h.b16 %v600
    %v1386 = vunpack.c.l.b16 %v601
    %v1387 = vunpack.c.h.b16 %v601
    %v1388 = vpack.c.b16 %v884, %v876
    %v1389 = vpack.c.b16 %v885, %v877
    %v1390 = vpack.c.b16 %v886, %v878
    %v1391 = vpack.c.b16 %v887, %v879
    %v1392 = vpack.c.b16 %v888, %v880
    %v1393 = vpack.c.b16 %v889, %v881
    %v1394 = vpack.c.b16 %v890, %v882
    %v1395 = vpack.c.b16 %v891, %v883
    %v1396 = vpack.c.b16 %v900, %v892
    %v1397 = vpack.c.b16 %v901, %v893
    %v1398 = vpack.c.b16 %v902, %v894
    %v1399 = vpack.c.b16 %v903, %v895
    %v1400 = vpack.c.b16 %v904, %v896
    %v1401 = vpack.c.b16 %v905, %v897
    %v1402 = vpack.c.b16 %v906, %v898
    %v1403 = vpack.c.b16 %v907, %v899
    %v1404 = vpack.c.b16 %v916, %v908
    %v1405 = vpack.c.b16 %v917, %v909
    %v1406 = vpack.c.b16 %v918, %v910
    %v1407 = vpack.c.b16 %v919, %v911
    %v1408 = vpack.c.b16 %v920, %v912
    %v1409 = vpack.c.b16 %v921, %v913
    %v1410 = vpack.c.b16 %v922, %v914
    %v1411 = vpack.c.b16 %v923, %v915
    %v1412 = vpack.c.b16 %v932, %v924
    %v1413 = vpack.c.b16 %v933, %v925
    %v1414 = vpack.c.b16 %v934, %v926
    %v1415 = vpack.c.b16 %v935, %v927
    %v1416 = vpack.c.b16 %v936, %v928
    %v1417 = vpack.c.b16 %v937, %v929
    %v1418 = vpack.c.b16 %v938, %v930
    %v1419 = vpack.c.b16 %v939, %v931
    %v1420 = vpack.c.b16 %v948, %v940
    %v1421 = vpack.c.b16 %v949, %v941
    %v1422 = vpack.c.b16 %v950, %v942
    %v1423 = vpack.c.b16 %v951, %v943
    %v1424 = vpack.c.b16 %v952, %v944
    %v1425 = vpack.c.b16 %v953, %v945
    %v1426 = vpack.c.b16 %v954, %v946
    %v1427 = vpack.c.b16 %v955, %v947
    %v1428 = vpack.c.b16 %v964, %v956
    %v1429 = vpack.c.b16 %v965, %v957
    %v1430 = vpack.c.b16 %v966, %v958
    %v1431 = vpack.c.b16 %v967, %v959
    %v1432 = vpack.c.b16 %v968, %v960
    %v1433 = vpack.c.b16 %v969, %v961
    %v1434 = vpack.c.b16 %v970, %v962
    %v1435 = vpack.c.b16 %v971, %v963
    %v1436 = vpack.c.b16 %v980, %v972
    %v1437 = vpack.c.b16 %v981, %v973
    %v1438 = vpack.c.b16 %v982, %v974
    %v1439 = vpack.c.b16 %v983, %v975
    %v1440 = vpack.c.b16 %v984, %v976
    %v1441 = vpack.c.b16 %v985, %v977
    %v1442 = vpack.c.b16 %v986, %v978
    %v1443 = vpack.c.b16 %v987, %v979
    %v1444 = vpack.c.b16 %v996, %v988
    %v1445 = vpack.c.b16 %v997, %v989
    %v1446 = vpack.c.b16 %v998, %v990
    %v1447 = vpack.c.b16 %v999, %v991
    %v1448 = vpack.c.b16 %v1000, %v992
    %v1449 = vpack.c.b16 %v1001, %v993
    %v1450 = vpack.c.b16 %v1002, %v994
    %v1451 = vpack.c.b16 %v1003, %v995
    %v1452 = vpack.c.b16 %v1012, %v1004
    %v1453 = vpack.c.b16 %v1013, %v1005
    %v1454 = vpack.c.b16 %v1014, %v1006
    %v1455 = vpack.c.b16 %v1015, %v1007
    %v1456 = vpack.c.b16 %v1016, %v1008
    %v1457 = vpack.c.b16 %v1017, %v1009
    %v1458 = vpack.c.b16 %v1018, %v1010
    %v1459 = vpack.c.b16 %v1019, %v1011
    %v1460 = vpack.c.b16 %v1028, %v1020
    %v1461 = vpack.c.b16 %v1029, %v1021
    %v1462 = vpack.c.b16 %v1030, %v1022
    %v1463 = vpack.c.b16 %v1031, %v1023
    %v1464 = vpack.c.b16 %v1032, %v1024
    %v1465 = vpack.c.b16 %v1033, %v1025
    %v1466 = vpack.c.b16 %v1034, %v1026
    %v1467 = vpack.c.b16 %v1035, %v1027
    %v1468 = vpack.c.b16 %v1044, %v1036
    %v1469 = vpack.c.b16 %v1045, %v1037
    %v1470 = vpack.c.b16 %v1046, %v1038
    %v1471 = vpack.c.b16 %v1047, %v1039
    %v1472 = vpack.c.b16 %v1048, %v1040
    %v1473 = vpack.c.b16 %v1049, %v1041
    %v1474 = vpack.c.b16 %v1050, %v1042
    %v1475 = vpack.c.b16 %v1051, %v1043
    %v1476 = vpack.c.b16 %v1060, %v1052
    %v1477 = vpack.c.b16 %v1061, %v1053
    %v1478 = vpack.c.b16 %v1062, %v1054
    %v1479 = vpack.c.b16 %v1063, %v1055
    %v1480 = vpack.c.b16 %v1064, %v1056
    %v1481 = vpack.c.b16 %v1065, %v1057
    %v1482 = vpack.c.b16 %v1066, %v1058
    %v1483 = vpack.c.b16 %v1067, %v1059
    %v1484 = vpack.c.b16 %v1076, %v1068
    %v1485 = vpack.c.b16 %v1077, %v1069
    %v1486 = vpack.c.b16 %v1078, %v1070
    %v1487 = vpack.c.b16 %v1079, %v1071
    %v1488 = vpack.c.b16 %v1080, %v1072
    %v1489 = vpack.c.b16 %v1081, %v1073
    %v1490 = vpack.c.b16 %v1082, %v1074
    %v1491 = vpack.c.b16 %v1083, %v1075
    %v1492 = vpack.c.b16 %v1092, %v1084
    %v1493 = vpack.c.b16 %v1093, %v1085
    %v1494 = vpack.c.b16 %v1094, %v1086
    %v1495 = vpack.c.b16 %v1095, %v1087
    %v1496 = vpack.c.b16 %v1096, %v1088
    %v1497 = vpack.c.b16 %v1097, %v1089
    %v1498 = vpack.c.b16 %v1098, %v1090
    %v1499 = vpack.c.b16 %v1099, %v1091
    %v1500 = vpack.c.b16 %v1108, %v1100
    %v1501 = vpack.c.b16 %v1109, %v1101
    %v1502 = vpack.c.b16 %v1110, %v1102
    %v1503 = vpack.c.b16 %v1111, %v1103
    %v1504 = vpack.c.b16 %v1112, %v1104
    %v1505 = vpack.c.b16 %v1113, %v1105
    %v1506 = vpack.c.b16 %v1114, %v1106
    %v1507 = vpack.c.b16 %v1115, %v1107
    %v1508 = vpack.c.b16 %v1124, %v1116
    %v1509 = vpack.c.b16 %v1125, %v1117
    %v1510 = vpack.c.b16 %v1126, %v1118
    %v1511 = vpack.c.b16 %v1127, %v1119
    %v1512 = vpack.c.b16 %v1128, %v1120
    %v1513 = vpack.c.b16 %v1129, %v1121
    %v1514 = vpack.c.b16 %v1130, %v1122
    %v1515 = vpack.c.b16 %v1131, %v1123
    %v1516 = vpack.c.b16 %v1140, %v1132
    %v1517 = vpack.c.b16 %v1141, %v1133
    %v1518 = vpack.c.b16 %v1142, %v1134
    %v1519 = vpack.c.b16 %v1143, %v1135
    %v1520 = vpack.c.b16 %v1144, %v1136
    %v1521 = vpack.c.b16 %v1145, %v1137
    %v1522 = vpack.c.b16 %v1146, %v1138
    %v1523 = vpack.c.b16 %v1147, %v1139
    %v1524 = vpack.c.b16 %v1156, %v1148
    %v1525 = vpack.c.b16 %v1157, %v1149
    %v1526 = vpack.c.b16 %v1158, %v1150
    %v1527 = vpack.c.b16 %v1159, %v1151
    %v1528 = vpack.c.b16 %v1160, %v1152
    %v1529 = vpack.c.b16 %v1161, %v1153
    %v1530 = vpack.c.b16 %v1162, %v1154
    %v1531 = vpack.c.b16 %v1163, %v1155
    %v1532 = vpack.c.b16 %v1172, %v1164
    %v1533 = vpack.c.b16 %v1173, %v1165
    %v1534 = vpack.c.b16 %v1174, %v1166
    %v1535 = vpack.c.b16 %v1175, %v1167
    %v1536 = vpack.c.b16 %v1176, %v1168
    %v1537 = vpack.c.b16 %v1177, %v1169
    %v1538 = vpack.c.b16 %v1178, %v1170
    %v1539 = vpack.c.b16 %v1179, %v1171
    %v1540 = vpack.c.b16 %v1188, %v1180
    %v1541 = vpack.c.b16 %v1189, %v1181
    %v1542 = vpack.c.b16 %v1190, %v1182
    %v1543 = vpack.c.b16 %v1191, %v1183
    %v1544 = vpack.c.b16 %v1192, %v1184
    %v1545 = vpack.c.b16 %v1193, %v1185
    %v1546 = vpack.c.b16 %v1194, %v1186
    %v1547 = vpack.c.b16 %v1195, %v1187
    %v1548 = vpack.c.b16 %v1204, %v1196
    %v1549 = vpack.c.b16 %v1205, %v1197
    %v1550 = vpack.c.b16 %v1206, %v1198
    %v1551 = vpack.c.b16 %v1207, %v1199
    %v1552 = vpack.c.b16 %v1208, %v1200
    %v1553 = vpack.c.b16 %v1209, %v1201
    %v1554 = vpack.c.b16 %v1210, %v1202
    %v1555 = vpack.c.b16 %v1211, %v1203
    %v1556 = vpack.c.b16 %v1220, %v1212
    %v1557 = vpack.c.b16 %v1221, %v1213
    %v1558 = vpack.c.b16 %v1222, %v1214
    %v1559 = vpack.c.b16 %v1223, %v1215
    %v1560 = vpack.c.b16 %v1224, %v1216
    %v1561 = vpack.c.b16 %v1225, %v1217
    %v1562 = vpack.c.b16 %v1226, %v1218
    %v1563 = vpack.c.b16 %v1227, %v1219
    %v1564 = vpack.c.b16 %v1236, %v1228
    %v1565 = vpack.c.b16 %v1237, %v1229
    %v1566 = vpack.c.b16 %v1238, %v1230
    %v1567 = vpack.c.b16 %v1239, %v1231
    %v1568 = vpack.c.b16 %v1240, %v1232
    %v1569 = vpack.c.b16 %v1241, %v1233
    %v1570 = vpack.c.b16 %v1242, %v1234
    %v1571 = vpack.c.b16 %v1243, %v1235
    %v1572 = vpack.c.b16 %v1252, %v1244
    %v1573 = vpack.c.b16 %v1253, %v1245
    %v1574 = vpack.c.b16 %v1254, %v1246
    %v1575 = vpack.c.b16 %v1255, %v1247
    %v1576 = vpack.c.b16 %v1256, %v1248
    %v1577 = vpack.c.b16 %v1257, %v1249
    %v1578 = vpack.c.b16 %v1258, %v1250
    %v1579 = vpack.c.b16 %v1259, %v1251
    %v1580 = vpack.c.b16 %v1268, %v1260
    %v1581 = vpack.c.b16 %v1269, %v1261
    %v1582 = vpack.c.b16 %v1270, %v1262
    %v1583 = vpack.c.b16 %v1271, %v1263
    %v1584 = vpack.c.b16 %v1272, %v1264
    %v1585 = vpack.c.b16 %v1273, %v1265
    %v1586 = vpack.c.b16 %v1274, %v1266
    %v1587 = vpack.c.b16 %v1275, %v1267
    %v1588 = vpack.c.b16 %v1284, %v1276
    %v1589 = vpack.c.b16 %v1285, %v1277
    %v1590 = vpack.c.b16 %v1286, %v1278
    %v1591 = vpack.c.b16 %v1287, %v1279
    %v1592 = vpack.c.b16 %v1288, %v1280
    %v1593 = vpack.c.b16 %v1289, %v1281
    %v1594 = vpack.c.b16 %v1290, %v1282
    %v1595 = vpack.c.b16 %v1291, %v1283
    %v1596 = vpack.c.b16 %v1300, %v1292
    %v1597 = vpack.c.b16 %v1301, %v1293
    %v1598 = vpack.c.b16 %v1302, %v1294
    %v1599 = vpack.c.b16 %v1303, %v1295
    %v1600 = vpack.c.b16 %v1304, %v1296
    %v1601 = vpack.c.b16 %v1305, %v1297
    %v1602 = vpack.c.b16 %v1306, %v1298
    %v1603 = vpack.c.b16 %v1307, %v1299
    %v1604 = vpack.c.b16 %v1316, %v1308
    %v1605 = vpack.c.b16 %v1317, %v1309
    %v1606 = vpack.c.b16 %v1318, %v1310
    %v1607 = vpack.c.b16 %v1319, %v1311
    %v1608 = vpack.c.b16 %v1320, %v1312
    %v1609 = vpack.c.b16 %v1321, %v1313
    %v1610 = vpack.c.b16 %v1322, %v1314
    %v1611 = vpack.c.b16 %v1323, %v1315
    %v1612 = vpack.c.b16 %v1332, %v1324
    %v1613 = vpack.c.b16 %v1333, %v1325
    %v1614 = vpack.c.b16 %v1334, %v1326
    %v1615 = vpack.c.b16 %v1335, %v1327
    %v1616 = vpack.c.b16 %v1336, %v1328
    %v1617 = vpack.c.b16 %v1337, %v1329
    %v1618 = vpack.c.b16 %v1338, %v1330
    %v1619 = vpack.c.b16 %v1339, %v1331
    %v1620 = vpack.c.b16 %v1348, %v1340
    %v1621 = vpack.c.b16 %v1349, %v1341
    %v1622 = vpack.c.b16 %v1350, %v1342
    %v1623 = vpack.c.b16 %v1351, %v1343
    %v1624 = vpack.c.b16 %v1352, %v1344
    %v1625 = vpack.c.b16 %v1353, %v1345
    %v1626 = vpack.c.b16 %v1354, %v1346
    %v1627 = vpack.c.b16 %v1355, %v1347
    %v1628 = vpack.c.b16 %v1364, %v1356
    %v1629 = vpack.c.b16 %v1365, %v1357
    %v1630 = vpack.c.b16 %v1366, %v1358
    %v1631 = vpack.c.b16 %v1367, %v1359
    %v1632 = vpack.c.b16 %v1368, %v1360
    %v1633 = vpack.c.b16 %v1369, %v1361
    %v1634 = vpack.c.b16 %v1370, %v1362
    %v1635 = vpack.c.b16 %v1371, %v1363
    %v1636 = vpack.c.b16 %v1380, %v1372
    %v1637 = vpack.c.b16 %v1381, %v1373
    %v1638 = vpack.c.b16 %v1382, %v1374
    %v1639 = vpack.c.b16 %v1383, %v1375
    %v1640 = vpack.c.b16 %v1384, %v1376
    %v1641 = vpack.c.b16 %v1385, %v1377
    %v1642 = vpack.c.b16 %v1386, %v1378
    %v1643 = vpack.c.b16 %v1387, %v1379
    %1900 = vmatpush.bf16.msra.mxu0 %v1444
    %1901 = vmatpush.bf16.msra.mxu0 %v1436
    %1902 = vmatpush.bf16.msra.mxu0 %v1428
    %1903 = vmatpush.bf16.msra.mxu0 %v1420
    %1904 = vmatpush.bf16.msra.mxu0 %v1412
    %1905 = vmatpush.bf16.msra.mxu0 %v1404
    %1906 = vmatpush.bf16.msra.mxu0 %v1396
    %1907 = vmatpush.bf16.msra.mxu0 %v1388
    %1908 = vmatmul.bf16.gmra.mxu0 %v342
    %v1909 = vpop.f32.mrf.mxu0
    %v1910 = vadd.f32 %v604, %v1909
    %v1911 = vpop.f32.mrf.mxu0
    %1912 = vdwg.mxu0
    %1913 = vmatpush.bf16.msra.mxu0 %v1508
    %1914 = vmatpush.bf16.msra.mxu0 %v1500
    %1915 = vmatpush.bf16.msra.mxu0 %v1492
    %1916 = vmatpush.bf16.msra.mxu0 %v1484
    %1917 = vmatpush.bf16.msra.mxu0 %v1476
    %1918 = vmatpush.bf16.msra.mxu0 %v1468
    %1919 = vmatpush.bf16.msra.mxu0 %v1460
    %1920 = vmatpush.bf16.msra.mxu0 %v1452
    %1921 = vmatmul.bf16.gmra.mxu0 %v343
    %v1922 = vpop.f32.mrf.mxu0
    %v1923 = vadd.f32 %v1910, %v1922
    %v1924 = vpop.f32.mrf.mxu0
    %1925 = vdwg.mxu0
    %1926 = vmatpush.bf16.msra.mxu0 %v1572
    %1927 = vmatpush.bf16.msra.mxu0 %v1564
    %1928 = vmatpush.bf16.msra.mxu0 %v1556
    %1929 = vmatpush.bf16.msra.mxu0 %v1548
    %1930 = vmatpush.bf16.msra.mxu0 %v1540
    %1931 = vmatpush.bf16.msra.mxu0 %v1532
    %1932 = vmatpush.bf16.msra.mxu0 %v1524
    %1933 = vmatpush.bf16.msra.mxu0 %v1516
    %1934 = vmatmul.bf16.gmra.mxu0 %v344
    %v1935 = vpop.f32.mrf.mxu0
    %v1936 = vadd.f32 %v1923, %v1935
    %v1937 = vpop.f32.mrf.mxu0
    %1938 = vdwg.mxu0
    %1939 = vmatpush.bf16.msra.mxu0 %v1636
    %1940 = vmatpush.bf16.msra.mxu0 %v1628
    %1941 = vmatpush.bf16.msra.mxu0 %v1620
    %1942 = vmatpush.bf16.msra.mxu0 %v1612
    %1943 = vmatpush.bf16.msra.mxu0 %v1604
    %1944 = vmatpush.bf16.msra.mxu0 %v1596
    %1945 = vmatpush.bf16.msra.mxu0 %v1588
    %1946 = vmatpush.bf16.msra.mxu0 %v1580
    %1947 = vmatmul.bf16.gmra.mxu0 %v345
    %v1948 = vpop.f32.mrf.mxu0
    %v1949 = vadd.f32 %v1936, %v1948
    %v1950 = vpop.f32.mrf.mxu0
    %1951 = vdwg.mxu0
    %1952 = vmatpush.bf16.msra.mxu0 %v1445
    %1953 = vmatpush.bf16.msra.mxu0 %v1437
    %1954 = vmatpush.bf16.msra.mxu0 %v1429
    %1955 = vmatpush.bf16.msra.mxu0 %v1421
    %1956 = vmatpush.bf16.msra.mxu0 %v1413
    %1957 = vmatpush.bf16.msra.mxu0 %v1405
    %1958 = vmatpush.bf16.msra.mxu0 %v1397
    %1959 = vmatpush.bf16.msra.mxu0 %v1389
    %1960 = vmatmul.bf16.gmra.mxu0 %v342
    %v1961 = vpop.f32.mrf.mxu0
    %v1962 = vadd.f32 %v605, %v1961
    %v1963 = vpop.f32.mrf.mxu0
    %1964 = vdwg.mxu0
    %1965 = vmatpush.bf16.msra.mxu0 %v1509
    %1966 = vmatpush.bf16.msra.mxu0 %v1501
    %1967 = vmatpush.bf16.msra.mxu0 %v1493
    %1968 = vmatpush.bf16.msra.mxu0 %v1485
    %1969 = vmatpush.bf16.msra.mxu0 %v1477
    %1970 = vmatpush.bf16.msra.mxu0 %v1469
    %1971 = vmatpush.bf16.msra.mxu0 %v1461
    %1972 = vmatpush.bf16.msra.mxu0 %v1453
    %1973 = vmatmul.bf16.gmra.mxu0 %v343
    %v1974 = vpop.f32.mrf.mxu0
    %v1975 = vadd.f32 %v1962, %v1974
    %v1976 = vpop.f32.mrf.mxu0
    %1977 = vdwg.mxu0
    %1978 = vmatpush.bf16.msra.mxu0 %v1573
    %1979 = vmatpush.bf16.msra.mxu0 %v1565
    %1980 = vmatpush.bf16.msra.mxu0 %v1557
    %1981 = vmatpush.bf16.msra.mxu0 %v1549
    %1982 = vmatpush.bf16.msra.mxu0 %v1541
    %1983 = vmatpush.bf16.msra.mxu0 %v1533
    %1984 = vmatpush.bf16.msra.mxu0 %v1525
    %1985 = vmatpush.bf16.msra.mxu0 %v1517
    %1986 = vmatmul.bf16.gmra.mxu0 %v344
    %v1987 = vpop.f32.mrf.mxu0
    %v1988 = vadd.f32 %v1975, %v1987
    %v1989 = vpop.f32.mrf.mxu0
    %1990 = vdwg.mxu0
    %1991 = vmatpush.bf16.msra.mxu0 %v1637
    %1992 = vmatpush.bf16.msra.mxu0 %v1629
    %1993 = vmatpush.bf16.msra.mxu0 %v1621
    %1994 = vmatpush.bf16.msra.mxu0 %v1613
    %1995 = vmatpush.bf16.msra.mxu0 %v1605
    %1996 = vmatpush.bf16.msra.mxu0 %v1597
    %1997 = vmatpush.bf16.msra.mxu0 %v1589
    %1998 = vmatpush.bf16.msra.mxu0 %v1581
    %1999 = vmatmul.bf16.gmra.mxu0 %v345
    %v2000 = vpop.f32.mrf.mxu0
    %v2001 = vadd.f32 %v1988, %v2000
    %v2002 = vpop.f32.mrf.mxu0
    %2003 = vdwg.mxu0
    %2004 = vmatpush.bf16.msra.mxu0 %v1446
    %2005 = vmatpush.bf16.msra.mxu0 %v1438
    %2006 = vmatpush.bf16.msra.mxu0 %v1430
    %2007 = vmatpush.bf16.msra.mxu0 %v1422
    %2008 = vmatpush.bf16.msra.mxu0 %v1414
    %2009 = vmatpush.bf16.msra.mxu0 %v1406
    %2010 = vmatpush.bf16.msra.mxu0 %v1398
    %2011 = vmatpush.bf16.msra.mxu0 %v1390
    %2012 = vmatmul.bf16.gmra.mxu0 %v342
    %v2013 = vpop.f32.mrf.mxu0
    %v2014 = vadd.f32 %v606, %v2013
    %v2015 = vpop.f32.mrf.mxu0
    %2016 = vdwg.mxu0
    %2017 = vmatpush.bf16.msra.mxu0 %v1510
    %2018 = vmatpush.bf16.msra.mxu0 %v1502
    %2019 = vmatpush.bf16.msra.mxu0 %v1494
    %2020 = vmatpush.bf16.msra.mxu0 %v1486
    %2021 = vmatpush.bf16.msra.mxu0 %v1478
    %2022 = vmatpush.bf16.msra.mxu0 %v1470
    %2023 = vmatpush.bf16.msra.mxu0 %v1462
    %2024 = vmatpush.bf16.msra.mxu0 %v1454
    %2025 = vmatmul.bf16.gmra.mxu0 %v343
    %v2026 = vpop.f32.mrf.mxu0
    %v2027 = vadd.f32 %v2014, %v2026
    %v2028 = vpop.f32.mrf.mxu0
    %2029 = vdwg.mxu0
    %2030 = vmatpush.bf16.msra.mxu0 %v1574
    %2031 = vmatpush.bf16.msra.mxu0 %v1566
    %2032 = vmatpush.bf16.msra.mxu0 %v1558
    %2033 = vmatpush.bf16.msra.mxu0 %v1550
    %2034 = vmatpush.bf16.msra.mxu0 %v1542
    %2035 = vmatpush.bf16.msra.mxu0 %v1534
    %2036 = vmatpush.bf16.msra.mxu0 %v1526
    %2037 = vmatpush.bf16.msra.mxu0 %v1518
    %2038 = vmatmul.bf16.gmra.mxu0 %v344
    %v2039 = vpop.f32.mrf.mxu0
    %v2040 = vadd.f32 %v2027, %v2039
    %v2041 = vpop.f32.mrf.mxu0
    %2042 = vdwg.mxu0
    %2043 = vmatpush.bf16.msra.mxu0 %v1638
    %2044 = vmatpush.bf16.msra.mxu0 %v1630
    %2045 = vmatpush.bf16.msra.mxu0 %v1622
    %2046 = vmatpush.bf16.msra.mxu0 %v1614
    %2047 = vmatpush.bf16.msra.mxu0 %v1606
    %2048 = vmatpush.bf16.msra.mxu0 %v1598
    %2049 = vmatpush.bf16.msra.mxu0 %v1590
    %2050 = vmatpush.bf16.msra.mxu0 %v1582
    %2051 = vmatmul.bf16.gmra.mxu0 %v345
    %v2052 = vpop.f32.mrf.mxu0
    %v2053 = vadd.f32 %v2040, %v2052
    %v2054 = vpop.f32.mrf.mxu0
    %2055 = vdwg.mxu0
    %2056 = vmatpush.bf16.msra.mxu0 %v1447
    %2057 = vmatpush.bf16.msra.mxu0 %v1439
    %2058 = vmatpush.bf16.msra.mxu0 %v1431
    %2059 = vmatpush.bf16.msra.mxu0 %v1423
    %2060 = vmatpush.bf16.msra.mxu0 %v1415
    %2061 = vmatpush.bf16.msra.mxu0 %v1407
    %2062 = vmatpush.bf16.msra.mxu0 %v1399
    %2063 = vmatpush.bf16.msra.mxu0 %v1391
    %2064 = vmatmul.bf16.gmra.mxu0 %v342
    %v2065 = vpop.f32.mrf.mxu0
    %v2066 = vadd.f32 %v607, %v2065
    %v2067 = vpop.f32.mrf.mxu0
    %2068 = vdwg.mxu0
    %2069 = vmatpush.bf16.msra.mxu0 %v1511
    %2070 = vmatpush.bf16.msra.mxu0 %v1503
    %2071 = vmatpush.bf16.msra.mxu0 %v1495
    %2072 = vmatpush.bf16.msra.mxu0 %v1487
    %2073 = vmatpush.bf16.msra.mxu0 %v1479
    %2074 = vmatpush.bf16.msra.mxu0 %v1471
    %2075 = vmatpush.bf16.msra.mxu0 %v1463
    %2076 = vmatpush.bf16.msra.mxu0 %v1455
    %2077 = vmatmul.bf16.gmra.mxu0 %v343
    %v2078 = vpop.f32.mrf.mxu0
    %v2079 = vadd.f32 %v2066, %v2078
    %v2080 = vpop.f32.mrf.mxu0
    %2081 = vdwg.mxu0
    %2082 = vmatpush.bf16.msra.mxu0 %v1575
    %2083 = vmatpush.bf16.msra.mxu0 %v1567
    %2084 = vmatpush.bf16.msra.mxu0 %v1559
    %2085 = vmatpush.bf16.msra.mxu0 %v1551
    %2086 = vmatpush.bf16.msra.mxu0 %v1543
    %2087 = vmatpush.bf16.msra.mxu0 %v1535
    %2088 = vmatpush.bf16.msra.mxu0 %v1527
    %2089 = vmatpush.bf16.msra.mxu0 %v1519
    %2090 = vmatmul.bf16.gmra.mxu0 %v344
    %v2091 = vpop.f32.mrf.mxu0
    %v2092 = vadd.f32 %v2079, %v2091
    %v2093 = vpop.f32.mrf.mxu0
    %2094 = vdwg.mxu0
    %2095 = vmatpush.bf16.msra.mxu0 %v1639
    %2096 = vmatpush.bf16.msra.mxu0 %v1631
    %2097 = vmatpush.bf16.msra.mxu0 %v1623
    %2098 = vmatpush.bf16.msra.mxu0 %v1615
    %2099 = vmatpush.bf16.msra.mxu0 %v1607
    %2100 = vmatpush.bf16.msra.mxu0 %v1599
    %2101 = vmatpush.bf16.msra.mxu0 %v1591
    %2102 = vmatpush.bf16.msra.mxu0 %v1583
    %2103 = vmatmul.bf16.gmra.mxu0 %v345
    %v2104 = vpop.f32.mrf.mxu0
    %v2105 = vadd.f32 %v2092, %v2104
    %v2106 = vpop.f32.mrf.mxu0
    %2107 = vdwg.mxu0
    %2108 = vmatpush.bf16.msra.mxu0 %v1448
    %2109 = vmatpush.bf16.msra.mxu0 %v1440
    %2110 = vmatpush.bf16.msra.mxu0 %v1432
    %2111 = vmatpush.bf16.msra.mxu0 %v1424
    %2112 = vmatpush.bf16.msra.mxu0 %v1416
    %2113 = vmatpush.bf16.msra.mxu0 %v1408
    %2114 = vmatpush.bf16.msra.mxu0 %v1400
    %2115 = vmatpush.bf16.msra.mxu0 %v1392
    %2116 = vmatmul.bf16.gmra.mxu0 %v342
    %v2117 = vpop.f32.mrf.mxu0
    %v2118 = vadd.f32 %v608, %v2117
    %v2119 = vpop.f32.mrf.mxu0
    %2120 = vdwg.mxu0
    %2121 = vmatpush.bf16.msra.mxu0 %v1512
    %2122 = vmatpush.bf16.msra.mxu0 %v1504
    %2123 = vmatpush.bf16.msra.mxu0 %v1496
    %2124 = vmatpush.bf16.msra.mxu0 %v1488
    %2125 = vmatpush.bf16.msra.mxu0 %v1480
    %2126 = vmatpush.bf16.msra.mxu0 %v1472
    %2127 = vmatpush.bf16.msra.mxu0 %v1464
    %2128 = vmatpush.bf16.msra.mxu0 %v1456
    %2129 = vmatmul.bf16.gmra.mxu0 %v343
    %v2130 = vpop.f32.mrf.mxu0
    %v2131 = vadd.f32 %v2118, %v2130
    %v2132 = vpop.f32.mrf.mxu0
    %2133 = vdwg.mxu0
    %2134 = vmatpush.bf16.msra.mxu0 %v1576
    %2135 = vmatpush.bf16.msra.mxu0 %v1568
    %2136 = vmatpush.bf16.msra.mxu0 %v1560
    %2137 = vmatpush.bf16.msra.mxu0 %v1552
    %2138 = vmatpush.bf16.msra.mxu0 %v1544
    %2139 = vmatpush.bf16.msra.mxu0 %v1536
    %2140 = vmatpush.bf16.msra.mxu0 %v1528
    %2141 = vmatpush.bf16.msra.mxu0 %v1520
    %2142 = vmatmul.bf16.gmra.mxu0 %v344
    %v2143 = vpop.f32.mrf.mxu0
    %v2144 = vadd.f32 %v2131, %v2143
    %v2145 = vpop.f32.mrf.mxu0
    %2146 = vdwg.mxu0
    %2147 = vmatpush.bf16.msra.mxu0 %v1640
    %2148 = vmatpush.bf16.msra.mxu0 %v1632
    %2149 = vmatpush.bf16.msra.mxu0 %v1624
    %2150 = vmatpush.bf16.msra.mxu0 %v1616
    %2151 = vmatpush.bf16.msra.mxu0 %v1608
    %2152 = vmatpush.bf16.msra.mxu0 %v1600
    %2153 = vmatpush.bf16.msra.mxu0 %v1592
    %2154 = vmatpush.bf16.msra.mxu0 %v1584
    %2155 = vmatmul.bf16.gmra.mxu0 %v345
    %v2156 = vpop.f32.mrf.mxu0
    %v2157 = vadd.f32 %v2144, %v2156
    %v2158 = vpop.f32.mrf.mxu0
    %2159 = vdwg.mxu0
    %2160 = vmatpush.bf16.msra.mxu0 %v1449
    %2161 = vmatpush.bf16.msra.mxu0 %v1441
    %2162 = vmatpush.bf16.msra.mxu0 %v1433
    %2163 = vmatpush.bf16.msra.mxu0 %v1425
    %2164 = vmatpush.bf16.msra.mxu0 %v1417
    %2165 = vmatpush.bf16.msra.mxu0 %v1409
    %2166 = vmatpush.bf16.msra.mxu0 %v1401
    %2167 = vmatpush.bf16.msra.mxu0 %v1393
    %2168 = vmatmul.bf16.gmra.mxu0 %v342
    %v2169 = vpop.f32.mrf.mxu0
    %v2170 = vadd.f32 %v609, %v2169
    %v2171 = vpop.f32.mrf.mxu0
    %2172 = vdwg.mxu0
    %2173 = vmatpush.bf16.msra.mxu0 %v1513
    %2174 = vmatpush.bf16.msra.mxu0 %v1505
    %2175 = vmatpush.bf16.msra.mxu0 %v1497
    %2176 = vmatpush.bf16.msra.mxu0 %v1489
    %2177 = vmatpush.bf16.msra.mxu0 %v1481
    %2178 = vmatpush.bf16.msra.mxu0 %v1473
    %2179 = vmatpush.bf16.msra.mxu0 %v1465
    %2180 = vmatpush.bf16.msra.mxu0 %v1457
    %2181 = vmatmul.bf16.gmra.mxu0 %v343
    %v2182 = vpop.f32.mrf.mxu0
    %v2183 = vadd.f32 %v2170, %v2182
    %v2184 = vpop.f32.mrf.mxu0
    %2185 = vdwg.mxu0
    %2186 = vmatpush.bf16.msra.mxu0 %v1577
    %2187 = vmatpush.bf16.msra.mxu0 %v1569
    %2188 = vmatpush.bf16.msra.mxu0 %v1561
    %2189 = vmatpush.bf16.msra.mxu0 %v1553
    %2190 = vmatpush.bf16.msra.mxu0 %v1545
    %2191 = vmatpush.bf16.msra.mxu0 %v1537
    %2192 = vmatpush.bf16.msra.mxu0 %v1529
    %2193 = vmatpush.bf16.msra.mxu0 %v1521
    %2194 = vmatmul.bf16.gmra.mxu0 %v344
    %v2195 = vpop.f32.mrf.mxu0
    %v2196 = vadd.f32 %v2183, %v2195
    %v2197 = vpop.f32.mrf.mxu0
    %2198 = vdwg.mxu0
    %2199 = vmatpush.bf16.msra.mxu0 %v1641
    %2200 = vmatpush.bf16.msra.mxu0 %v1633
    %2201 = vmatpush.bf16.msra.mxu0 %v1625
    %2202 = vmatpush.bf16.msra.mxu0 %v1617
    %2203 = vmatpush.bf16.msra.mxu0 %v1609
    %2204 = vmatpush.bf16.msra.mxu0 %v1601
    %2205 = vmatpush.bf16.msra.mxu0 %v1593
    %2206 = vmatpush.bf16.msra.mxu0 %v1585
    %2207 = vmatmul.bf16.gmra.mxu0 %v345
    %v2208 = vpop.f32.mrf.mxu0
    %v2209 = vadd.f32 %v2196, %v2208
    %v2210 = vpop.f32.mrf.mxu0
    %2211 = vdwg.mxu0
    %2212 = vmatpush.bf16.msra.mxu0 %v1450
    %2213 = vmatpush.bf16.msra.mxu0 %v1442
    %2214 = vmatpush.bf16.msra.mxu0 %v1434
    %2215 = vmatpush.bf16.msra.mxu0 %v1426
    %2216 = vmatpush.bf16.msra.mxu0 %v1418
    %2217 = vmatpush.bf16.msra.mxu0 %v1410
    %2218 = vmatpush.bf16.msra.mxu0 %v1402
    %2219 = vmatpush.bf16.msra.mxu0 %v1394
    %2220 = vmatmul.bf16.gmra.mxu0 %v342
    %v2221 = vpop.f32.mrf.mxu0
    %v2222 = vadd.f32 %v610, %v2221
    %v2223 = vpop.f32.mrf.mxu0
    %2224 = vdwg.mxu0
    %2225 = vmatpush.bf16.msra.mxu0 %v1514
    %2226 = vmatpush.bf16.msra.mxu0 %v1506
    %2227 = vmatpush.bf16.msra.mxu0 %v1498
    %2228 = vmatpush.bf16.msra.mxu0 %v1490
    %2229 = vmatpush.bf16.msra.mxu0 %v1482
    %2230 = vmatpush.bf16.msra.mxu0 %v1474
    %2231 = vmatpush.bf16.msra.mxu0 %v1466
    %2232 = vmatpush.bf16.msra.mxu0 %v1458
    %2233 = vmatmul.bf16.gmra.mxu0 %v343
    %v2234 = vpop.f32.mrf.mxu0
    %v2235 = vadd.f32 %v2222, %v2234
    %v2236 = vpop.f32.mrf.mxu0
    %2237 = vdwg.mxu0
    %2238 = vmatpush.bf16.msra.mxu0 %v1578
    %2239 = vmatpush.bf16.msra.mxu0 %v1570
    %2240 = vmatpush.bf16.msra.mxu0 %v1562
    %2241 = vmatpush.bf16.msra.mxu0 %v1554
    %2242 = vmatpush.bf16.msra.mxu0 %v1546
    %2243 = vmatpush.bf16.msra.mxu0 %v1538
    %2244 = vmatpush.bf16.msra.mxu0 %v1530
    %2245 = vmatpush.bf16.msra.mxu0 %v1522
    %2246 = vmatmul.bf16.gmra.mxu0 %v344
    %v2247 = vpop.f32.mrf.mxu0
    %v2248 = vadd.f32 %v2235, %v2247
    %v2249 = vpop.f32.mrf.mxu0
    %2250 = vdwg.mxu0
    %2251 = vmatpush.bf16.msra.mxu0 %v1642
    %2252 = vmatpush.bf16.msra.mxu0 %v1634
    %2253 = vmatpush.bf16.msra.mxu0 %v1626
    %2254 = vmatpush.bf16.msra.mxu0 %v1618
    %2255 = vmatpush.bf16.msra.mxu0 %v1610
    %2256 = vmatpush.bf16.msra.mxu0 %v1602
    %2257 = vmatpush.bf16.msra.mxu0 %v1594
    %2258 = vmatpush.bf16.msra.mxu0 %v1586
    %2259 = vmatmul.bf16.gmra.mxu0 %v345
    %v2260 = vpop.f32.mrf.mxu0
    %v2261 = vadd.f32 %v2248, %v2260
    %v2262 = vpop.f32.mrf.mxu0
    %2263 = vdwg.mxu0
    %2264 = vmatpush.bf16.msra.mxu0 %v1451
    %2265 = vmatpush.bf16.msra.mxu0 %v1443
    %2266 = vmatpush.bf16.msra.mxu0 %v1435
    %2267 = vmatpush.bf16.msra.mxu0 %v1427
    %2268 = vmatpush.bf16.msra.mxu0 %v1419
    %2269 = vmatpush.bf16.msra.mxu0 %v1411
    %2270 = vmatpush.bf16.msra.mxu0 %v1403
    %2271 = vmatpush.bf16.msra.mxu0 %v1395
    %2272 = vmatmul.bf16.gmra.mxu0 %v342
    %v2273 = vpop.f32.mrf.mxu0
    %v2274 = vadd.f32 %v611, %v2273
    %v2275 = vpop.f32.mrf.mxu0
    %2276 = vdwg.mxu0
    %2277 = vmatpush.bf16.msra.mxu0 %v1515
    %2278 = vmatpush.bf16.msra.mxu0 %v1507
    %2279 = vmatpush.bf16.msra.mxu0 %v1499
    %2280 = vmatpush.bf16.msra.mxu0 %v1491
    %2281 = vmatpush.bf16.msra.mxu0 %v1483
    %2282 = vmatpush.bf16.msra.mxu0 %v1475
    %2283 = vmatpush.bf16.msra.mxu0 %v1467
    %2284 = vmatpush.bf16.msra.mxu0 %v1459
    %2285 = vmatmul.bf16.gmra.mxu0 %v343
    %v2286 = vpop.f32.mrf.mxu0
    %v2287 = vadd.f32 %v2274, %v2286
    %v2288 = vpop.f32.mrf.mxu0
    %2289 = vdwg.mxu0
    %2290 = vmatpush.bf16.msra.mxu0 %v1579
    %2291 = vmatpush.bf16.msra.mxu0 %v1571
    %2292 = vmatpush.bf16.msra.mxu0 %v1563
    %2293 = vmatpush.bf16.msra.mxu0 %v1555
    %2294 = vmatpush.bf16.msra.mxu0 %v1547
    %2295 = vmatpush.bf16.msra.mxu0 %v1539
    %2296 = vmatpush.bf16.msra.mxu0 %v1531
    %2297 = vmatpush.bf16.msra.mxu0 %v1523
    %2298 = vmatmul.bf16.gmra.mxu0 %v344
    %v2299 = vpop.f32.mrf.mxu0
    %v2300 = vadd.f32 %v2287, %v2299
    %v2301 = vpop.f32.mrf.mxu0
    %2302 = vdwg.mxu0
    %2303 = vmatpush.bf16.msra.mxu0 %v1643
    %2304 = vmatpush.bf16.msra.mxu0 %v1635
    %2305 = vmatpush.bf16.msra.mxu0 %v1627
    %2306 = vmatpush.bf16.msra.mxu0 %v1619
    %2307 = vmatpush.bf16.msra.mxu0 %v1611
    %2308 = vmatpush.bf16.msra.mxu0 %v1603
    %2309 = vmatpush.bf16.msra.mxu0 %v1595
    %2310 = vmatpush.bf16.msra.mxu0 %v1587
    %2311 = vmatmul.bf16.gmra.mxu0 %v345
    %v2312 = vpop.f32.mrf.mxu0
    %v2313 = vadd.f32 %v2300, %v2312
    %v2314 = vpop.f32.mrf.mxu0
    %2315 = vdwg.mxu0
    %v2316 = vlaneseq
    %v2317 = vand.u32 %v2316, 127
    %v2318 = vadd.s32 %v2317, 128
    %v2319 = vadd.s32 %v2317, 256
    %v2320 = vadd.s32 %v2317, 384
    %v2321 = vadd.s32 %v2317, 512
    %v2322 = vadd.s32 %v2317, 640
    %v2323 = vadd.s32 %v2317, 768
    %v2324 = vadd.s32 %v2317, 896
    %vm2325 = vcmp.lt.s32.totalorder %v2317, 1000
    %vm2326 = vcmp.lt.s32.totalorder %v2318, 1000
    %vm2327 = vcmp.lt.s32.totalorder %v2319, 1000
    %vm2328 = vcmp.lt.s32.totalorder %v2320, 1000
    %vm2329 = vcmp.lt.s32.totalorder %v2321, 1000
    %vm2330 = vcmp.lt.s32.totalorder %v2322, 1000
    %vm2331 = vcmp.lt.s32.totalorder %v2323, 1000
    %vm2332 = vcmp.lt.s32.totalorder %v2324, 1000
    %v2333 = vsel %vm2325, %v1949, inf
    %v2334 = vsel %vm2326, %v2001, inf
    %v2335 = vsel %vm2327, %v2053, inf
    %v2336 = vsel %vm2328, %v2105, inf
    %v2337 = vsel %vm2329, %v2157, inf
    %v2338 = vsel %vm2330, %v2209, inf
    %v2339 = vsel %vm2331, %v2261, inf
    %v2340 = vsel %vm2332, %v2313, inf
    %v2341 = vmin.f32 %v2333, %v2337
    %v2342 = vmin.f32 %v2334, %v2338
    %v2343 = vmin.f32 %v2335, %v2339
    %v2344 = vmin.f32 %v2336, %v2340
    %v2345 = vmin.f32 %v2341, %v2342
    %v2346 = vmin.f32 %v2343, %v2344
    %v2347 = vmin.f32 %v2345, %v2346
    %2348 = vmin.xlane.f32.xlu0 %v2347
    %v2349 = vpop.xlane.xlu0 %2348
    %v2350 = vrot.slane %v2349, 4
    %v2351 = vmin.f32 %v2349, %v2350
    %v2352 = vrot.slane %v2351, 2
    %v2353 = vmin.f32 %v2351, %v2352
    %v2354 = vrot.slane %v2353, 1
    %v2355 = vmin.f32 %v2353, %v2354
    %s2356 = vtos %v2355
    %v2357 = vsel %vm2325, %v1949, -inf
    %v2358 = vsel %vm2326, %v2001, -inf
    %v2359 = vsel %vm2327, %v2053, -inf
    %v2360 = vsel %vm2328, %v2105, -inf
    %v2361 = vsel %vm2329, %v2157, -inf
    %v2362 = vsel %vm2330, %v2209, -inf
    %v2363 = vsel %vm2331, %v2261, -inf
    %v2364 = vsel %vm2332, %v2313, -inf
    %v2365 = vmax.f32 %v2357, %v2361
    %v2366 = vmax.f32 %v2358, %v2362
    %v2367 = vmax.f32 %v2359, %v2363
    %v2368 = vmax.f32 %v2360, %v2364
    %v2369 = vmax.f32 %v2365, %v2366
    %v2370 = vmax.f32 %v2367, %v2368
    %v2371 = vmax.f32 %v2369, %v2370
    %2372 = vmax.xlane.f32.xlu0 %v2371
    %v2373 = vpop.xlane.xlu0 %2372
    %v2374 = vrot.slane %v2373, 4
    %v2375 = vmax.f32 %v2373, %v2374
    %v2376 = vrot.slane %v2375, 2
    %v2377 = vmax.f32 %v2375, %v2376
    %v2378 = vrot.slane %v2377, 1
    %v2379 = vmax.f32 %v2377, %v2378
    %s2380 = vtos %v2379
    %v2381 = vstv %s2356
    %2382 = vst [vmem:[%s6] sm:$0xff] %v2381
    %v2383 = vstv %s2380
    %2384 = vst [vmem:[%s7] sm:$0xff] %v2383
    // Predicated region
    $region34: #{ftws_forward.2} parent=1 // pred_check
      _
    $region35: #{ftws_forward.2} parent=1 // pred_check_branch
      %2386 = sbr.rel (0) target = $region37
    $region36: #{ftws_forward.2} parent=1 // pred_region
      _
    $region37: #{ftws_forward.2} parent=1 // pred_fallthru
      _
    // Predicated region
    $region38: #{ftws_forward.2} parent=1 // pred_check
      _
    $region39: #{ftws_forward.2} parent=1 // pred_check_branch
      %2388 = sbr.rel (0) target = $region41
    $region40: #{ftws_forward.2} parent=1 // pred_region
      _
    $region41: #{ftws_forward.2} parent=1 // pred_fallthru
      _
    // Predicated region
    $region42: #{ftws_forward.2} parent=1 // pred_check
      _
    $region43: #{ftws_forward.2} parent=1 // pred_check_branch
      %2390 = sbr.rel (0) target = $region45
    $region44: #{ftws_forward.2} parent=1 // pred_region
      _
    $region45: #{ftws_forward.2} parent=1 // pred_fallthru
      _
    // Predicated region
    $region46: #{ftws_forward.2} parent=1 // pred_check
      _
    $region47: #{ftws_forward.2} parent=1 // pred_check_branch
      %2392 = sbr.rel (0) target = $region49
    $region48: #{ftws_forward.2} parent=1 // pred_region
      _
    $region49: #{ftws_forward.2} parent=1 // pred_fallthru
      _
    %2393 = vsyncpa [#allocation3], 1
    %2394 = vsyncpa [#allocation5], 1

// kernel: ftws_forward.3
$region0: #{ftws_forward.3}
  #allocation0 [shape = 'u32[]', space=smem, size = 0x4, offset = 0x4, fixed_abs, tag = 'smem constant byte address 0x4 - core index']
  #allocation1 [shape = 'u32[72,128]{1,0:T(1,128)}', space=vmem, size = 0x9000, scoped, tag = 'internal scratch']
  %s0 = inlined_call_operand.vmem [shape: f32[2], index: 0, kind: input, shape index: {}]
  %s1 = inlined_call_operand.vmem [shape: f32[8,8], index: 1, kind: input, shape index: {}]
  %s2 = inlined_call_operand.vmem [shape: bf16[8,128], index: 2, kind: input, shape index: {}]
  %s3 = inlined_call_operand.hbm [shape: bf16[128,512], index: 3, kind: input, shape index: {}]
  %s4 = inlined_call_operand.vmem [shape: f32[1,512], index: 4, kind: input, shape index: {}]
  %s5 = inlined_call_operand.hbm [shape: bf16[512,1024], index: 5, kind: input, shape index: {}]
  %s6 = inlined_call_operand.vmem [shape: f32[1,1024], index: 6, kind: input, shape index: {}]
  %s7 = inlined_call_operand.hbm [shape: f32[4,1000], index: 7, kind: output, shape index: {}]
  %s8 = sld [smem:[#allocation0]]
  $region50: #{ftws_forward.3} parent=0
    _
  %s10 = ssub.s32 1, %s8
  %s11 = scalar_select 0, %s10, %s8
  $region1: #{ftws_forward.3} parent=0
    #allocation2 [shape = 'u8[512]{0}', space=smem, size = 0x200, scoped, tag = 'input window, operand 0, single buffered']
    #allocation3 [shape = 's32[1]{0}', space=sflag, size = 0x4, scoped, tag = 'scoped memory for ftws_forward.3']
    #allocation4 [shape = 's32[1]{0}', space=sflag, size = 0x4, scoped, tag = 'scoped memory for ftws_forward.3']
    #allocation5 [shape = 's32[1]{0}', space=sflag, size = 0x4, scoped, tag = 'scoped memory for ftws_forward.3']
    #allocation6 [shape = 'u8[131072]{0}', space=vmem, size = 0x20000, scoped, tag = 'input window, operand 3, single buffered']
    #allocation7 [shape = 'u8[1048576]{0}', space=vmem, size = 0x100000, scoped, tag = 'input window, operand 5, single buffered']
    #allocation8 [shape = 's32[1]{0}', space=sflag, size = 0x4, scoped, tag = 'scoped memory for ftws_forward.3']
    #allocation9 [shape = 'u8[32768]{0}', space=vmem, size = 0x8000, scoped, tag = 'output window, operand 0, single buffered']
    %12 = vsyncpa [#allocation5], 0
    %13 = vsyncpa [#allocation3], 0
    %14 = vsyncpa [#allocation8], 0
    %15 = vsyncpa [#allocation4], 0
    // Predicated region
    $region2: #{ftws_forward.3} parent=1 // pred_check
      _
    $region3: #{ftws_forward.3} parent=1 // pred_check_branch
      %17 = sbr.rel (0) target = $region5
    $region4: #{ftws_forward.3} parent=1 // pred_region
      %19 = vsyncadd [#allocation5], 0
      %s21 = sshll.u32 %s0, 4
      %s22 = int_to_ptr.vmem [resolvable:$true] %s21
      %24 = dma.vmem_to_smem %s22, 16, [#allocation2], [#allocation5]
    $region5: #{ftws_forward.3} parent=1 // pred_fallthru
      _
    // Predicated region
    $region6: #{ftws_forward.3} parent=1 // pred_check
      _
    $region7: #{ftws_forward.3} parent=1 // pred_check_branch
      %26 = sbr.rel (0) target = $region9
    $region8: #{ftws_forward.3} parent=1 // pred_region
      _
    $region9: #{ftws_forward.3} parent=1 // pred_fallthru
      _
    // Predicated region
    $region10: #{ftws_forward.3} parent=1 // pred_check
      _
    $region11: #{ftws_forward.3} parent=1 // pred_check_branch
      %28 = sbr.rel (0) target = $region13
    $region12: #{ftws_forward.3} parent=1 // pred_region
      _
    $region13: #{ftws_forward.3} parent=1 // pred_fallthru
      _
    // Predicated region
    $region14: #{ftws_forward.3} parent=1 // pred_check
      _
    $region15: #{ftws_forward.3} parent=1 // pred_check_branch
      %30 = sbr.rel (0) target = $region17
    $region16: #{ftws_forward.3} parent=1 // pred_region
      %32 = vsyncadd [#allocation3], 0
      %s33 = sshll.u32 %s3, 4
      %s34 = int_to_ptr.hbm [resolvable:$true] %s33
      %s35 = sshll.u32 [#allocation6], 4
      %s36 = int_to_ptr.vmem [resolvable:$true] %s35
      %41 = dma.hbm_to_vmem [thread:$0]  %s34, 4096, %s36, [#allocation3], 256, 256, 16
    $region17: #{ftws_forward.3} parent=1 // pred_fallthru
      _
    // Predicated region
    $region18: #{ftws_forward.3} parent=1 // pred_check
      _
    $region19: #{ftws_forward.3} parent=1 // pred_check_branch
      %43 = sbr.rel (0) target = $region21
    $region20: #{ftws_forward.3} parent=1 // pred_region
      _
    $region21: #{ftws_forward.3} parent=1 // pred_fallthru
      _
    // Predicated region
    $region22: #{ftws_forward.3} parent=1 // pred_check
      _
    $region23: #{ftws_forward.3} parent=1 // pred_check_branch
      %45 = sbr.rel (0) target = $region25
    $region24: #{ftws_forward.3} parent=1 // pred_region
      %47 = vsyncadd [#allocation8], 0
      %s48 = sshll.u32 %s5, 4
      %s49 = int_to_ptr.hbm [resolvable:$true] %s48
      %s50 = sshll.u32 [#allocation7], 4
      %s51 = int_to_ptr.vmem [resolvable:$true] %s50
      %56 = dma.hbm_to_vmem [thread:$0]  %s49, 32768, %s51, [#allocation8], 512, 512, 32
    $region25: #{ftws_forward.3} parent=1 // pred_fallthru
      _
    // Predicated region
    $region26: #{ftws_forward.3} parent=1 // pred_check
      _
    $region27: #{ftws_forward.3} parent=1 // pred_check_branch
      %58 = sbr.rel (0) target = $region29
    $region28: #{ftws_forward.3} parent=1 // pred_region
      _
    $region29: #{ftws_forward.3} parent=1 // pred_fallthru
      _
    // Predicated region
    $region30: #{ftws_forward.3} parent=1 // pred_check
      _
    $region31: #{ftws_forward.3} parent=1 // pred_check_branch
      %60 = sbr.rel (0) target = $region33
    $region32: #{ftws_forward.3} parent=1 // pred_region
      %62 = dma.done [#allocation5], 16
    $region33: #{ftws_forward.3} parent=1 // pred_fallthru
      _
    // Predicated region
    $region34: #{ftws_forward.3} parent=1 // pred_check
      _
    $region35: #{ftws_forward.3} parent=1 // pred_check_branch
      %64 = sbr.rel (0) target = $region37
    $region36: #{ftws_forward.3} parent=1 // pred_region
      %66 = dma.done [#allocation3], 4096
    $region37: #{ftws_forward.3} parent=1 // pred_fallthru
      _
    // Predicated region
    $region38: #{ftws_forward.3} parent=1 // pred_check
      _
    $region39: #{ftws_forward.3} parent=1 // pred_check_branch
      %68 = sbr.rel (0) target = $region41
    $region40: #{ftws_forward.3} parent=1 // pred_region
      %70 = dma.done [#allocation8], 32768
    $region41: #{ftws_forward.3} parent=1 // pred_fallthru
      _
    %71 = sfence
    %v73 = vld [vmem:[%s1] sm:$0xff]
    %v74 = vpack.c.bf16 %v73, %v73
    %v75 = vld [vmem:[%s2] sm:$0xf]
    %vm76 = vcmask 64512
    %v78 = vsel %vm76, %v74, 0
    %vm80 = vcmask 1043456
    %v82 = vsel %vm80, %v75, 0
    %84 = vmatpush.bf16.msra.mxu0 0
    %85 = vmatpush.bf16.msra.mxu0 0
    %86 = vmatpush.bf16.msra.mxu0 0
    %87 = vmatpush.bf16.msra.mxu0 0
    %88 = vmatpush.bf16.msra.mxu0 0
    %89 = vmatpush.bf16.msra.mxu0 0
    %90 = vmatpush.bf16.msra.mxu0 0
    %91 = vmatpush.bf16.msra.mxu0 %v82
    %92 = vmatmul.bf16.gmra.mxu0 %v78
    %v93 = vpop.f32.mrf.mxu0
    %v94 = vadd.f32 0.0, %v93
    %v95 = vpop.f32.mrf.mxu0
    %96 = vdwg.mxu0
    %v97 = vmax.f32 %v94, 0.0
    %v98 = vpack.c.bf16 %v97, %v97
    %v99 = vld [vmem:[#allocation6] sm:$0xff]
    %v100 = vld [vmem:[#allocation6 + $0x8] sm:$0xff]
    %v101 = vld [vmem:[#allocation6 + $0x10] sm:$0xff]
    %v102 = vld [vmem:[#allocation6 + $0x18] sm:$0xff]
    %v103 = vld [vmem:[#allocation6 + $0x20] sm:$0xff]
    %v104 = vld [vmem:[#allocation6 + $0x28] sm:$0xff]
    %v105 = vld [vmem:[#allocation6 + $0x30] sm:$0xff]
    %v106 = vld [vmem:[#allocation6 + $0x38] sm:$0xff]
    %v107 = vld [vmem:[#allocation6 + $0x40] sm:$0xff]
    %v108 = vld [vmem:[#allocation6 + $0x48] sm:$0xff]
    %v109 = vld [vmem:[#allocation6 + $0x50] sm:$0xff]
    %v110 = vld [vmem:[#allocation6 + $0x58] sm:$0xff]
    %v111 = vld [vmem:[#allocation6 + $0x60] sm:$0xff]
    %v112 = vld [vmem:[#allocation6 + $0x68] sm:$0xff]
    %v113 = vld [vmem:[#allocation6 + $0x70] sm:$0xff]
    %v114 = vld [vmem:[#allocation6 + $0x78] sm:$0xff]
    %v115 = vld [vmem:[#allocation6 + $0x80] sm:$0xff]
    %v116 = vld [vmem:[#allocation6 + $0x88] sm:$0xff]
    %v117 = vld [vmem:[#allocation6 + $0x90] sm:$0xff]
    %v118 = vld [vmem:[#allocation6 + $0x98] sm:$0xff]
    %v119 = vld [vmem:[#allocation6 + $0xa0] sm:$0xff]
    %v120 = vld [vmem:[#allocation6 + $0xa8] sm:$0xff]
    %v121 = vld [vmem:[#allocation6 + $0xb0] sm:$0xff]
    %v122 = vld [vmem:[#allocation6 + $0xb8] sm:$0xff]
    %v123 = vld [vmem:[#allocation6 + $0xc0] sm:$0xff]
    %v124 = vld [vmem:[#allocation6 + $0xc8] sm:$0xff]
    %v125 = vld [vmem:[#allocation6 + $0xd0] sm:$0xff]
    %v126 = vld [vmem:[#allocation6 + $0xd8] sm:$0xff]
    %v127 = vld [vmem:[#allocation6 + $0xe0] sm:$0xff]
    %v128 = vld [vmem:[#allocation6 + $0xe8] sm:$0xff]
    %v129 = vld [vmem:[#allocation6 + $0xf0] sm:$0xff]
    %v130 = vld [vmem:[#allocation6 + $0xf8] sm:$0xff]
    %v131 = vld [vmem:[%s4] sm:$0xf]
    %v133 = vperm.slane %v131, 0
    %v134 = vperm.slane %v131, 1
    %v135 = vperm.slane %v131, 2
    %v136 = vperm.slane %v131, 3
    %v173 = vunpack.c.l.b16 %v99
    %v174 = vunpack.c.h.b16 %v99
    %v175 = vunpack.c.l.b16 %v100
    %v176 = vunpack.c.h.b16 %v100
    %v177 = vunpack.c.l.b16 %v101
    %v178 = vunpack.c.h.b16 %v101
    %v179 = vunpack.c.l.b16 %v102
    %v180 = vunpack.c.h.b16 %v102
    %v181 = vunpack.c.l.b16 %v103
    %v182 = vunpack.c.h.b16 %v103
    %v183 = vunpack.c.l.b16 %v104
    %v184 = vunpack.c.h.b16 %v104
    %v185 = vunpack.c.l.b16 %v105
    %v186 = vunpack.c.h.b16 %v105
    %v187 = vunpack.c.l.b16 %v106
    %v188 = vunpack.c.h.b16 %v106
    %v189 = vunpack.c.l.b16 %v107
    %v190 = vunpack.c.h.b16 %v107
    %v191 = vunpack.c.l.b16 %v108
    %v192 = vunpack.c.h.b16 %v108
    %v193 = vunpack.c.l.b16 %v109
    %v194 = vunpack.c.h.b16 %v109
    %v195 = vunpack.c.l.b16 %v110
    %v196 = vunpack.c.h.b16 %v110
    %v197 = vunpack.c.l.b16 %v111
    %v198 = vunpack.c.h.b16 %v111
    %v199 = vunpack.c.l.b16 %v112
    %v200 = vunpack.c.h.b16 %v112
    %v201 = vunpack.c.l.b16 %v113
    %v202 = vunpack.c.h.b16 %v113
    %v203 = vunpack.c.l.b16 %v114
    %v204 = vunpack.c.h.b16 %v114
    %v205 = vunpack.c.l.b16 %v115
    %v206 = vunpack.c.h.b16 %v115
    %v207 = vunpack.c.l.b16 %v116
    %v208 = vunpack.c.h.b16 %v116
    %v209 = vunpack.c.l.b16 %v117
    %v210 = vunpack.c.h.b16 %v117
    %v211 = vunpack.c.l.b16 %v118
    %v212 = vunpack.c.h.b16 %v118
    %v213 = vunpack.c.l.b16 %v119
    %v214 = vunpack.c.h.b16 %v119
    %v215 = vunpack.c.l.b16 %v120
    %v216 = vunpack.c.h.b16 %v120
    %v217 = vunpack.c.l.b16 %v121
    %v218 = vunpack.c.h.b16 %v121
    %v219 = vunpack.c.l.b16 %v122
    %v220 = vunpack.c.h.b16 %v122
    %v221 = vunpack.c.l.b16 %v123
    %v222 = vunpack.c.h.b16 %v123
    %v223 = vunpack.c.l.b16 %v124
    %v224 = vunpack.c.h.b16 %v124
    %v225 = vunpack.c.l.b16 %v125
    %v226 = vunpack.c.h.b16 %v125
    %v227 = vunpack.c.l.b16 %v126
    %v228 = vunpack.c.h.b16 %v126
    %v229 = vunpack.c.l.b16 %v127
    %v230 = vunpack.c.h.b16 %v127
    %v231 = vunpack.c.l.b16 %v128
    %v232 = vunpack.c.h.b16 %v128
    %v233 = vunpack.c.l.b16 %v129
    %v234 = vunpack.c.h.b16 %v129
    %v235 = vunpack.c.l.b16 %v130
    %v236 = vunpack.c.h.b16 %v130
    %v237 = vpack.c.b16 %v177, %v173
    %v238 = vpack.c.b16 %v178, %v174
    %v239 = vpack.c.b16 %v179, %v175
    %v240 = vpack.c.b16 %v180, %v176
    %v241 = vpack.c.b16 %v185, %v181
    %v242 = vpack.c.b16 %v186, %v182
    %v243 = vpack.c.b16 %v187, %v183
    %v244 = vpack.c.b16 %v188, %v184
    %v245 = vpack.c.b16 %v193, %v189
    %v246 = vpack.c.b16 %v194, %v190
    %v247 = vpack.c.b16 %v195, %v191
    %v248 = vpack.c.b16 %v196, %v192
    %v249 = vpack.c.b16 %v201, %v197
    %v250 = vpack.c.b16 %v202, %v198
    %v251 = vpack.c.b16 %v203, %v199
    %v252 = vpack.c.b16 %v204, %v200
    %v253 = vpack.c.b16 %v209, %v205
    %v254 = vpack.c.b16 %v210, %v206
    %v255 = vpack.c.b16 %v211, %v207
    %v256 = vpack.c.b16 %v212, %v208
    %v257 = vpack.c.b16 %v217, %v213
    %v258 = vpack.c.b16 %v218, %v214
    %v259 = vpack.c.b16 %v219, %v215
    %v260 = vpack.c.b16 %v220, %v216
    %v261 = vpack.c.b16 %v225, %v221
    %v262 = vpack.c.b16 %v226, %v222
    %v263 = vpack.c.b16 %v227, %v223
    %v264 = vpack.c.b16 %v228, %v224
    %v265 = vpack.c.b16 %v233, %v229
    %v266 = vpack.c.b16 %v234, %v230
    %v267 = vpack.c.b16 %v235, %v231
    %v268 = vpack.c.b16 %v236, %v232
    %301 = vmatpush.bf16.msra.mxu0 %v265
    %302 = vmatpush.bf16.msra.mxu0 %v261
    %303 = vmatpush.bf16.msra.mxu0 %v257
    %304 = vmatpush.bf16.msra.mxu0 %v253
    %305 = vmatpush.bf16.msra.mxu0 %v249
    %306 = vmatpush.bf16.msra.mxu0 %v245
    %307 = vmatpush.bf16.msra.mxu0 %v241
    %308 = vmatpush.bf16.msra.mxu0 %v237
    %309 = vmatmul.bf16.gmra.mxu0 %v98
    %v310 = vpop.f32.mrf.mxu0
    %v311 = vadd.f32 %v133, %v310
    %v312 = vpop.f32.mrf.mxu0
    %313 = vdwg.mxu0
    %314 = vmatpush.bf16.msra.mxu0 %v266
    %315 = vmatpush.bf16.msra.mxu0 %v262
    %316 = vmatpush.bf16.msra.mxu0 %v258
    %317 = vmatpush.bf16.msra.mxu0 %v254
    %318 = vmatpush.bf16.msra.mxu0 %v250
    %319 = vmatpush.bf16.msra.mxu0 %v246
    %320 = vmatpush.bf16.msra.mxu0 %v242
    %321 = vmatpush.bf16.msra.mxu0 %v238
    %322 = vmatmul.bf16.gmra.mxu0 %v98
    %v323 = vpop.f32.mrf.mxu0
    %v324 = vadd.f32 %v134, %v323
    %v325 = vpop.f32.mrf.mxu0
    %326 = vdwg.mxu0
    %327 = vmatpush.bf16.msra.mxu0 %v267
    %328 = vmatpush.bf16.msra.mxu0 %v263
    %329 = vmatpush.bf16.msra.mxu0 %v259
    %330 = vmatpush.bf16.msra.mxu0 %v255
    %331 = vmatpush.bf16.msra.mxu0 %v251
    %332 = vmatpush.bf16.msra.mxu0 %v247
    %333 = vmatpush.bf16.msra.mxu0 %v243
    %334 = vmatpush.bf16.msra.mxu0 %v239
    %335 = vmatmul.bf16.gmra.mxu0 %v98
    %v336 = vpop.f32.mrf.mxu0
    %v337 = vadd.f32 %v135, %v336
    %v338 = vpop.f32.mrf.mxu0
    %339 = vdwg.mxu0
    %340 = vmatpush.bf16.msra.mxu0 %v268
    %341 = vmatpush.bf16.msra.mxu0 %v264
    %342 = vmatpush.bf16.msra.mxu0 %v260
    %343 = vmatpush.bf16.msra.mxu0 %v256
    %344 = vmatpush.bf16.msra.mxu0 %v252
    %345 = vmatpush.bf16.msra.mxu0 %v248
    %346 = vmatpush.bf16.msra.mxu0 %v244
    %347 = vmatpush.bf16.msra.mxu0 %v240
    %348 = vmatmul.bf16.gmra.mxu0 %v98
    %v349 = vpop.f32.mrf.mxu0
    %v350 = vadd.f32 %v136, %v349
    %v351 = vpop.f32.mrf.mxu0
    %352 = vdwg.mxu0
    %v353 = vmax.f32 %v311, 0.0
    %v354 = vmax.f32 %v324, 0.0
    %v355 = vmax.f32 %v337, 0.0
    %v356 = vmax.f32 %v350, 0.0
    %v357 = vpack.c.bf16 %v353, %v353
    %v358 = vpack.c.bf16 %v354, %v354
    %v359 = vpack.c.bf16 %v355, %v355
    %v360 = vpack.c.bf16 %v356, %v356
    %v361 = vld [vmem:[#allocation7] sm:$0xff]
    %v362 = vld [vmem:[#allocation7 + $0x8] sm:$0xff]
    %v363 = vld [vmem:[#allocation7 + $0x10] sm:$0xff]
    %v364 = vld [vmem:[#allocation7 + $0x18] sm:$0xff]
    %v365 = vld [vmem:[#allocation7 + $0x20] sm:$0xff]
    %v366 = vld [vmem:[#allocation7 + $0x28] sm:$0xff]
    %v367 = vld [vmem:[#allocation7 + $0x30] sm:$0xff]
    %v368 = vld [vmem:[#allocation7 + $0x38] sm:$0xff]
    %v369 = vld [vmem:[#allocation7 + $0x40] sm:$0xff]
    %v370 = vld [vmem:[#allocation7 + $0x48] sm:$0xff]
    %v371 = vld [vmem:[#allocation7 + $0x50] sm:$0xff]
    %v372 = vld [vmem:[#allocation7 + $0x58] sm:$0xff]
    %v373 = vld [vmem:[#allocation7 + $0x60] sm:$0xff]
    %v374 = vld [vmem:[#allocation7 + $0x68] sm:$0xff]
    %v375 = vld [vmem:[#allocation7 + $0x70] sm:$0xff]
    %v376 = vld [vmem:[#allocation7 + $0x78] sm:$0xff]
    %v377 = vld [vmem:[#allocation7 + $0x80] sm:$0xff]
    %v378 = vld [vmem:[#allocation7 + $0x88] sm:$0xff]
    %v379 = vld [vmem:[#allocation7 + $0x90] sm:$0xff]
    %v380 = vld [vmem:[#allocation7 + $0x98] sm:$0xff]
    %v381 = vld [vmem:[#allocation7 + $0xa0] sm:$0xff]
    %v382 = vld [vmem:[#allocation7 + $0xa8] sm:$0xff]
    %v383 = vld [vmem:[#allocation7 + $0xb0] sm:$0xff]
    %v384 = vld [vmem:[#allocation7 + $0xb8] sm:$0xff]
    %v385 = vld [vmem:[#allocation7 + $0xc0] sm:$0xff]
    %v386 = vld [vmem:[#allocation7 + $0xc8] sm:$0xff]
    %v387 = vld [vmem:[#allocation7 + $0xd0] sm:$0xff]
    %v388 = vld [vmem:[#allocation7 + $0xd8] sm:$0xff]
    %v389 = vld [vmem:[#allocation7 + $0xe0] sm:$0xff]
    %v390 = vld [vmem:[#allocation7 + $0xe8] sm:$0xff]
    %v391 = vld [vmem:[#allocation7 + $0xf0] sm:$0xff]
    %v392 = vld [vmem:[#allocation7 + $0xf8] sm:$0xff]
    %v393 = vld [vmem:[#allocation7 + $0x100] sm:$0xff]
    %v394 = vld [vmem:[#allocation7 + $0x108] sm:$0xff]
    %v395 = vld [vmem:[#allocation7 + $0x110] sm:$0xff]
    %v396 = vld [vmem:[#allocation7 + $0x118] sm:$0xff]
    %v397 = vld [vmem:[#allocation7 + $0x120] sm:$0xff]
    %v398 = vld [vmem:[#allocation7 + $0x128] sm:$0xff]
    %v399 = vld [vmem:[#allocation7 + $0x130] sm:$0xff]
    %v400 = vld [vmem:[#allocation7 + $0x138] sm:$0xff]
    %v401 = vld [vmem:[#allocation7 + $0x140] sm:$0xff]
    %v402 = vld [vmem:[#allocation7 + $0x148] sm:$0xff]
    %v403 = vld [vmem:[#allocation7 + $0x150] sm:$0xff]
    %v404 = vld [vmem:[#allocation7 + $0x158] sm:$0xff]
    %v405 = vld [vmem:[#allocation7 + $0x160] sm:$0xff]
    %v406 = vld [vmem:[#allocation7 + $0x168] sm:$0xff]
    %v407 = vld [vmem:[#allocation7 + $0x170] sm:$0xff]
    %v408 = vld [vmem:[#allocation7 + $0x178] sm:$0xff]
    %v409 = vld [vmem:[#allocation7 + $0x180] sm:$0xff]
    %v410 = vld [vmem:[#allocation7 + $0x188] sm:$0xff]
    %v411 = vld [vmem:[#allocation7 + $0x190] sm:$0xff]
    %v412 = vld [vmem:[#allocation7 + $0x198] sm:$0xff]
    %v413 = vld [vmem:[#allocation7 + $0x1a0] sm:$0xff]
    %v414 = vld [vmem:[#allocation7 + $0x1a8] sm:$0xff]
    %v415 = vld [vmem:[#allocation7 + $0x1b0] sm:$0xff]
    %v416 = vld [vmem:[#allocation7 + $0x1b8] sm:$0xff]
    %v417 = vld [vmem:[#allocation7 + $0x1c0] sm:$0xff]
    %v418 = vld [vmem:[#allocation7 + $0x1c8] sm:$0xff]
    %v419 = vld [vmem:[#allocation7 + $0x1d0] sm:$0xff]
    %v420 = vld [vmem:[#allocation7 + $0x1d8] sm:$0xff]
    %v421 = vld [vmem:[#allocation7 + $0x1e0] sm:$0xff]
    %v422 = vld [vmem:[#allocation7 + $0x1e8] sm:$0xff]
    %v423 = vld [vmem:[#allocation7 + $0x1f0] sm:$0xff]
    %v424 = vld [vmem:[#allocation7 + $0x1f8] sm:$0xff]
    %v425 = vld [vmem:[#allocation7 + $0x200] sm:$0xff]
    %v426 = vld [vmem:[#allocation7 + $0x208] sm:$0xff]
    %v427 = vld [vmem:[#allocation7 + $0x210] sm:$0xff]
    %v428 = vld [vmem:[#allocation7 + $0x218] sm:$0xff]
    %v429 = vld [vmem:[#allocation7 + $0x220] sm:$0xff]
    %v430 = vld [vmem:[#allocation7 + $0x228] sm:$0xff]
    %v431 = vld [vmem:[#allocation7 + $0x230] sm:$0xff]
    %v432 = vld [vmem:[#allocation7 + $0x238] sm:$0xff]
    %v433 = vld [vmem:[#allocation7 + $0x240] sm:$0xff]
    %v434 = vld [vmem:[#allocation7 + $0x248] sm:$0xff]
    %v435 = vld [vmem:[#allocation7 + $0x250] sm:$0xff]
    %v436 = vld [vmem:[#allocation7 + $0x258] sm:$0xff]
    %v437 = vld [vmem:[#allocation7 + $0x260] sm:$0xff]
    %v438 = vld [vmem:[#allocation7 + $0x268] sm:$0xff]
    %v439 = vld [vmem:[#allocation7 + $0x270] sm:$0xff]
    %v440 = vld [vmem:[#allocation7 + $0x278] sm:$0xff]
    %v441 = vld [vmem:[#allocation7 + $0x280] sm:$0xff]
    %v442 = vld [vmem:[#allocation7 + $0x288] sm:$0xff]
    %v443 = vld [vmem:[#allocation7 + $0x290] sm:$0xff]
    %v444 = vld [vmem:[#allocation7 + $0x298] sm:$0xff]
    %v445 = vld [vmem:[#allocation7 + $0x2a0] sm:$0xff]
    %v446 = vld [vmem:[#allocation7 + $0x2a8] sm:$0xff]
    %v447 = vld [vmem:[#allocation7 + $0x2b0] sm:$0xff]
    %v448 = vld [vmem:[#allocation7 + $0x2b8] sm:$0xff]
    %v449 = vld [vmem:[#allocation7 + $0x2c0] sm:$0xff]
    %v450 = vld [vmem:[#allocation7 + $0x2c8] sm:$0xff]
    %v451 = vld [vmem:[#allocation7 + $0x2d0] sm:$0xff]
    %v452 = vld [vmem:[#allocation7 + $0x2d8] sm:$0xff]
    %v453 = vld [vmem:[#allocation7 + $0x2e0] sm:$0xff]
    %v454 = vld [vmem:[#allocation7 + $0x2e8] sm:$0xff]
    %v455 = vld [vmem:[#allocation7 + $0x2f0] sm:$0xff]
    %v456 = vld [vmem:[#allocation7 + $0x2f8] sm:$0xff]
    %v457 = vld [vmem:[#allocation7 + $0x300] sm:$0xff]
    %v458 = vld [vmem:[#allocation7 + $0x308] sm:$0xff]
    %v459 = vld [vmem:[#allocation7 + $0x310] sm:$0xff]
    %v460 = vld [vmem:[#allocation7 + $0x318] sm:$0xff]
    %v461 = vld [vmem:[#allocation7 + $0x320] sm:$0xff]
    %v462 = vld [vmem:[#allocation7 + $0x328] sm:$0xff]
    %v463 = vld [vmem:[#allocation7 + $0x330] sm:$0xff]
    %v464 = vld [vmem:[#allocation7 + $0x338] sm:$0xff]
    %v465 = vld [vmem:[#allocation7 + $0x340] sm:$0xff]
    %v466 = vld [vmem:[#allocation7 + $0x348] sm:$0xff]
    %v467 = vld [vmem:[#allocation7 + $0x350] sm:$0xff]
    %v468 = vld [vmem:[#allocation7 + $0x358] sm:$0xff]
    %v469 = vld [vmem:[#allocation7 + $0x360] sm:$0xff]
    %v470 = vld [vmem:[#allocation7 + $0x368] sm:$0xff]
    %v471 = vld [vmem:[#allocation7 + $0x370] sm:$0xff]
    %v472 = vld [vmem:[#allocation7 + $0x378] sm:$0xff]
    %v473 = vld [vmem:[#allocation7 + $0x380] sm:$0xff]
    %v474 = vld [vmem:[#allocation7 + $0x388] sm:$0xff]
    %v475 = vld [vmem:[#allocation7 + $0x390] sm:$0xff]
    %v476 = vld [vmem:[#allocation7 + $0x398] sm:$0xff]
    %v477 = vld [vmem:[#allocation7 + $0x3a0] sm:$0xff]
    %v478 = vld [vmem:[#allocation7 + $0x3a8] sm:$0xff]
    %v479 = vld [vmem:[#allocation7 + $0x3b0] sm:$0xff]
    %v480 = vld [vmem:[#allocation7 + $0x3b8] sm:$0xff]
    %v481 = vld [vmem:[#allocation7 + $0x3c0] sm:$0xff]
    %v482 = vld [vmem:[#allocation7 + $0x3c8] sm:$0xff]
    %v483 = vld [vmem:[#allocation7 + $0x3d0] sm:$0xff]
    %v484 = vld [vmem:[#allocation7 + $0x3d8] sm:$0xff]
    %v485 = vld [vmem:[#allocation7 + $0x3e0] sm:$0xff]
    %v486 = vld [vmem:[#allocation7 + $0x3e8] sm:$0xff]
    %v487 = vld [vmem:[#allocation7 + $0x3f0] sm:$0xff]
    %v488 = vld [vmem:[#allocation7 + $0x3f8] sm:$0xff]
    %v489 = vld [vmem:[#allocation7 + $0x400] sm:$0xff]
    %v490 = vld [vmem:[#allocation7 + $0x408] sm:$0xff]
    %v491 = vld [vmem:[#allocation7 + $0x410] sm:$0xff]
    %v492 = vld [vmem:[#allocation7 + $0x418] sm:$0xff]
    %v493 = vld [vmem:[#allocation7 + $0x420] sm:$0xff]
    %v494 = vld [vmem:[#allocation7 + $0x428] sm:$0xff]
    %v495 = vld [vmem:[#allocation7 + $0x430] sm:$0xff]
    %v496 = vld [vmem:[#allocation7 + $0x438] sm:$0xff]
    %v497 = vld [vmem:[#allocation7 + $0x440] sm:$0xff]
    %v498 = vld [vmem:[#allocation7 + $0x448] sm:$0xff]
    %v499 = vld [vmem:[#allocation7 + $0x450] sm:$0xff]
    %v500 = vld [vmem:[#allocation7 + $0x458] sm:$0xff]
    %v501 = vld [vmem:[#allocation7 + $0x460] sm:$0xff]
    %v502 = vld [vmem:[#allocation7 + $0x468] sm:$0xff]
    %v503 = vld [vmem:[#allocation7 + $0x470] sm:$0xff]
    %v504 = vld [vmem:[#allocation7 + $0x478] sm:$0xff]
    %v505 = vld [vmem:[#allocation7 + $0x480] sm:$0xff]
    %v506 = vld [vmem:[#allocation7 + $0x488] sm:$0xff]
    %v507 = vld [vmem:[#allocation7 + $0x490] sm:$0xff]
    %v508 = vld [vmem:[#allocation7 + $0x498] sm:$0xff]
    %v509 = vld [vmem:[#allocation7 + $0x4a0] sm:$0xff]
    %v510 = vld [vmem:[#allocation7 + $0x4a8] sm:$0xff]
    %v511 = vld [vmem:[#allocation7 + $0x4b0] sm:$0xff]
    %v512 = vld [vmem:[#allocation7 + $0x4b8] sm:$0xff]
    %v513 = vld [vmem:[#allocation7 + $0x4c0] sm:$0xff]
    %v514 = vld [vmem:[#allocation7 + $0x4c8] sm:$0xff]
    %v515 = vld [vmem:[#allocation7 + $0x4d0] sm:$0xff]
    %v516 = vld [vmem:[#allocation7 + $0x4d8] sm:$0xff]
    %v517 = vld [vmem:[#allocation7 + $0x4e0] sm:$0xff]
    %v518 = vld [vmem:[#allocation7 + $0x4e8] sm:$0xff]
    %v519 = vld [vmem:[#allocation7 + $0x4f0] sm:$0xff]
    %v520 = vld [vmem:[#allocation7 + $0x4f8] sm:$0xff]
    %v521 = vld [vmem:[#allocation7 + $0x500] sm:$0xff]
    %v522 = vld [vmem:[#allocation7 + $0x508] sm:$0xff]
    %v523 = vld [vmem:[#allocation7 + $0x510] sm:$0xff]
    %v524 = vld [vmem:[#allocation7 + $0x518] sm:$0xff]
    %v525 = vld [vmem:[#allocation7 + $0x520] sm:$0xff]
    %v526 = vld [vmem:[#allocation7 + $0x528] sm:$0xff]
    %v527 = vld [vmem:[#allocation7 + $0x530] sm:$0xff]
    %v528 = vld [vmem:[#allocation7 + $0x538] sm:$0xff]
    %v529 = vld [vmem:[#allocation7 + $0x540] sm:$0xff]
    %v530 = vld [vmem:[#allocation7 + $0x548] sm:$0xff]
    %v531 = vld [vmem:[#allocation7 + $0x550] sm:$0xff]
    %v532 = vld [vmem:[#allocation7 + $0x558] sm:$0xff]
    %v533 = vld [vmem:[#allocation7 + $0x560] sm:$0xff]
    %v534 = vld [vmem:[#allocation7 + $0x568] sm:$0xff]
    %v535 = vld [vmem:[#allocation7 + $0x570] sm:$0xff]
    %v536 = vld [vmem:[#allocation7 + $0x578] sm:$0xff]
    %v537 = vld [vmem:[#allocation7 + $0x580] sm:$0xff]
    %v538 = vld [vmem:[#allocation7 + $0x588] sm:$0xff]
    %v539 = vld [vmem:[#allocation7 + $0x590] sm:$0xff]
    %v540 = vld [vmem:[#allocation7 + $0x598] sm:$0xff]
    %v541 = vld [vmem:[#allocation7 + $0x5a0] sm:$0xff]
    %v542 = vld [vmem:[#allocation7 + $0x5a8] sm:$0xff]
    %v543 = vld [vmem:[#allocation7 + $0x5b0] sm:$0xff]
    %v544 = vld [vmem:[#allocation7 + $0x5b8] sm:$0xff]
    %v545 = vld [vmem:[#allocation7 + $0x5c0] sm:$0xff]
    %v546 = vld [vmem:[#allocation7 + $0x5c8] sm:$0xff]
    %v547 = vld [vmem:[#allocation7 + $0x5d0] sm:$0xff]
    %v548 = vld [vmem:[#allocation7 + $0x5d8] sm:$0xff]
    %v549 = vld [vmem:[#allocation7 + $0x5e0] sm:$0xff]
    %v550 = vld [vmem:[#allocation7 + $0x5e8] sm:$0xff]
    %v551 = vld [vmem:[#allocation7 + $0x5f0] sm:$0xff]
    %v552 = vld [vmem:[#allocation7 + $0x5f8] sm:$0xff]
    %v553 = vld [vmem:[#allocation7 + $0x600] sm:$0xff]
    %v554 = vld [vmem:[#allocation7 + $0x608] sm:$0xff]
    %v555 = vld [vmem:[#allocation7 + $0x610] sm:$0xff]
    %v556 = vld [vmem:[#allocation7 + $0x618] sm:$0xff]
    %v557 = vld [vmem:[#allocation7 + $0x620] sm:$0xff]
    %v558 = vld [vmem:[#allocation7 + $0x628] sm:$0xff]
    %v559 = vld [vmem:[#allocation7 + $0x630] sm:$0xff]
    %v560 = vld [vmem:[#allocation7 + $0x638] sm:$0xff]
    %v561 = vld [vmem:[#allocation7 + $0x640] sm:$0xff]
    %v562 = vld [vmem:[#allocation7 + $0x648] sm:$0xff]
    %v563 = vld [vmem:[#allocation7 + $0x650] sm:$0xff]
    %v564 = vld [vmem:[#allocation7 + $0x658] sm:$0xff]
    %v565 = vld [vmem:[#allocation7 + $0x660] sm:$0xff]
    %v566 = vld [vmem:[#allocation7 + $0x668] sm:$0xff]
    %v567 = vld [vmem:[#allocation7 + $0x670] sm:$0xff]
    %v568 = vld [vmem:[#allocation7 + $0x678] sm:$0xff]
    %v569 = vld [vmem:[#allocation7 + $0x680] sm:$0xff]
    %v570 = vld [vmem:[#allocation7 + $0x688] sm:$0xff]
    %v571 = vld [vmem:[#allocation7 + $0x690] sm:$0xff]
    %v572 = vld [vmem:[#allocation7 + $0x698] sm:$0xff]
    %v573 = vld [vmem:[#allocation7 + $0x6a0] sm:$0xff]
    %v574 = vld [vmem:[#allocation7 + $0x6a8] sm:$0xff]
    %v575 = vld [vmem:[#allocation7 + $0x6b0] sm:$0xff]
    %v576 = vld [vmem:[#allocation7 + $0x6b8] sm:$0xff]
    %v577 = vld [vmem:[#allocation7 + $0x6c0] sm:$0xff]
    %v578 = vld [vmem:[#allocation7 + $0x6c8] sm:$0xff]
    %v579 = vld [vmem:[#allocation7 + $0x6d0] sm:$0xff]
    %v580 = vld [vmem:[#allocation7 + $0x6d8] sm:$0xff]
    %v581 = vld [vmem:[#allocation7 + $0x6e0] sm:$0xff]
    %v582 = vld [vmem:[#allocation7 + $0x6e8] sm:$0xff]
    %v583 = vld [vmem:[#allocation7 + $0x6f0] sm:$0xff]
    %v584 = vld [vmem:[#allocation7 + $0x6f8] sm:$0xff]
    %v585 = vld [vmem:[#allocation7 + $0x700] sm:$0xff]
    %v586 = vld [vmem:[#allocation7 + $0x708] sm:$0xff]
    %v587 = vld [vmem:[#allocation7 + $0x710] sm:$0xff]
    %v588 = vld [vmem:[#allocation7 + $0x718] sm:$0xff]
    %v589 = vld [vmem:[#allocation7 + $0x720] sm:$0xff]
    %v590 = vld [vmem:[#allocation7 + $0x728] sm:$0xff]
    %v591 = vld [vmem:[#allocation7 + $0x730] sm:$0xff]
    %v592 = vld [vmem:[#allocation7 + $0x738] sm:$0xff]
    %v593 = vld [vmem:[#allocation7 + $0x740] sm:$0xff]
    %v594 = vld [vmem:[#allocation7 + $0x748] sm:$0xff]
    %v595 = vld [vmem:[#allocation7 + $0x750] sm:$0xff]
    %v596 = vld [vmem:[#allocation7 + $0x758] sm:$0xff]
    %v597 = vld [vmem:[#allocation7 + $0x760] sm:$0xff]
    %v598 = vld [vmem:[#allocation7 + $0x768] sm:$0xff]
    %v599 = vld [vmem:[#allocation7 + $0x770] sm:$0xff]
    %v600 = vld [vmem:[#allocation7 + $0x778] sm:$0xff]
    %v601 = vld [vmem:[#allocation7 + $0x780] sm:$0xff]
    %v602 = vld [vmem:[#allocation7 + $0x788] sm:$0xff]
    %v603 = vld [vmem:[#allocation7 + $0x790] sm:$0xff]
    %v604 = vld [vmem:[#allocation7 + $0x798] sm:$0xff]
    %v605 = vld [vmem:[#allocation7 + $0x7a0] sm:$0xff]
    %v606 = vld [vmem:[#allocation7 + $0x7a8] sm:$0xff]
    %v607 = vld [vmem:[#allocation7 + $0x7b0] sm:$0xff]
    %v608 = vld [vmem:[#allocation7 + $0x7b8] sm:$0xff]
    %v609 = vld [vmem:[#allocation7 + $0x7c0] sm:$0xff]
    %v610 = vld [vmem:[#allocation7 + $0x7c8] sm:$0xff]
    %v611 = vld [vmem:[#allocation7 + $0x7d0] sm:$0xff]
    %v612 = vld [vmem:[#allocation7 + $0x7d8] sm:$0xff]
    %v613 = vld [vmem:[#allocation7 + $0x7e0] sm:$0xff]
    %v614 = vld [vmem:[#allocation7 + $0x7e8] sm:$0xff]
    %v615 = vld [vmem:[#allocation7 + $0x7f0] sm:$0xff]
    %v616 = vld [vmem:[#allocation7 + $0x7f8] sm:$0xff]
    %v617 = vld [vmem:[%s6] sm:$0xff]
    %v619 = vperm.slane %v617, 0
    %v620 = vperm.slane %v617, 1
    %v621 = vperm.slane %v617, 2
    %v622 = vperm.slane %v617, 3
    %v623 = vperm.slane %v617, 4
    %v624 = vperm.slane %v617, 5
    %v625 = vperm.slane %v617, 6
    %v626 = vperm.slane %v617, 7
    %v891 = vunpack.c.l.b16 %v361
    %v892 = vunpack.c.h.b16 %v361
    %v893 = vunpack.c.l.b16 %v362
    %v894 = vunpack.c.h.b16 %v362
    %v895 = vunpack.c.l.b16 %v363
    %v896 = vunpack.c.h.b16 %v363
    %v897 = vunpack.c.l.b16 %v364
    %v898 = vunpack.c.h.b16 %v364
    %v899 = vunpack.c.l.b16 %v365
    %v900 = vunpack.c.h.b16 %v365
    %v901 = vunpack.c.l.b16 %v366
    %v902 = vunpack.c.h.b16 %v366
    %v903 = vunpack.c.l.b16 %v367
    %v904 = vunpack.c.h.b16 %v367
    %v905 = vunpack.c.l.b16 %v368
    %v906 = vunpack.c.h.b16 %v368
    %v907 = vunpack.c.l.b16 %v369
    %v908 = vunpack.c.h.b16 %v369
    %v909 = vunpack.c.l.b16 %v370
    %v910 = vunpack.c.h.b16 %v370
    %v911 = vunpack.c.l.b16 %v371
    %v912 = vunpack.c.h.b16 %v371
    %v913 = vunpack.c.l.b16 %v372
    %v914 = vunpack.c.h.b16 %v372
    %v915 = vunpack.c.l.b16 %v373
    %v916 = vunpack.c.h.b16 %v373
    %v917 = vunpack.c.l.b16 %v374
    %v918 = vunpack.c.h.b16 %v374
    %v919 = vunpack.c.l.b16 %v375
    %v920 = vunpack.c.h.b16 %v375
    %v921 = vunpack.c.l.b16 %v376
    %v922 = vunpack.c.h.b16 %v376
    %v923 = vunpack.c.l.b16 %v377
    %v924 = vunpack.c.h.b16 %v377
    %v925 = vunpack.c.l.b16 %v378
    %v926 = vunpack.c.h.b16 %v378
    %v927 = vunpack.c.l.b16 %v379
    %v928 = vunpack.c.h.b16 %v379
    %v929 = vunpack.c.l.b16 %v380
    %v930 = vunpack.c.h.b16 %v380
    %v931 = vunpack.c.l.b16 %v381
    %v932 = vunpack.c.h.b16 %v381
    %v933 = vunpack.c.l.b16 %v382
    %v934 = vunpack.c.h.b16 %v382
    %v935 = vunpack.c.l.b16 %v383
    %v936 = vunpack.c.h.b16 %v383
    %v937 = vunpack.c.l.b16 %v384
    %v938 = vunpack.c.h.b16 %v384
    %v939 = vunpack.c.l.b16 %v385
    %v940 = vunpack.c.h.b16 %v385
    %v941 = vunpack.c.l.b16 %v386
    %v942 = vunpack.c.h.b16 %v386
    %v943 = vunpack.c.l.b16 %v387
    %v944 = vunpack.c.h.b16 %v387
    %v945 = vunpack.c.l.b16 %v388
    %v946 = vunpack.c.h.b16 %v388
    %v947 = vunpack.c.l.b16 %v389
    %v948 = vunpack.c.h.b16 %v389
    %v949 = vunpack.c.l.b16 %v390
    %v950 = vunpack.c.h.b16 %v390
    %v951 = vunpack.c.l.b16 %v391
    %v952 = vunpack.c.h.b16 %v391
    %v953 = vunpack.c.l.b16 %v392
    %v954 = vunpack.c.h.b16 %v392
    %v955 = vunpack.c.l.b16 %v393
    %v956 = vunpack.c.h.b16 %v393
    %v957 = vunpack.c.l.b16 %v394
    %v958 = vunpack.c.h.b16 %v394
    %v959 = vunpack.c.l.b16 %v395
    %v960 = vunpack.c.h.b16 %v395
    %v961 = vunpack.c.l.b16 %v396
    %v962 = vunpack.c.h.b16 %v396
    %v963 = vunpack.c.l.b16 %v397
    %v964 = vunpack.c.h.b16 %v397
    %v965 = vunpack.c.l.b16 %v398
    %v966 = vunpack.c.h.b16 %v398
    %v967 = vunpack.c.l.b16 %v399
    %v968 = vunpack.c.h.b16 %v399
    %v969 = vunpack.c.l.b16 %v400
    %v970 = vunpack.c.h.b16 %v400
    %v971 = vunpack.c.l.b16 %v401
    %v972 = vunpack.c.h.b16 %v401
    %v973 = vunpack.c.l.b16 %v402
    %v974 = vunpack.c.h.b16 %v402
    %v975 = vunpack.c.l.b16 %v403
    %v976 = vunpack.c.h.b16 %v403
    %v977 = vunpack.c.l.b16 %v404
    %v978 = vunpack.c.h.b16 %v404
    %v979 = vunpack.c.l.b16 %v405
    %v980 = vunpack.c.h.b16 %v405
    %v981 = vunpack.c.l.b16 %v406
    %v982 = vunpack.c.h.b16 %v406
    %v983 = vunpack.c.l.b16 %v407
    %v984 = vunpack.c.h.b16 %v407
    %v985 = vunpack.c.l.b16 %v408
    %v986 = vunpack.c.h.b16 %v408
    %v987 = vunpack.c.l.b16 %v409
    %v988 = vunpack.c.h.b16 %v409
    %v989 = vunpack.c.l.b16 %v410
    %v990 = vunpack.c.h.b16 %v410
    %v991 = vunpack.c.l.b16 %v411
    %v992 = vunpack.c.h.b16 %v411
    %v993 = vunpack.c.l.b16 %v412
    %v994 = vunpack.c.h.b16 %v412
    %v995 = vunpack.c.l.b16 %v413
    %v996 = vunpack.c.h.b16 %v413
    %v997 = vunpack.c.l.b16 %v414
    %v998 = vunpack.c.h.b16 %v414
    %v999 = vunpack.c.l.b16 %v415
    %v1000 = vunpack.c.h.b16 %v415
    %v1001 = vunpack.c.l.b16 %v416
    %v1002 = vunpack.c.h.b16 %v416
    %v1003 = vunpack.c.l.b16 %v417
    %v1004 = vunpack.c.h.b16 %v417
    %v1005 = vunpack.c.l.b16 %v418
    %v1006 = vunpack.c.h.b16 %v418
    %v1007 = vunpack.c.l.b16 %v419
    %v1008 = vunpack.c.h.b16 %v419
    %v1009 = vunpack.c.l.b16 %v420
    %v1010 = vunpack.c.h.b16 %v420
    %v1011 = vunpack.c.l.b16 %v421
    %v1012 = vunpack.c.h.b16 %v421
    %v1013 = vunpack.c.l.b16 %v422
    %v1014 = vunpack.c.h.b16 %v422
    %v1015 = vunpack.c.l.b16 %v423
    %v1016 = vunpack.c.h.b16 %v423
    %v1017 = vunpack.c.l.b16 %v424
    %v1018 = vunpack.c.h.b16 %v424
    %v1019 = vunpack.c.l.b16 %v425
    %v1020 = vunpack.c.h.b16 %v425
    %v1021 = vunpack.c.l.b16 %v426
    %v1022 = vunpack.c.h.b16 %v426
    %v1023 = vunpack.c.l.b16 %v427
    %v1024 = vunpack.c.h.b16 %v427
    %v1025 = vunpack.c.l.b16 %v428
    %v1026 = vunpack.c.h.b16 %v428
    %v1027 = vunpack.c.l.b16 %v429
    %v1028 = vunpack.c.h.b16 %v429
    %v1029 = vunpack.c.l.b16 %v430
    %v1030 = vunpack.c.h.b16 %v430
    %v1031 = vunpack.c.l.b16 %v431
    %v1032 = vunpack.c.h.b16 %v431
    %v1033 = vunpack.c.l.b16 %v432
    %v1034 = vunpack.c.h.b16 %v432
    %v1035 = vunpack.c.l.b16 %v433
    %v1036 = vunpack.c.h.b16 %v433
    %v1037 = vunpack.c.l.b16 %v434
    %v1038 = vunpack.c.h.b16 %v434
    %v1039 = vunpack.c.l.b16 %v435
    %v1040 = vunpack.c.h.b16 %v435
    %v1041 = vunpack.c.l.b16 %v436
    %v1042 = vunpack.c.h.b16 %v436
    %v1043 = vunpack.c.l.b16 %v437
    %v1044 = vunpack.c.h.b16 %v437
    %v1045 = vunpack.c.l.b16 %v438
    %v1046 = vunpack.c.h.b16 %v438
    %v1047 = vunpack.c.l.b16 %v439
    %v1048 = vunpack.c.h.b16 %v439
    %v1049 = vunpack.c.l.b16 %v440
    %v1050 = vunpack.c.h.b16 %v440
    %v1051 = vunpack.c.l.b16 %v441
    %v1052 = vunpack.c.h.b16 %v441
    %v1053 = vunpack.c.l.b16 %v442
    %v1054 = vunpack.c.h.b16 %v442
    %v1055 = vunpack.c.l.b16 %v443
    %v1056 = vunpack.c.h.b16 %v443
    %v1057 = vunpack.c.l.b16 %v444
    %v1058 = vunpack.c.h.b16 %v444
    %v1059 = vunpack.c.l.b16 %v445
    %v1060 = vunpack.c.h.b16 %v445
    %v1061 = vunpack.c.l.b16 %v446
    %v1062 = vunpack.c.h.b16 %v446
    %v1063 = vunpack.c.l.b16 %v447
    %v1064 = vunpack.c.h.b16 %v447
    %v1065 = vunpack.c.l.b16 %v448
    %v1066 = vunpack.c.h.b16 %v448
    %v1067 = vunpack.c.l.b16 %v449
    %v1068 = vunpack.c.h.b16 %v449
    %v1069 = vunpack.c.l.b16 %v450
    %v1070 = vunpack.c.h.b16 %v450
    %v1071 = vunpack.c.l.b16 %v451
    %v1072 = vunpack.c.h.b16 %v451
    %v1073 = vunpack.c.l.b16 %v452
    %v1074 = vunpack.c.h.b16 %v452
    %v1075 = vunpack.c.l.b16 %v453
    %v1076 = vunpack.c.h.b16 %v453
    %v1077 = vunpack.c.l.b16 %v454
    %v1078 = vunpack.c.h.b16 %v454
    %v1079 = vunpack.c.l.b16 %v455
    %v1080 = vunpack.c.h.b16 %v455
    %v1081 = vunpack.c.l.b16 %v456
    %v1082 = vunpack.c.h.b16 %v456
    %v1083 = vunpack.c.l.b16 %v457
    %v1084 = vunpack.c.h.b16 %v457
    %v1085 = vunpack.c.l.b16 %v458
    %v1086 = vunpack.c.h.b16 %v458
    %v1087 = vunpack.c.l.b16 %v459
    %v1088 = vunpack.c.h.b16 %v459
    %v1089 = vunpack.c.l.b16 %v460
    %v1090 = vunpack.c.h.b16 %v460
    %v1091 = vunpack.c.l.b16 %v461
    %v1092 = vunpack.c.h.b16 %v461
    %v1093 = vunpack.c.l.b16 %v462
    %v1094 = vunpack.c.h.b16 %v462
    %v1095 = vunpack.c.l.b16 %v463
    %v1096 = vunpack.c.h.b16 %v463
    %v1097 = vunpack.c.l.b16 %v464
    %v1098 = vunpack.c.h.b16 %v464
    %v1099 = vunpack.c.l.b16 %v465
    %v1100 = vunpack.c.h.b16 %v465
    %v1101 = vunpack.c.l.b16 %v466
    %v1102 = vunpack.c.h.b16 %v466
    %v1103 = vunpack.c.l.b16 %v467
    %v1104 = vunpack.c.h.b16 %v467
    %v1105 = vunpack.c.l.b16 %v468
    %v1106 = vunpack.c.h.b16 %v468
    %v1107 = vunpack.c.l.b16 %v469
    %v1108 = vunpack.c.h.b16 %v469
    %v1109 = vunpack.c.l.b16 %v470
    %v1110 = vunpack.c.h.b16 %v470
    %v1111 = vunpack.c.l.b16 %v471
    %v1112 = vunpack.c.h.b16 %v471
    %v1113 = vunpack.c.l.b16 %v472
    %v1114 = vunpack.c.h.b16 %v472
    %v1115 = vunpack.c.l.b16 %v473
    %v1116 = vunpack.c.h.b16 %v473
    %v1117 = vunpack.c.l.b16 %v474
    %v1118 = vunpack.c.h.b16 %v474
    %v1119 = vunpack.c.l.b16 %v475
    %v1120 = vunpack.c.h.b16 %v475
    %v1121 = vunpack.c.l.b16 %v476
    %v1122 = vunpack.c.h.b16 %v476
    %v1123 = vunpack.c.l.b16 %v477
    %v1124 = vunpack.c.h.b16 %v477
    %v1125 = vunpack.c.l.b16 %v478
    %v1126 = vunpack.c.h.b16 %v478
    %v1127 = vunpack.c.l.b16 %v479
    %v1128 = vunpack.c.h.b16 %v479
    %v1129 = vunpack.c.l.b16 %v480
    %v1130 = vunpack.c.h.b16 %v480
    %v1131 = vunpack.c.l.b16 %v481
    %v1132 = vunpack.c.h.b16 %v481
    %v1133 = vunpack.c.l.b16 %v482
    %v1134 = vunpack.c.h.b16 %v482
    %v1135 = vunpack.c.l.b16 %v483
    %v1136 = vunpack.c.h.b16 %v483
    %v1137 = vunpack.c.l.b16 %v484
    %v1138 = vunpack.c.h.b16 %v484
    %v1139 = vunpack.c.l.b16 %v485
    %v1140 = vunpack.c.h.b16 %v485
    %v1141 = vunpack.c.l.b16 %v486
    %v1142 = vunpack.c.h.b16 %v486
    %v1143 = vunpack.c.l.b16 %v487
    %v1144 = vunpack.c.h.b16 %v487
    %v1145 = vunpack.c.l.b16 %v488
    %v1146 = vunpack.c.h.b16 %v488
    %v1147 = vunpack.c.l.b16 %v489
    %v1148 = vunpack.c.h.b16 %v489
    %v1149 = vunpack.c.l.b16 %v490
    %v1150 = vunpack.c.h.b16 %v490
    %v1151 = vunpack.c.l.b16 %v491
    %v1152 = vunpack.c.h.b16 %v491
    %v1153 = vunpack.c.l.b16 %v492
    %v1154 = vunpack.c.h.b16 %v492
    %v1155 = vunpack.c.l.b16 %v493
    %v1156 = vunpack.c.h.b16 %v493
    %v1157 = vunpack.c.l.b16 %v494
    %v1158 = vunpack.c.h.b16 %v494
    %v1159 = vunpack.c.l.b16 %v495
    %v1160 = vunpack.c.h.b16 %v495
    %v1161 = vunpack.c.l.b16 %v496
    %v1162 = vunpack.c.h.b16 %v496
    %v1163 = vunpack.c.l.b16 %v497
    %v1164 = vunpack.c.h.b16 %v497
    %v1165 = vunpack.c.l.b16 %v498
    %v1166 = vunpack.c.h.b16 %v498
    %v1167 = vunpack.c.l.b16 %v499
    %v1168 = vunpack.c.h.b16 %v499
    %v1169 = vunpack.c.l.b16 %v500
    %v1170 = vunpack.c.h.b16 %v500
    %v1171 = vunpack.c.l.b16 %v501
    %v1172 = vunpack.c.h.b16 %v501
    %v1173 = vunpack.c.l.b16 %v502
    %v1174 = vunpack.c.h.b16 %v502
    %v1175 = vunpack.c.l.b16 %v503
    %v1176 = vunpack.c.h.b16 %v503
    %v1177 = vunpack.c.l.b16 %v504
    %v1178 = vunpack.c.h.b16 %v504
    %v1179 = vunpack.c.l.b16 %v505
    %v1180 = vunpack.c.h.b16 %v505
    %v1181 = vunpack.c.l.b16 %v506
    %v1182 = vunpack.c.h.b16 %v506
    %v1183 = vunpack.c.l.b16 %v507
    %v1184 = vunpack.c.h.b16 %v507
    %v1185 = vunpack.c.l.b16 %v508
    %v1186 = vunpack.c.h.b16 %v508
    %v1187 = vunpack.c.l.b16 %v509
    %v1188 = vunpack.c.h.b16 %v509
    %v1189 = vunpack.c.l.b16 %v510
    %v1190 = vunpack.c.h.b16 %v510
    %v1191 = vunpack.c.l.b16 %v511
    %v1192 = vunpack.c.h.b16 %v511
    %v1193 = vunpack.c.l.b16 %v512
    %v1194 = vunpack.c.h.b16 %v512
    %v1195 = vunpack.c.l.b16 %v513
    %v1196 = vunpack.c.h.b16 %v513
    %v1197 = vunpack.c.l.b16 %v514
    %v1198 = vunpack.c.h.b16 %v514
    %v1199 = vunpack.c.l.b16 %v515
    %v1200 = vunpack.c.h.b16 %v515
    %v1201 = vunpack.c.l.b16 %v516
    %v1202 = vunpack.c.h.b16 %v516
    %v1203 = vunpack.c.l.b16 %v517
    %v1204 = vunpack.c.h.b16 %v517
    %v1205 = vunpack.c.l.b16 %v518
    %v1206 = vunpack.c.h.b16 %v518
    %v1207 = vunpack.c.l.b16 %v519
    %v1208 = vunpack.c.h.b16 %v519
    %v1209 = vunpack.c.l.b16 %v520
    %v1210 = vunpack.c.h.b16 %v520
    %v1211 = vunpack.c.l.b16 %v521
    %v1212 = vunpack.c.h.b16 %v521
    %v1213 = vunpack.c.l.b16 %v522
    %v1214 = vunpack.c.h.b16 %v522
    %v1215 = vunpack.c.l.b16 %v523
    %v1216 = vunpack.c.h.b16 %v523
    %v1217 = vunpack.c.l.b16 %v524
    %v1218 = vunpack.c.h.b16 %v524
    %v1219 = vunpack.c.l.b16 %v525
    %v1220 = vunpack.c.h.b16 %v525
    %v1221 = vunpack.c.l.b16 %v526
    %v1222 = vunpack.c.h.b16 %v526
    %v1223 = vunpack.c.l.b16 %v527
    %v1224 = vunpack.c.h.b16 %v527
    %v1225 = vunpack.c.l.b16 %v528
    %v1226 = vunpack.c.h.b16 %v528
    %v1227 = vunpack.c.l.b16 %v529
    %v1228 = vunpack.c.h.b16 %v529
    %v1229 = vunpack.c.l.b16 %v530
    %v1230 = vunpack.c.h.b16 %v530
    %v1231 = vunpack.c.l.b16 %v531
    %v1232 = vunpack.c.h.b16 %v531
    %v1233 = vunpack.c.l.b16 %v532
    %v1234 = vunpack.c.h.b16 %v532
    %v1235 = vunpack.c.l.b16 %v533
    %v1236 = vunpack.c.h.b16 %v533
    %v1237 = vunpack.c.l.b16 %v534
    %v1238 = vunpack.c.h.b16 %v534
    %v1239 = vunpack.c.l.b16 %v535
    %v1240 = vunpack.c.h.b16 %v535
    %v1241 = vunpack.c.l.b16 %v536
    %v1242 = vunpack.c.h.b16 %v536
    %v1243 = vunpack.c.l.b16 %v537
    %v1244 = vunpack.c.h.b16 %v537
    %v1245 = vunpack.c.l.b16 %v538
    %v1246 = vunpack.c.h.b16 %v538
    %v1247 = vunpack.c.l.b16 %v539
    %v1248 = vunpack.c.h.b16 %v539
    %v1249 = vunpack.c.l.b16 %v540
    %v1250 = vunpack.c.h.b16 %v540
    %v1251 = vunpack.c.l.b16 %v541
    %v1252 = vunpack.c.h.b16 %v541
    %v1253 = vunpack.c.l.b16 %v542
    %v1254 = vunpack.c.h.b16 %v542
    %v1255 = vunpack.c.l.b16 %v543
    %v1256 = vunpack.c.h.b16 %v543
    %v1257 = vunpack.c.l.b16 %v544
    %v1258 = vunpack.c.h.b16 %v544
    %v1259 = vunpack.c.l.b16 %v545
    %v1260 = vunpack.c.h.b16 %v545
    %v1261 = vunpack.c.l.b16 %v546
    %v1262 = vunpack.c.h.b16 %v546
    %v1263 = vunpack.c.l.b16 %v547
    %v1264 = vunpack.c.h.b16 %v547
    %v1265 = vunpack.c.l.b16 %v548
    %v1266 = vunpack.c.h.b16 %v548
    %v1267 = vunpack.c.l.b16 %v549
    %v1268 = vunpack.c.h.b16 %v549
    %v1269 = vunpack.c.l.b16 %v550
    %v1270 = vunpack.c.h.b16 %v550
    %v1271 = vunpack.c.l.b16 %v551
    %v1272 = vunpack.c.h.b16 %v551
    %v1273 = vunpack.c.l.b16 %v552
    %v1274 = vunpack.c.h.b16 %v552
    %v1275 = vunpack.c.l.b16 %v553
    %v1276 = vunpack.c.h.b16 %v553
    %v1277 = vunpack.c.l.b16 %v554
    %v1278 = vunpack.c.h.b16 %v554
    %v1279 = vunpack.c.l.b16 %v555
    %v1280 = vunpack.c.h.b16 %v555
    %v1281 = vunpack.c.l.b16 %v556
    %v1282 = vunpack.c.h.b16 %v556
    %v1283 = vunpack.c.l.b16 %v557
    %v1284 = vunpack.c.h.b16 %v557
    %v1285 = vunpack.c.l.b16 %v558
    %v1286 = vunpack.c.h.b16 %v558
    %v1287 = vunpack.c.l.b16 %v559
    %v1288 = vunpack.c.h.b16 %v559
    %v1289 = vunpack.c.l.b16 %v560
    %v1290 = vunpack.c.h.b16 %v560
    %v1291 = vunpack.c.l.b16 %v561
    %v1292 = vunpack.c.h.b16 %v561
    %v1293 = vunpack.c.l.b16 %v562
    %v1294 = vunpack.c.h.b16 %v562
    %v1295 = vunpack.c.l.b16 %v563
    %v1296 = vunpack.c.h.b16 %v563
    %v1297 = vunpack.c.l.b16 %v564
    %v1298 = vunpack.c.h.b16 %v564
    %v1299 = vunpack.c.l.b16 %v565
    %v1300 = vunpack.c.h.b16 %v565
    %v1301 = vunpack.c.l.b16 %v566
    %v1302 = vunpack.c.h.b16 %v566
    %v1303 = vunpack.c.l.b16 %v567
    %v1304 = vunpack.c.h.b16 %v567
    %v1305 = vunpack.c.l.b16 %v568
    %v1306 = vunpack.c.h.b16 %v568
    %v1307 = vunpack.c.l.b16 %v569
    %v1308 = vunpack.c.h.b16 %v569
    %v1309 = vunpack.c.l.b16 %v570
    %v1310 = vunpack.c.h.b16 %v570
    %v1311 = vunpack.c.l.b16 %v571
    %v1312 = vunpack.c.h.b16 %v571
    %v1313 = vunpack.c.l.b16 %v572
    %v1314 = vunpack.c.h.b16 %v572
    %v1315 = vunpack.c.l.b16 %v573
    %v1316 = vunpack.c.h.b16 %v573
    %v1317 = vunpack.c.l.b16 %v574
    %v1318 = vunpack.c.h.b16 %v574
    %v1319 = vunpack.c.l.b16 %v575
    %v1320 = vunpack.c.h.b16 %v575
    %v1321 = vunpack.c.l.b16 %v576
    %v1322 = vunpack.c.h.b16 %v576
    %v1323 = vunpack.c.l.b16 %v577
    %v1324 = vunpack.c.h.b16 %v577
    %v1325 = vunpack.c.l.b16 %v578
    %v1326 = vunpack.c.h.b16 %v578
    %v1327 = vunpack.c.l.b16 %v579
    %v1328 = vunpack.c.h.b16 %v579
    %v1329 = vunpack.c.l.b16 %v580
    %v1330 = vunpack.c.h.b16 %v580
    %v1331 = vunpack.c.l.b16 %v581
    %v1332 = vunpack.c.h.b16 %v581
    %v1333 = vunpack.c.l.b16 %v582
    %v1334 = vunpack.c.h.b16 %v582
    %v1335 = vunpack.c.l.b16 %v583
    %v1336 = vunpack.c.h.b16 %v583
    %v1337 = vunpack.c.l.b16 %v584
    %v1338 = vunpack.c.h.b16 %v584
    %v1339 = vunpack.c.l.b16 %v585
    %v1340 = vunpack.c.h.b16 %v585
    %v1341 = vunpack.c.l.b16 %v586
    %v1342 = vunpack.c.h.b16 %v586
    %v1343 = vunpack.c.l.b16 %v587
    %v1344 = vunpack.c.h.b16 %v587
    %v1345 = vunpack.c.l.b16 %v588
    %v1346 = vunpack.c.h.b16 %v588
    %v1347 = vunpack.c.l.b16 %v589
    %v1348 = vunpack.c.h.b16 %v589
    %v1349 = vunpack.c.l.b16 %v590
    %v1350 = vunpack.c.h.b16 %v590
    %v1351 = vunpack.c.l.b16 %v591
    %v1352 = vunpack.c.h.b16 %v591
    %v1353 = vunpack.c.l.b16 %v592
    %v1354 = vunpack.c.h.b16 %v592
    %v1355 = vunpack.c.l.b16 %v593
    %v1356 = vunpack.c.h.b16 %v593
    %v1357 = vunpack.c.l.b16 %v594
    %v1358 = vunpack.c.h.b16 %v594
    %v1359 = vunpack.c.l.b16 %v595
    %v1360 = vunpack.c.h.b16 %v595
    %v1361 = vunpack.c.l.b16 %v596
    %v1362 = vunpack.c.h.b16 %v596
    %v1363 = vunpack.c.l.b16 %v597
    %v1364 = vunpack.c.h.b16 %v597
    %v1365 = vunpack.c.l.b16 %v598
    %v1366 = vunpack.c.h.b16 %v598
    %v1367 = vunpack.c.l.b16 %v599
    %v1368 = vunpack.c.h.b16 %v599
    %v1369 = vunpack.c.l.b16 %v600
    %v1370 = vunpack.c.h.b16 %v600
    %v1371 = vunpack.c.l.b16 %v601
    %v1372 = vunpack.c.h.b16 %v601
    %v1373 = vunpack.c.l.b16 %v602
    %v1374 = vunpack.c.h.b16 %v602
    %v1375 = vunpack.c.l.b16 %v603
    %v1376 = vunpack.c.h.b16 %v603
    %v1377 = vunpack.c.l.b16 %v604
    %v1378 = vunpack.c.h.b16 %v604
    %v1379 = vunpack.c.l.b16 %v605
    %v1380 = vunpack.c.h.b16 %v605
    %v1381 = vunpack.c.l.b16 %v606
    %v1382 = vunpack.c.h.b16 %v606
    %v1383 = vunpack.c.l.b16 %v607
    %v1384 = vunpack.c.h.b16 %v607
    %v1385 = vunpack.c.l.b16 %v608
    %v1386 = vunpack.c.h.b16 %v608
    %v1387 = vunpack.c.l.b16 %v609
    %v1388 = vunpack.c.h.b16 %v609
    %v1389 = vunpack.c.l.b16 %v610
    %v1390 = vunpack.c.h.b16 %v610
    %v1391 = vunpack.c.l.b16 %v611
    %v1392 = vunpack.c.h.b16 %v611
    %v1393 = vunpack.c.l.b16 %v612
    %v1394 = vunpack.c.h.b16 %v612
    %v1395 = vunpack.c.l.b16 %v613
    %v1396 = vunpack.c.h.b16 %v613
    %v1397 = vunpack.c.l.b16 %v614
    %v1398 = vunpack.c.h.b16 %v614
    %v1399 = vunpack.c.l.b16 %v615
    %v1400 = vunpack.c.h.b16 %v615
    %v1401 = vunpack.c.l.b16 %v616
    %v1402 = vunpack.c.h.b16 %v616
    %v1403 = vpack.c.b16 %v899, %v891
    %v1404 = vpack.c.b16 %v900, %v892
    %v1405 = vpack.c.b16 %v901, %v893
    %v1406 = vpack.c.b16 %v902, %v894
    %v1407 = vpack.c.b16 %v903, %v895
    %v1408 = vpack.c.b16 %v904, %v896
    %v1409 = vpack.c.b16 %v905, %v897
    %v1410 = vpack.c.b16 %v906, %v898
    %v1411 = vpack.c.b16 %v915, %v907
    %v1412 = vpack.c.b16 %v916, %v908
    %v1413 = vpack.c.b16 %v917, %v909
    %v1414 = vpack.c.b16 %v918, %v910
    %v1415 = vpack.c.b16 %v919, %v911
    %v1416 = vpack.c.b16 %v920, %v912
    %v1417 = vpack.c.b16 %v921, %v913
    %v1418 = vpack.c.b16 %v922, %v914
    %v1419 = vpack.c.b16 %v931, %v923
    %v1420 = vpack.c.b16 %v932, %v924
    %v1421 = vpack.c.b16 %v933, %v925
    %v1422 = vpack.c.b16 %v934, %v926
    %v1423 = vpack.c.b16 %v935, %v927
    %v1424 = vpack.c.b16 %v936, %v928
    %v1425 = vpack.c.b16 %v937, %v929
    %v1426 = vpack.c.b16 %v938, %v930
    %v1427 = vpack.c.b16 %v947, %v939
    %v1428 = vpack.c.b16 %v948, %v940
    %v1429 = vpack.c.b16 %v949, %v941
    %v1430 = vpack.c.b16 %v950, %v942
    %v1431 = vpack.c.b16 %v951, %v943
    %v1432 = vpack.c.b16 %v952, %v944
    %v1433 = vpack.c.b16 %v953, %v945
    %v1434 = vpack.c.b16 %v954, %v946
    %v1435 = vpack.c.b16 %v963, %v955
    %v1436 = vpack.c.b16 %v964, %v956
    %v1437 = vpack.c.b16 %v965, %v957
    %v1438 = vpack.c.b16 %v966, %v958
    %v1439 = vpack.c.b16 %v967, %v959
    %v1440 = vpack.c.b16 %v968, %v960
    %v1441 = vpack.c.b16 %v969, %v961
    %v1442 = vpack.c.b16 %v970, %v962
    %v1443 = vpack.c.b16 %v979, %v971
    %v1444 = vpack.c.b16 %v980, %v972
    %v1445 = vpack.c.b16 %v981, %v973
    %v1446 = vpack.c.b16 %v982, %v974
    %v1447 = vpack.c.b16 %v983, %v975
    %v1448 = vpack.c.b16 %v984, %v976
    %v1449 = vpack.c.b16 %v985, %v977
    %v1450 = vpack.c.b16 %v986, %v978
    %v1451 = vpack.c.b16 %v995, %v987
    %v1452 = vpack.c.b16 %v996, %v988
    %v1453 = vpack.c.b16 %v997, %v989
    %v1454 = vpack.c.b16 %v998, %v990
    %v1455 = vpack.c.b16 %v999, %v991
    %v1456 = vpack.c.b16 %v1000, %v992
    %v1457 = vpack.c.b16 %v1001, %v993
    %v1458 = vpack.c.b16 %v1002, %v994
    %v1459 = vpack.c.b16 %v1011, %v1003
    %v1460 = vpack.c.b16 %v1012, %v1004
    %v1461 = vpack.c.b16 %v1013, %v1005
    %v1462 = vpack.c.b16 %v1014, %v1006
    %v1463 = vpack.c.b16 %v1015, %v1007
    %v1464 = vpack.c.b16 %v1016, %v1008
    %v1465 = vpack.c.b16 %v1017, %v1009
    %v1466 = vpack.c.b16 %v1018, %v1010
    %v1467 = vpack.c.b16 %v1027, %v1019
    %v1468 = vpack.c.b16 %v1028, %v1020
    %v1469 = vpack.c.b16 %v1029, %v1021
    %v1470 = vpack.c.b16 %v1030, %v1022
    %v1471 = vpack.c.b16 %v1031, %v1023
    %v1472 = vpack.c.b16 %v1032, %v1024
    %v1473 = vpack.c.b16 %v1033, %v1025
    %v1474 = vpack.c.b16 %v1034, %v1026
    %v1475 = vpack.c.b16 %v1043, %v1035
    %v1476 = vpack.c.b16 %v1044, %v1036
    %v1477 = vpack.c.b16 %v1045, %v1037
    %v1478 = vpack.c.b16 %v1046, %v1038
    %v1479 = vpack.c.b16 %v1047, %v1039
    %v1480 = vpack.c.b16 %v1048, %v1040
    %v1481 = vpack.c.b16 %v1049, %v1041
    %v1482 = vpack.c.b16 %v1050, %v1042
    %v1483 = vpack.c.b16 %v1059, %v1051
    %v1484 = vpack.c.b16 %v1060, %v1052
    %v1485 = vpack.c.b16 %v1061, %v1053
    %v1486 = vpack.c.b16 %v1062, %v1054
    %v1487 = vpack.c.b16 %v1063, %v1055
    %v1488 = vpack.c.b16 %v1064, %v1056
    %v1489 = vpack.c.b16 %v1065, %v1057
    %v1490 = vpack.c.b16 %v1066, %v1058
    %v1491 = vpack.c.b16 %v1075, %v1067
    %v1492 = vpack.c.b16 %v1076, %v1068
    %v1493 = vpack.c.b16 %v1077, %v1069
    %v1494 = vpack.c.b16 %v1078, %v1070
    %v1495 = vpack.c.b16 %v1079, %v1071
    %v1496 = vpack.c.b16 %v1080, %v1072
    %v1497 = vpack.c.b16 %v1081, %v1073
    %v1498 = vpack.c.b16 %v1082, %v1074
    %v1499 = vpack.c.b16 %v1091, %v1083
    %v1500 = vpack.c.b16 %v1092, %v1084
    %v1501 = vpack.c.b16 %v1093, %v1085
    %v1502 = vpack.c.b16 %v1094, %v1086
    %v1503 = vpack.c.b16 %v1095, %v1087
    %v1504 = vpack.c.b16 %v1096, %v1088
    %v1505 = vpack.c.b16 %v1097, %v1089
    %v1506 = vpack.c.b16 %v1098, %v1090
    %v1507 = vpack.c.b16 %v1107, %v1099
    %v1508 = vpack.c.b16 %v1108, %v1100
    %v1509 = vpack.c.b16 %v1109, %v1101
    %v1510 = vpack.c.b16 %v1110, %v1102
    %v1511 = vpack.c.b16 %v1111, %v1103
    %v1512 = vpack.c.b16 %v1112, %v1104
    %v1513 = vpack.c.b16 %v1113, %v1105
    %v1514 = vpack.c.b16 %v1114, %v1106
    %v1515 = vpack.c.b16 %v1123, %v1115
    %v1516 = vpack.c.b16 %v1124, %v1116
    %v1517 = vpack.c.b16 %v1125, %v1117
    %v1518 = vpack.c.b16 %v1126, %v1118
    %v1519 = vpack.c.b16 %v1127, %v1119
    %v1520 = vpack.c.b16 %v1128, %v1120
    %v1521 = vpack.c.b16 %v1129, %v1121
    %v1522 = vpack.c.b16 %v1130, %v1122
    %v1523 = vpack.c.b16 %v1139, %v1131
    %v1524 = vpack.c.b16 %v1140, %v1132
    %v1525 = vpack.c.b16 %v1141, %v1133
    %v1526 = vpack.c.b16 %v1142, %v1134
    %v1527 = vpack.c.b16 %v1143, %v1135
    %v1528 = vpack.c.b16 %v1144, %v1136
    %v1529 = vpack.c.b16 %v1145, %v1137
    %v1530 = vpack.c.b16 %v1146, %v1138
    %v1531 = vpack.c.b16 %v1155, %v1147
    %v1532 = vpack.c.b16 %v1156, %v1148
    %v1533 = vpack.c.b16 %v1157, %v1149
    %v1534 = vpack.c.b16 %v1158, %v1150
    %v1535 = vpack.c.b16 %v1159, %v1151
    %v1536 = vpack.c.b16 %v1160, %v1152
    %v1537 = vpack.c.b16 %v1161, %v1153
    %v1538 = vpack.c.b16 %v1162, %v1154
    %v1539 = vpack.c.b16 %v1171, %v1163
    %v1540 = vpack.c.b16 %v1172, %v1164
    %v1541 = vpack.c.b16 %v1173, %v1165
    %v1542 = vpack.c.b16 %v1174, %v1166
    %v1543 = vpack.c.b16 %v1175, %v1167
    %v1544 = vpack.c.b16 %v1176, %v1168
    %v1545 = vpack.c.b16 %v1177, %v1169
    %v1546 = vpack.c.b16 %v1178, %v1170
    %v1547 = vpack.c.b16 %v1187, %v1179
    %v1548 = vpack.c.b16 %v1188, %v1180
    %v1549 = vpack.c.b16 %v1189, %v1181
    %v1550 = vpack.c.b16 %v1190, %v1182
    %v1551 = vpack.c.b16 %v1191, %v1183
    %v1552 = vpack.c.b16 %v1192, %v1184
    %v1553 = vpack.c.b16 %v1193, %v1185
    %v1554 = vpack.c.b16 %v1194, %v1186
    %v1555 = vpack.c.b16 %v1203, %v1195
    %v1556 = vpack.c.b16 %v1204, %v1196
    %v1557 = vpack.c.b16 %v1205, %v1197
    %v1558 = vpack.c.b16 %v1206, %v1198
    %v1559 = vpack.c.b16 %v1207, %v1199
    %v1560 = vpack.c.b16 %v1208, %v1200
    %v1561 = vpack.c.b16 %v1209, %v1201
    %v1562 = vpack.c.b16 %v1210, %v1202
    %v1563 = vpack.c.b16 %v1219, %v1211
    %v1564 = vpack.c.b16 %v1220, %v1212
    %v1565 = vpack.c.b16 %v1221, %v1213
    %v1566 = vpack.c.b16 %v1222, %v1214
    %v1567 = vpack.c.b16 %v1223, %v1215
    %v1568 = vpack.c.b16 %v1224, %v1216
    %v1569 = vpack.c.b16 %v1225, %v1217
    %v1570 = vpack.c.b16 %v1226, %v1218
    %v1571 = vpack.c.b16 %v1235, %v1227
    %v1572 = vpack.c.b16 %v1236, %v1228
    %v1573 = vpack.c.b16 %v1237, %v1229
    %v1574 = vpack.c.b16 %v1238, %v1230
    %v1575 = vpack.c.b16 %v1239, %v1231
    %v1576 = vpack.c.b16 %v1240, %v1232
    %v1577 = vpack.c.b16 %v1241, %v1233
    %v1578 = vpack.c.b16 %v1242, %v1234
    %v1579 = vpack.c.b16 %v1251, %v1243
    %v1580 = vpack.c.b16 %v1252, %v1244
    %v1581 = vpack.c.b16 %v1253, %v1245
    %v1582 = vpack.c.b16 %v1254, %v1246
    %v1583 = vpack.c.b16 %v1255, %v1247
    %v1584 = vpack.c.b16 %v1256, %v1248
    %v1585 = vpack.c.b16 %v1257, %v1249
    %v1586 = vpack.c.b16 %v1258, %v1250
    %v1587 = vpack.c.b16 %v1267, %v1259
    %v1588 = vpack.c.b16 %v1268, %v1260
    %v1589 = vpack.c.b16 %v1269, %v1261
    %v1590 = vpack.c.b16 %v1270, %v1262
    %v1591 = vpack.c.b16 %v1271, %v1263
    %v1592 = vpack.c.b16 %v1272, %v1264
    %v1593 = vpack.c.b16 %v1273, %v1265
    %v1594 = vpack.c.b16 %v1274, %v1266
    %v1595 = vpack.c.b16 %v1283, %v1275
    %v1596 = vpack.c.b16 %v1284, %v1276
    %v1597 = vpack.c.b16 %v1285, %v1277
    %v1598 = vpack.c.b16 %v1286, %v1278
    %v1599 = vpack.c.b16 %v1287, %v1279
    %v1600 = vpack.c.b16 %v1288, %v1280
    %v1601 = vpack.c.b16 %v1289, %v1281
    %v1602 = vpack.c.b16 %v1290, %v1282
    %v1603 = vpack.c.b16 %v1299, %v1291
    %v1604 = vpack.c.b16 %v1300, %v1292
    %v1605 = vpack.c.b16 %v1301, %v1293
    %v1606 = vpack.c.b16 %v1302, %v1294
    %v1607 = vpack.c.b16 %v1303, %v1295
    %v1608 = vpack.c.b16 %v1304, %v1296
    %v1609 = vpack.c.b16 %v1305, %v1297
    %v1610 = vpack.c.b16 %v1306, %v1298
    %v1611 = vpack.c.b16 %v1315, %v1307
    %v1612 = vpack.c.b16 %v1316, %v1308
    %v1613 = vpack.c.b16 %v1317, %v1309
    %v1614 = vpack.c.b16 %v1318, %v1310
    %v1615 = vpack.c.b16 %v1319, %v1311
    %v1616 = vpack.c.b16 %v1320, %v1312
    %v1617 = vpack.c.b16 %v1321, %v1313
    %v1618 = vpack.c.b16 %v1322, %v1314
    %v1619 = vpack.c.b16 %v1331, %v1323
    %v1620 = vpack.c.b16 %v1332, %v1324
    %v1621 = vpack.c.b16 %v1333, %v1325
    %v1622 = vpack.c.b16 %v1334, %v1326
    %v1623 = vpack.c.b16 %v1335, %v1327
    %v1624 = vpack.c.b16 %v1336, %v1328
    %v1625 = vpack.c.b16 %v1337, %v1329
    %v1626 = vpack.c.b16 %v1338, %v1330
    %v1627 = vpack.c.b16 %v1347, %v1339
    %v1628 = vpack.c.b16 %v1348, %v1340
    %v1629 = vpack.c.b16 %v1349, %v1341
    %v1630 = vpack.c.b16 %v1350, %v1342
    %v1631 = vpack.c.b16 %v1351, %v1343
    %v1632 = vpack.c.b16 %v1352, %v1344
    %v1633 = vpack.c.b16 %v1353, %v1345
    %v1634 = vpack.c.b16 %v1354, %v1346
    %v1635 = vpack.c.b16 %v1363, %v1355
    %v1636 = vpack.c.b16 %v1364, %v1356
    %v1637 = vpack.c.b16 %v1365, %v1357
    %v1638 = vpack.c.b16 %v1366, %v1358
    %v1639 = vpack.c.b16 %v1367, %v1359
    %v1640 = vpack.c.b16 %v1368, %v1360
    %v1641 = vpack.c.b16 %v1369, %v1361
    %v1642 = vpack.c.b16 %v1370, %v1362
    %v1643 = vpack.c.b16 %v1379, %v1371
    %v1644 = vpack.c.b16 %v1380, %v1372
    %v1645 = vpack.c.b16 %v1381, %v1373
    %v1646 = vpack.c.b16 %v1382, %v1374
    %v1647 = vpack.c.b16 %v1383, %v1375
    %v1648 = vpack.c.b16 %v1384, %v1376
    %v1649 = vpack.c.b16 %v1385, %v1377
    %v1650 = vpack.c.b16 %v1386, %v1378
    %v1651 = vpack.c.b16 %v1395, %v1387
    %v1652 = vpack.c.b16 %v1396, %v1388
    %v1653 = vpack.c.b16 %v1397, %v1389
    %v1654 = vpack.c.b16 %v1398, %v1390
    %v1655 = vpack.c.b16 %v1399, %v1391
    %v1656 = vpack.c.b16 %v1400, %v1392
    %v1657 = vpack.c.b16 %v1401, %v1393
    %v1658 = vpack.c.b16 %v1402, %v1394
    %1915 = vmatpush.bf16.msra.mxu0 %v1459
    %1916 = vmatpush.bf16.msra.mxu0 %v1451
    %1917 = vmatpush.bf16.msra.mxu0 %v1443
    %1918 = vmatpush.bf16.msra.mxu0 %v1435
    %1919 = vmatpush.bf16.msra.mxu0 %v1427
    %1920 = vmatpush.bf16.msra.mxu0 %v1419
    %1921 = vmatpush.bf16.msra.mxu0 %v1411
    %1922 = vmatpush.bf16.msra.mxu0 %v1403
    %1923 = vmatmul.bf16.gmra.mxu0 %v357
    %v1924 = vpop.f32.mrf.mxu0
    %v1925 = vadd.f32 %v619, %v1924
    %v1926 = vpop.f32.mrf.mxu0
    %1927 = vdwg.mxu0
    %1928 = vmatpush.bf16.msra.mxu0 %v1523
    %1929 = vmatpush.bf16.msra.mxu0 %v1515
    %1930 = vmatpush.bf16.msra.mxu0 %v1507
    %1931 = vmatpush.bf16.msra.mxu0 %v1499
    %1932 = vmatpush.bf16.msra.mxu0 %v1491
    %1933 = vmatpush.bf16.msra.mxu0 %v1483
    %1934 = vmatpush.bf16.msra.mxu0 %v1475
    %1935 = vmatpush.bf16.msra.mxu0 %v1467
    %1936 = vmatmul.bf16.gmra.mxu0 %v358
    %v1937 = vpop.f32.mrf.mxu0
    %v1938 = vadd.f32 %v1925, %v1937
    %v1939 = vpop.f32.mrf.mxu0
    %1940 = vdwg.mxu0
    %1941 = vmatpush.bf16.msra.mxu0 %v1587
    %1942 = vmatpush.bf16.msra.mxu0 %v1579
    %1943 = vmatpush.bf16.msra.mxu0 %v1571
    %1944 = vmatpush.bf16.msra.mxu0 %v1563
    %1945 = vmatpush.bf16.msra.mxu0 %v1555
    %1946 = vmatpush.bf16.msra.mxu0 %v1547
    %1947 = vmatpush.bf16.msra.mxu0 %v1539
    %1948 = vmatpush.bf16.msra.mxu0 %v1531
    %1949 = vmatmul.bf16.gmra.mxu0 %v359
    %v1950 = vpop.f32.mrf.mxu0
    %v1951 = vadd.f32 %v1938, %v1950
    %v1952 = vpop.f32.mrf.mxu0
    %1953 = vdwg.mxu0
    %1954 = vmatpush.bf16.msra.mxu0 %v1651
    %1955 = vmatpush.bf16.msra.mxu0 %v1643
    %1956 = vmatpush.bf16.msra.mxu0 %v1635
    %1957 = vmatpush.bf16.msra.mxu0 %v1627
    %1958 = vmatpush.bf16.msra.mxu0 %v1619
    %1959 = vmatpush.bf16.msra.mxu0 %v1611
    %1960 = vmatpush.bf16.msra.mxu0 %v1603
    %1961 = vmatpush.bf16.msra.mxu0 %v1595
    %1962 = vmatmul.bf16.gmra.mxu0 %v360
    %v1963 = vpop.f32.mrf.mxu0
    %v1964 = vadd.f32 %v1951, %v1963
    %v1965 = vpop.f32.mrf.mxu0
    %1966 = vdwg.mxu0
    %1967 = vmatpush.bf16.msra.mxu0 %v1460
    %1968 = vmatpush.bf16.msra.mxu0 %v1452
    %1969 = vmatpush.bf16.msra.mxu0 %v1444
    %1970 = vmatpush.bf16.msra.mxu0 %v1436
    %1971 = vmatpush.bf16.msra.mxu0 %v1428
    %1972 = vmatpush.bf16.msra.mxu0 %v1420
    %1973 = vmatpush.bf16.msra.mxu0 %v1412
    %1974 = vmatpush.bf16.msra.mxu0 %v1404
    %1975 = vmatmul.bf16.gmra.mxu0 %v357
    %v1976 = vpop.f32.mrf.mxu0
    %v1977 = vadd.f32 %v620, %v1976
    %v1978 = vpop.f32.mrf.mxu0
    %1979 = vdwg.mxu0
    %1980 = vmatpush.bf16.msra.mxu0 %v1524
    %1981 = vmatpush.bf16.msra.mxu0 %v1516
    %1982 = vmatpush.bf16.msra.mxu0 %v1508
    %1983 = vmatpush.bf16.msra.mxu0 %v1500
    %1984 = vmatpush.bf16.msra.mxu0 %v1492
    %1985 = vmatpush.bf16.msra.mxu0 %v1484
    %1986 = vmatpush.bf16.msra.mxu0 %v1476
    %1987 = vmatpush.bf16.msra.mxu0 %v1468
    %1988 = vmatmul.bf16.gmra.mxu0 %v358
    %v1989 = vpop.f32.mrf.mxu0
    %v1990 = vadd.f32 %v1977, %v1989
    %v1991 = vpop.f32.mrf.mxu0
    %1992 = vdwg.mxu0
    %1993 = vmatpush.bf16.msra.mxu0 %v1588
    %1994 = vmatpush.bf16.msra.mxu0 %v1580
    %1995 = vmatpush.bf16.msra.mxu0 %v1572
    %1996 = vmatpush.bf16.msra.mxu0 %v1564
    %1997 = vmatpush.bf16.msra.mxu0 %v1556
    %1998 = vmatpush.bf16.msra.mxu0 %v1548
    %1999 = vmatpush.bf16.msra.mxu0 %v1540
    %2000 = vmatpush.bf16.msra.mxu0 %v1532
    %2001 = vmatmul.bf16.gmra.mxu0 %v359
    %v2002 = vpop.f32.mrf.mxu0
    %v2003 = vadd.f32 %v1990, %v2002
    %v2004 = vpop.f32.mrf.mxu0
    %2005 = vdwg.mxu0
    %2006 = vmatpush.bf16.msra.mxu0 %v1652
    %2007 = vmatpush.bf16.msra.mxu0 %v1644
    %2008 = vmatpush.bf16.msra.mxu0 %v1636
    %2009 = vmatpush.bf16.msra.mxu0 %v1628
    %2010 = vmatpush.bf16.msra.mxu0 %v1620
    %2011 = vmatpush.bf16.msra.mxu0 %v1612
    %2012 = vmatpush.bf16.msra.mxu0 %v1604
    %2013 = vmatpush.bf16.msra.mxu0 %v1596
    %2014 = vmatmul.bf16.gmra.mxu0 %v360
    %v2015 = vpop.f32.mrf.mxu0
    %v2016 = vadd.f32 %v2003, %v2015
    %v2017 = vpop.f32.mrf.mxu0
    %2018 = vdwg.mxu0
    %2019 = vmatpush.bf16.msra.mxu0 %v1461
    %2020 = vmatpush.bf16.msra.mxu0 %v1453
    %2021 = vmatpush.bf16.msra.mxu0 %v1445
    %2022 = vmatpush.bf16.msra.mxu0 %v1437
    %2023 = vmatpush.bf16.msra.mxu0 %v1429
    %2024 = vmatpush.bf16.msra.mxu0 %v1421
    %2025 = vmatpush.bf16.msra.mxu0 %v1413
    %2026 = vmatpush.bf16.msra.mxu0 %v1405
    %2027 = vmatmul.bf16.gmra.mxu0 %v357
    %v2028 = vpop.f32.mrf.mxu0
    %v2029 = vadd.f32 %v621, %v2028
    %v2030 = vpop.f32.mrf.mxu0
    %2031 = vdwg.mxu0
    %2032 = vmatpush.bf16.msra.mxu0 %v1525
    %2033 = vmatpush.bf16.msra.mxu0 %v1517
    %2034 = vmatpush.bf16.msra.mxu0 %v1509
    %2035 = vmatpush.bf16.msra.mxu0 %v1501
    %2036 = vmatpush.bf16.msra.mxu0 %v1493
    %2037 = vmatpush.bf16.msra.mxu0 %v1485
    %2038 = vmatpush.bf16.msra.mxu0 %v1477
    %2039 = vmatpush.bf16.msra.mxu0 %v1469
    %2040 = vmatmul.bf16.gmra.mxu0 %v358
    %v2041 = vpop.f32.mrf.mxu0
    %v2042 = vadd.f32 %v2029, %v2041
    %v2043 = vpop.f32.mrf.mxu0
    %2044 = vdwg.mxu0
    %2045 = vmatpush.bf16.msra.mxu0 %v1589
    %2046 = vmatpush.bf16.msra.mxu0 %v1581
    %2047 = vmatpush.bf16.msra.mxu0 %v1573
    %2048 = vmatpush.bf16.msra.mxu0 %v1565
    %2049 = vmatpush.bf16.msra.mxu0 %v1557
    %2050 = vmatpush.bf16.msra.mxu0 %v1549
    %2051 = vmatpush.bf16.msra.mxu0 %v1541
    %2052 = vmatpush.bf16.msra.mxu0 %v1533
    %2053 = vmatmul.bf16.gmra.mxu0 %v359
    %v2054 = vpop.f32.mrf.mxu0
    %v2055 = vadd.f32 %v2042, %v2054
    %v2056 = vpop.f32.mrf.mxu0
    %2057 = vdwg.mxu0
    %2058 = vmatpush.bf16.msra.mxu0 %v1653
    %2059 = vmatpush.bf16.msra.mxu0 %v1645
    %2060 = vmatpush.bf16.msra.mxu0 %v1637
    %2061 = vmatpush.bf16.msra.mxu0 %v1629
    %2062 = vmatpush.bf16.msra.mxu0 %v1621
    %2063 = vmatpush.bf16.msra.mxu0 %v1613
    %2064 = vmatpush.bf16.msra.mxu0 %v1605
    %2065 = vmatpush.bf16.msra.mxu0 %v1597
    %2066 = vmatmul.bf16.gmra.mxu0 %v360
    %v2067 = vpop.f32.mrf.mxu0
    %v2068 = vadd.f32 %v2055, %v2067
    %v2069 = vpop.f32.mrf.mxu0
    %2070 = vdwg.mxu0
    %2071 = vmatpush.bf16.msra.mxu0 %v1462
    %2072 = vmatpush.bf16.msra.mxu0 %v1454
    %2073 = vmatpush.bf16.msra.mxu0 %v1446
    %2074 = vmatpush.bf16.msra.mxu0 %v1438
    %2075 = vmatpush.bf16.msra.mxu0 %v1430
    %2076 = vmatpush.bf16.msra.mxu0 %v1422
    %2077 = vmatpush.bf16.msra.mxu0 %v1414
    %2078 = vmatpush.bf16.msra.mxu0 %v1406
    %2079 = vmatmul.bf16.gmra.mxu0 %v357
    %v2080 = vpop.f32.mrf.mxu0
    %v2081 = vadd.f32 %v622, %v2080
    %v2082 = vpop.f32.mrf.mxu0
    %2083 = vdwg.mxu0
    %2084 = vmatpush.bf16.msra.mxu0 %v1526
    %2085 = vmatpush.bf16.msra.mxu0 %v1518
    %2086 = vmatpush.bf16.msra.mxu0 %v1510
    %2087 = vmatpush.bf16.msra.mxu0 %v1502
    %2088 = vmatpush.bf16.msra.mxu0 %v1494
    %2089 = vmatpush.bf16.msra.mxu0 %v1486
    %2090 = vmatpush.bf16.msra.mxu0 %v1478
    %2091 = vmatpush.bf16.msra.mxu0 %v1470
    %2092 = vmatmul.bf16.gmra.mxu0 %v358
    %v2093 = vpop.f32.mrf.mxu0
    %v2094 = vadd.f32 %v2081, %v2093
    %v2095 = vpop.f32.mrf.mxu0
    %2096 = vdwg.mxu0
    %2097 = vmatpush.bf16.msra.mxu0 %v1590
    %2098 = vmatpush.bf16.msra.mxu0 %v1582
    %2099 = vmatpush.bf16.msra.mxu0 %v1574
    %2100 = vmatpush.bf16.msra.mxu0 %v1566
    %2101 = vmatpush.bf16.msra.mxu0 %v1558
    %2102 = vmatpush.bf16.msra.mxu0 %v1550
    %2103 = vmatpush.bf16.msra.mxu0 %v1542
    %2104 = vmatpush.bf16.msra.mxu0 %v1534
    %2105 = vmatmul.bf16.gmra.mxu0 %v359
    %v2106 = vpop.f32.mrf.mxu0
    %v2107 = vadd.f32 %v2094, %v2106
    %v2108 = vpop.f32.mrf.mxu0
    %2109 = vdwg.mxu0
    %2110 = vmatpush.bf16.msra.mxu0 %v1654
    %2111 = vmatpush.bf16.msra.mxu0 %v1646
    %2112 = vmatpush.bf16.msra.mxu0 %v1638
    %2113 = vmatpush.bf16.msra.mxu0 %v1630
    %2114 = vmatpush.bf16.msra.mxu0 %v1622
    %2115 = vmatpush.bf16.msra.mxu0 %v1614
    %2116 = vmatpush.bf16.msra.mxu0 %v1606
    %2117 = vmatpush.bf16.msra.mxu0 %v1598
    %2118 = vmatmul.bf16.gmra.mxu0 %v360
    %v2119 = vpop.f32.mrf.mxu0
    %v2120 = vadd.f32 %v2107, %v2119
    %v2121 = vpop.f32.mrf.mxu0
    %2122 = vdwg.mxu0
    %2123 = vmatpush.bf16.msra.mxu0 %v1463
    %2124 = vmatpush.bf16.msra.mxu0 %v1455
    %2125 = vmatpush.bf16.msra.mxu0 %v1447
    %2126 = vmatpush.bf16.msra.mxu0 %v1439
    %2127 = vmatpush.bf16.msra.mxu0 %v1431
    %2128 = vmatpush.bf16.msra.mxu0 %v1423
    %2129 = vmatpush.bf16.msra.mxu0 %v1415
    %2130 = vmatpush.bf16.msra.mxu0 %v1407
    %2131 = vmatmul.bf16.gmra.mxu0 %v357
    %v2132 = vpop.f32.mrf.mxu0
    %v2133 = vadd.f32 %v623, %v2132
    %v2134 = vpop.f32.mrf.mxu0
    %2135 = vdwg.mxu0
    %2136 = vmatpush.bf16.msra.mxu0 %v1527
    %2137 = vmatpush.bf16.msra.mxu0 %v1519
    %2138 = vmatpush.bf16.msra.mxu0 %v1511
    %2139 = vmatpush.bf16.msra.mxu0 %v1503
    %2140 = vmatpush.bf16.msra.mxu0 %v1495
    %2141 = vmatpush.bf16.msra.mxu0 %v1487
    %2142 = vmatpush.bf16.msra.mxu0 %v1479
    %2143 = vmatpush.bf16.msra.mxu0 %v1471
    %2144 = vmatmul.bf16.gmra.mxu0 %v358
    %v2145 = vpop.f32.mrf.mxu0
    %v2146 = vadd.f32 %v2133, %v2145
    %v2147 = vpop.f32.mrf.mxu0
    %2148 = vdwg.mxu0
    %2149 = vmatpush.bf16.msra.mxu0 %v1591
    %2150 = vmatpush.bf16.msra.mxu0 %v1583
    %2151 = vmatpush.bf16.msra.mxu0 %v1575
    %2152 = vmatpush.bf16.msra.mxu0 %v1567
    %2153 = vmatpush.bf16.msra.mxu0 %v1559
    %2154 = vmatpush.bf16.msra.mxu0 %v1551
    %2155 = vmatpush.bf16.msra.mxu0 %v1543
    %2156 = vmatpush.bf16.msra.mxu0 %v1535
    %2157 = vmatmul.bf16.gmra.mxu0 %v359
    %v2158 = vpop.f32.mrf.mxu0
    %v2159 = vadd.f32 %v2146, %v2158
    %v2160 = vpop.f32.mrf.mxu0
    %2161 = vdwg.mxu0
    %2162 = vmatpush.bf16.msra.mxu0 %v1655
    %2163 = vmatpush.bf16.msra.mxu0 %v1647
    %2164 = vmatpush.bf16.msra.mxu0 %v1639
    %2165 = vmatpush.bf16.msra.mxu0 %v1631
    %2166 = vmatpush.bf16.msra.mxu0 %v1623
    %2167 = vmatpush.bf16.msra.mxu0 %v1615
    %2168 = vmatpush.bf16.msra.mxu0 %v1607
    %2169 = vmatpush.bf16.msra.mxu0 %v1599
    %2170 = vmatmul.bf16.gmra.mxu0 %v360
    %v2171 = vpop.f32.mrf.mxu0
    %v2172 = vadd.f32 %v2159, %v2171
    %v2173 = vpop.f32.mrf.mxu0
    %2174 = vdwg.mxu0
    %2175 = vmatpush.bf16.msra.mxu0 %v1464
    %2176 = vmatpush.bf16.msra.mxu0 %v1456
    %2177 = vmatpush.bf16.msra.mxu0 %v1448
    %2178 = vmatpush.bf16.msra.mxu0 %v1440
    %2179 = vmatpush.bf16.msra.mxu0 %v1432
    %2180 = vmatpush.bf16.msra.mxu0 %v1424
    %2181 = vmatpush.bf16.msra.mxu0 %v1416
    %2182 = vmatpush.bf16.msra.mxu0 %v1408
    %2183 = vmatmul.bf16.gmra.mxu0 %v357
    %v2184 = vpop.f32.mrf.mxu0
    %v2185 = vadd.f32 %v624, %v2184
    %v2186 = vpop.f32.mrf.mxu0
    %2187 = vdwg.mxu0
    %2188 = vmatpush.bf16.msra.mxu0 %v1528
    %2189 = vmatpush.bf16.msra.mxu0 %v1520
    %2190 = vmatpush.bf16.msra.mxu0 %v1512
    %2191 = vmatpush.bf16.msra.mxu0 %v1504
    %2192 = vmatpush.bf16.msra.mxu0 %v1496
    %2193 = vmatpush.bf16.msra.mxu0 %v1488
    %2194 = vmatpush.bf16.msra.mxu0 %v1480
    %2195 = vmatpush.bf16.msra.mxu0 %v1472
    %2196 = vmatmul.bf16.gmra.mxu0 %v358
    %v2197 = vpop.f32.mrf.mxu0
    %v2198 = vadd.f32 %v2185, %v2197
    %v2199 = vpop.f32.mrf.mxu0
    %2200 = vdwg.mxu0
    %2201 = vmatpush.bf16.msra.mxu0 %v1592
    %2202 = vmatpush.bf16.msra.mxu0 %v1584
    %2203 = vmatpush.bf16.msra.mxu0 %v1576
    %2204 = vmatpush.bf16.msra.mxu0 %v1568
    %2205 = vmatpush.bf16.msra.mxu0 %v1560
    %2206 = vmatpush.bf16.msra.mxu0 %v1552
    %2207 = vmatpush.bf16.msra.mxu0 %v1544
    %2208 = vmatpush.bf16.msra.mxu0 %v1536
    %2209 = vmatmul.bf16.gmra.mxu0 %v359
    %v2210 = vpop.f32.mrf.mxu0
    %v2211 = vadd.f32 %v2198, %v2210
    %v2212 = vpop.f32.mrf.mxu0
    %2213 = vdwg.mxu0
    %2214 = vmatpush.bf16.msra.mxu0 %v1656
    %2215 = vmatpush.bf16.msra.mxu0 %v1648
    %2216 = vmatpush.bf16.msra.mxu0 %v1640
    %2217 = vmatpush.bf16.msra.mxu0 %v1632
    %2218 = vmatpush.bf16.msra.mxu0 %v1624
    %2219 = vmatpush.bf16.msra.mxu0 %v1616
    %2220 = vmatpush.bf16.msra.mxu0 %v1608
    %2221 = vmatpush.bf16.msra.mxu0 %v1600
    %2222 = vmatmul.bf16.gmra.mxu0 %v360
    %v2223 = vpop.f32.mrf.mxu0
    %v2224 = vadd.f32 %v2211, %v2223
    %v2225 = vpop.f32.mrf.mxu0
    %2226 = vdwg.mxu0
    %2227 = vmatpush.bf16.msra.mxu0 %v1465
    %2228 = vmatpush.bf16.msra.mxu0 %v1457
    %2229 = vmatpush.bf16.msra.mxu0 %v1449
    %2230 = vmatpush.bf16.msra.mxu0 %v1441
    %2231 = vmatpush.bf16.msra.mxu0 %v1433
    %2232 = vmatpush.bf16.msra.mxu0 %v1425
    %2233 = vmatpush.bf16.msra.mxu0 %v1417
    %2234 = vmatpush.bf16.msra.mxu0 %v1409
    %2235 = vmatmul.bf16.gmra.mxu0 %v357
    %v2236 = vpop.f32.mrf.mxu0
    %v2237 = vadd.f32 %v625, %v2236
    %v2238 = vpop.f32.mrf.mxu0
    %2239 = vdwg.mxu0
    %2240 = vmatpush.bf16.msra.mxu0 %v1529
    %2241 = vmatpush.bf16.msra.mxu0 %v1521
    %2242 = vmatpush.bf16.msra.mxu0 %v1513
    %2243 = vmatpush.bf16.msra.mxu0 %v1505
    %2244 = vmatpush.bf16.msra.mxu0 %v1497
    %2245 = vmatpush.bf16.msra.mxu0 %v1489
    %2246 = vmatpush.bf16.msra.mxu0 %v1481
    %2247 = vmatpush.bf16.msra.mxu0 %v1473
    %2248 = vmatmul.bf16.gmra.mxu0 %v358
    %v2249 = vpop.f32.mrf.mxu0
    %v2250 = vadd.f32 %v2237, %v2249
    %v2251 = vpop.f32.mrf.mxu0
    %2252 = vdwg.mxu0
    %2253 = vmatpush.bf16.msra.mxu0 %v1593
    %2254 = vmatpush.bf16.msra.mxu0 %v1585
    %2255 = vmatpush.bf16.msra.mxu0 %v1577
    %2256 = vmatpush.bf16.msra.mxu0 %v1569
    %2257 = vmatpush.bf16.msra.mxu0 %v1561
    %2258 = vmatpush.bf16.msra.mxu0 %v1553
    %2259 = vmatpush.bf16.msra.mxu0 %v1545
    %2260 = vmatpush.bf16.msra.mxu0 %v1537
    %2261 = vmatmul.bf16.gmra.mxu0 %v359
    %v2262 = vpop.f32.mrf.mxu0
    %v2263 = vadd.f32 %v2250, %v2262
    %v2264 = vpop.f32.mrf.mxu0
    %2265 = vdwg.mxu0
    %2266 = vmatpush.bf16.msra.mxu0 %v1657
    %2267 = vmatpush.bf16.msra.mxu0 %v1649
    %2268 = vmatpush.bf16.msra.mxu0 %v1641
    %2269 = vmatpush.bf16.msra.mxu0 %v1633
    %2270 = vmatpush.bf16.msra.mxu0 %v1625
    %2271 = vmatpush.bf16.msra.mxu0 %v1617
    %2272 = vmatpush.bf16.msra.mxu0 %v1609
    %2273 = vmatpush.bf16.msra.mxu0 %v1601
    %2274 = vmatmul.bf16.gmra.mxu0 %v360
    %v2275 = vpop.f32.mrf.mxu0
    %v2276 = vadd.f32 %v2263, %v2275
    %v2277 = vpop.f32.mrf.mxu0
    %2278 = vdwg.mxu0
    %2279 = vmatpush.bf16.msra.mxu0 %v1466
    %2280 = vmatpush.bf16.msra.mxu0 %v1458
    %2281 = vmatpush.bf16.msra.mxu0 %v1450
    %2282 = vmatpush.bf16.msra.mxu0 %v1442
    %2283 = vmatpush.bf16.msra.mxu0 %v1434
    %2284 = vmatpush.bf16.msra.mxu0 %v1426
    %2285 = vmatpush.bf16.msra.mxu0 %v1418
    %2286 = vmatpush.bf16.msra.mxu0 %v1410
    %2287 = vmatmul.bf16.gmra.mxu0 %v357
    %v2288 = vpop.f32.mrf.mxu0
    %v2289 = vadd.f32 %v626, %v2288
    %v2290 = vpop.f32.mrf.mxu0
    %2291 = vdwg.mxu0
    %2292 = vmatpush.bf16.msra.mxu0 %v1530
    %2293 = vmatpush.bf16.msra.mxu0 %v1522
    %2294 = vmatpush.bf16.msra.mxu0 %v1514
    %2295 = vmatpush.bf16.msra.mxu0 %v1506
    %2296 = vmatpush.bf16.msra.mxu0 %v1498
    %2297 = vmatpush.bf16.msra.mxu0 %v1490
    %2298 = vmatpush.bf16.msra.mxu0 %v1482
    %2299 = vmatpush.bf16.msra.mxu0 %v1474
    %2300 = vmatmul.bf16.gmra.mxu0 %v358
    %v2301 = vpop.f32.mrf.mxu0
    %v2302 = vadd.f32 %v2289, %v2301
    %v2303 = vpop.f32.mrf.mxu0
    %2304 = vdwg.mxu0
    %2305 = vmatpush.bf16.msra.mxu0 %v1594
    %2306 = vmatpush.bf16.msra.mxu0 %v1586
    %2307 = vmatpush.bf16.msra.mxu0 %v1578
    %2308 = vmatpush.bf16.msra.mxu0 %v1570
    %2309 = vmatpush.bf16.msra.mxu0 %v1562
    %2310 = vmatpush.bf16.msra.mxu0 %v1554
    %2311 = vmatpush.bf16.msra.mxu0 %v1546
    %2312 = vmatpush.bf16.msra.mxu0 %v1538
    %2313 = vmatmul.bf16.gmra.mxu0 %v359
    %v2314 = vpop.f32.mrf.mxu0
    %v2315 = vadd.f32 %v2302, %v2314
    %v2316 = vpop.f32.mrf.mxu0
    %2317 = vdwg.mxu0
    %2318 = vmatpush.bf16.msra.mxu0 %v1658
    %2319 = vmatpush.bf16.msra.mxu0 %v1650
    %2320 = vmatpush.bf16.msra.mxu0 %v1642
    %2321 = vmatpush.bf16.msra.mxu0 %v1634
    %2322 = vmatpush.bf16.msra.mxu0 %v1626
    %2323 = vmatpush.bf16.msra.mxu0 %v1618
    %2324 = vmatpush.bf16.msra.mxu0 %v1610
    %2325 = vmatpush.bf16.msra.mxu0 %v1602
    %2326 = vmatmul.bf16.gmra.mxu0 %v360
    %v2327 = vpop.f32.mrf.mxu0
    %v2328 = vadd.f32 %v2315, %v2327
    %v2329 = vpop.f32.mrf.mxu0
    %2330 = vdwg.mxu0
    %s2331 = sld [smem:[#allocation2]]
    %s2332 = sld [smem:[#allocation2 + $0x1]]
    %v2333 = vstv %s2331
    %v2334 = vsub.f32 %v1964, %v2333
    %v2335 = vsub.f32 %v2016, %v2333
    %v2336 = vsub.f32 %v2068, %v2333
    %v2337 = vsub.f32 %v2120, %v2333
    %v2338 = vsub.f32 %v2172, %v2333
    %v2339 = vsub.f32 %v2224, %v2333
    %v2340 = vsub.f32 %v2276, %v2333
    %v2341 = vsub.f32 %v2328, %v2333
    %v2342 = vstv %s2332
    %v2343 = vmul.f32 %v2334, %v2342
    %v2344 = vmul.f32 %v2335, %v2342
    %v2345 = vmul.f32 %v2336, %v2342
    %v2346 = vmul.f32 %v2337, %v2342
    %v2347 = vmul.f32 %v2338, %v2342
    %v2348 = vmul.f32 %v2339, %v2342
    %v2349 = vmul.f32 %v2340, %v2342
    %v2350 = vmul.f32 %v2341, %v2342
    %v2359 = vrot.slane %v2344, 4
    %v2360 = vrot.slane %v2346, 4
    %v2361 = vrot.slane %v2348, 4
    %v2362 = vrot.slane %v2350, 4
    %v2363 = vsel %vm80, %v2343, %v2359
    %v2364 = vsel %vm80, %v2345, %v2360
    %v2365 = vsel %vm80, %v2347, %v2361
    %v2366 = vsel %vm80, %v2349, %v2362
    %v2367 = vsel %vm80, %v2359, %v2343
    %v2368 = vrot.slane %v2367, 4
    %v2369 = vsel %vm80, %v2360, %v2345
    %v2370 = vrot.slane %v2369, 4
    %v2371 = vsel %vm80, %v2361, %v2347
    %v2372 = vrot.slane %v2371, 4
    %v2373 = vsel %vm80, %v2362, %v2349
    %v2374 = vrot.slane %v2373, 4
    %2383 = vst [vmem:[#allocation9] sm:$0xff] %v2363
    %2384 = vst [vmem:[#allocation9 + $0x8] sm:$0xff] %v2364
    %2385 = vst [vmem:[#allocation9 + $0x10] sm:$0xff] %v2365
    %vm2386 = vcmask 850948
    %vm2387 = vmor %vm2386, %vm80
    %2388 = vst.msk [vmem:[#allocation9 + $0x18] sm:$0xff] %vm2387, %v2366
    %2389 = vst [vmem:[#allocation9 + $0x20] sm:$0xff] %v2368
    %2390 = vst [vmem:[#allocation9 + $0x28] sm:$0xff] %v2370
    %2391 = vst [vmem:[#allocation9 + $0x30] sm:$0xff] %v2372
    %2392 = vst.msk [vmem:[#allocation9 + $0x38] sm:$0xff] %vm2387, %v2374
    // Predicated region
    $region42: #{ftws_forward.3} parent=1 // pred_check
      _
    $region43: #{ftws_forward.3} parent=1 // pred_check_branch
      %2394 = sbr.rel (0) target = $region45
    $region44: #{ftws_forward.3} parent=1 // pred_region
      %2396 = vsyncadd [#allocation4], 512
      %s2397 = sshll.u32 [#allocation9], 4
      %s2398 = int_to_ptr.vmem [resolvable:$true] %s2397
      %s2399 = sshll.u32 %s7, 4
      %s2400 = int_to_ptr.hbm [resolvable:$true] %s2399
      %2405 = dma.vmem_to_hbm [thread:$0]  %s2398, 512, %s2400, [#allocation4], 512, 512, 32
    $region45: #{ftws_forward.3} parent=1 // pred_fallthru
      _
    // Predicated region
    $region46: #{ftws_forward.3} parent=1 // pred_check
      _
    $region47: #{ftws_forward.3} parent=1 // pred_check_branch
      %2407 = sbr.rel (0) target = $region49
    $region48: #{ftws_forward.3} parent=1 // pred_region
      %2409 = dma.done [#allocation4], 1024
    $region49: #{ftws_forward.3} parent=1 // pred_fallthru
      _
    %2410 = vsyncpa [#allocation3], 1
    %2411 = vsyncpa [#allocation8], 1
    %2412 = vsyncpa [#allocation4], 1
    %2413 = vsyncpa [#allocation5], 1

</llo_original>
